<compile_context>
chip_gen: v6e
topology: v6e:2x2x1
jax: 0.10.0
libtpu: 0.0.40
codegen_flags: <defaults>
</compile_context>

<pallas_src>
import functools

import jax
import jax.numpy as jnp
from jax.experimental import pallas as pl
from jax.experimental.pallas import tpu as pltpu


def _round_up(x, m):
    return pl.cdiv(x, m) * m


# --------------------------------------------------------------------------
# Tiled matmul (bias-free linear): (M, K) @ (K, N) -> (M, N)
# --------------------------------------------------------------------------
def _matmul_kernel(x_ref, w_ref, o_ref, acc_ref):
    @pl.when(pl.program_id(2) == 0)
    def _init():
        acc_ref[...] = jnp.zeros_like(acc_ref)

    acc_ref[...] += jnp.dot(x_ref[...], w_ref[...],
                            preferred_element_type=jnp.float32)

    @pl.when(pl.program_id(2) == pl.num_programs(2) - 1)
    def _store():
        o_ref[...] = acc_ref[...].astype(o_ref.dtype)


def linear_nobias(x2d, w, *, tm=256, tn=256, tk=512):
    """x2d: (M, K), w: (K, N) (pre-transposed nn.Linear weight). Returns x2d @ w."""
    M, K = x2d.shape
    K2, N = w.shape
    assert K == K2
    tm = min(tm, _round_up(M, 8))
    tn = min(tn, _round_up(N, 128))
    tk = min(tk, _round_up(K, 128))
    Mp, Np, Kp = _round_up(M, tm), _round_up(N, tn), _round_up(K, tk)

    xp = jnp.pad(x2d, ((0, Mp - M), (0, Kp - K))) if (Mp, Kp) != (M, K) else x2d
    wp = jnp.pad(w, ((0, Kp - K), (0, Np - N))) if (Kp, Np) != (K, N) else w

    nbytes = jnp.dtype(x2d.dtype).itemsize
    cost = pl.CostEstimate(
        flops=2 * M * K * N,
        transcendentals=0,
        bytes_accessed=(M * K + K * N + M * N) * nbytes,
    )

    out = pl.pallas_call(
        _matmul_kernel,
        out_shape=jax.ShapeDtypeStruct((Mp, Np), x2d.dtype),
        grid_spec=pltpu.PrefetchScalarGridSpec(
            num_scalar_prefetch=0,
            grid=(Mp // tm, Np // tn, Kp // tk),
            in_specs=[
                pl.BlockSpec((tm, tk), lambda i, j, k: (i, k)),
                pl.BlockSpec((tk, tn), lambda i, j, k: (k, j)),
            ],
            out_specs=pl.BlockSpec((tm, tn), lambda i, j, k: (i, j)),
            scratch_shapes=[pltpu.VMEM((tm, tn), jnp.float32)],
        ),
        compiler_params=pltpu.CompilerParams(
            dimension_semantics=("parallel", "parallel", "arbitrary")),
        cost_estimate=cost,
    )(xp, wp)
    if (Mp, Np) != (M, N):
        out = out[:M, :N]
    return out


# --------------------------------------------------------------------------
# Flash-style causal cosine-similarity attention
# --------------------------------------------------------------------------
_NEG_INF = -1e30  # large-but-finite mask value (matches masked_fill(-finfo.max) intent)


def _cosattn_kernel(q_ref, k_ref, v_ref, o_ref, m_sc, l_sc, acc_sc,
                    *, scale, tq, tk):
    qi = pl.program_id(1)
    ki = pl.program_id(2)

    @pl.when(ki == 0)
    def _init():
        m_sc[...] = jnp.full_like(m_sc, -jnp.inf)
        l_sc[...] = jnp.zeros_like(l_sc)
        acc_sc[...] = jnp.zeros_like(acc_sc)

    # Skip kv blocks that lie entirely above the causal diagonal.
    @pl.when(ki * tk <= (qi + 1) * tq - 1)
    def _compute():
        q = q_ref[0].astype(jnp.float32)          # (tq, d)
        k = k_ref[0].astype(jnp.float32)          # (tk, d)
        # Cosine-sim attention: L2-normalize q and k over the head dim (groups=1).
        # TODO(synk): l2norm_groups > 1 would normalize per d//groups sub-chunks.
        q = q * jax.lax.rsqrt(jnp.sum(q * q, axis=-1, keepdims=True) + 1e-24)
        k = k * jax.lax.rsqrt(jnp.sum(k * k, axis=-1, keepdims=True) + 1e-24)

        s = jax.lax.dot_general(q, k, (((1,), (1,)), ((), ())),
                                preferred_element_type=jnp.float32) * scale
        rows = qi * tq + jax.lax.broadcasted_iota(jnp.int32, (tq, tk), 0)
        cols = ki * tk + jax.lax.broadcasted_iota(jnp.int32, (tq, tk), 1)
        s = jnp.where(rows >= cols, s, _NEG_INF)

        m_prev = m_sc[...]
        m_new = jnp.maximum(m_prev, s.max(axis=-1, keepdims=True))
        alpha = jnp.exp(m_prev - m_new)
        p = jnp.exp(s - m_new)
        l_sc[...] = alpha * l_sc[...] + p.sum(axis=-1, keepdims=True)
        acc_sc[...] = alpha * acc_sc[...] + jnp.dot(
            p.astype(v_ref.dtype), v_ref[0], preferred_element_type=jnp.float32)
        m_sc[...] = m_new

    @pl.when(ki == pl.num_programs(2) - 1)
    def _finalize():
        o_ref[0] = (acc_sc[...] / l_sc[...]).astype(o_ref.dtype)


def cosine_sim_attention(q, k, v, *, scale=8.0, block=128):
    """q, k, v: (B, H, N, D). Causal cosine-similarity attention -> (B, H, N, D)."""
    B, H, N, D = q.shape
    BH = B * H
    t = min(block, _round_up(N, 8))   # square q/kv tiles, multiple of 8
    Np = _round_up(N, t)

    def prep(x):
        x = x.reshape(BH, N, D)
        if Np != N:
            x = jnp.pad(x, ((0, 0), (0, Np - N), (0, 0)))
        return x

    qf, kf, vf = map(prep, (q, k, v))

    nbytes = jnp.dtype(q.dtype).itemsize
    cost = pl.CostEstimate(
        flops=4 * BH * Np * Np * D,
        transcendentals=BH * Np * Np,
        bytes_accessed=4 * BH * Np * D * nbytes,
    )

    # TODO(synk): for head_dim < 128 the (tq, D) output block is lane-sparse
    # (masked vst); a production variant would pack two heads per lane block.
    kernel = functools.partial(_cosattn_kernel, scale=float(scale), tq=t, tk=t)
    out = pl.pallas_call(
        kernel,
        out_shape=jax.ShapeDtypeStruct((BH, Np, D), q.dtype),
        grid_spec=pltpu.PrefetchScalarGridSpec(
            num_scalar_prefetch=0,
            grid=(BH, Np // t, Np // t),
            in_specs=[
                pl.BlockSpec((1, t, D), lambda b, i, j: (b, i, 0)),   # q
                pl.BlockSpec((1, t, D), lambda b, i, j: (b, j, 0)),   # k
                pl.BlockSpec((1, t, D), lambda b, i, j: (b, j, 0)),   # v
            ],
            out_specs=pl.BlockSpec((1, t, D), lambda b, i, j: (b, i, 0)),
            scratch_shapes=[
                pltpu.VMEM((t, 1), jnp.float32),   # running max
                pltpu.VMEM((t, 1), jnp.float32),   # running denom
                pltpu.VMEM((t, D), jnp.float32),   # output accumulator
            ],
        ),
        compiler_params=pltpu.CompilerParams(
            dimension_semantics=("parallel", "parallel", "arbitrary")),
        cost_estimate=cost,
    )(qf, kf, vf)

    if Np != N:
        out = out[:, :N, :]
    return out.reshape(B, H, N, D)


# --------------------------------------------------------------------------
# Full CosineAttention forward
# --------------------------------------------------------------------------
def cosine_attention(x, wq, wk, wv, wo, *, heads, scale=8.0):
    """x: (B, N, dim); wq/wk/wv: (dim, inner); wo: (inner, dim) (weights pre-transposed)."""
    B, N, dim = x.shape
    inner = wq.shape[1]
    d_head = inner // heads

    x2d = x.reshape(B * N, dim)
    # Fused QKV projection: single MXU pass over x.
    wqkv = jnp.concatenate([wq, wk, wv], axis=1)            # (dim, 3*inner)
    qkv = linear_nobias(x2d, wqkv)                          # (B*N, 3*inner)
    q, k, v = jnp.split(qkv, 3, axis=1)

    def split_heads(t):
        return t.reshape(B, N, heads, d_head).transpose(0, 2, 1, 3)  # (B, H, N, d)

    q, k, v = map(split_heads, (q, k, v))
    o = cosine_sim_attention(q, k, v, scale=scale)          # (B, H, N, d)
    o = o.transpose(0, 2, 1, 3).reshape(B * N, inner)
    y = linear_nobias(o, wo)                                # (B*N, dim)
    return y.reshape(B, N, dim)


# --------------------------------------------------------------------------
# Pure-JAX reference
# --------------------------------------------------------------------------
def cosine_attention_ref(x, wq, wk, wv, wo, *, heads, scale=8.0):
    B, N, dim = x.shape
    inner = wq.shape[1]
    d = inner // heads

    def proj(w):
        return jnp.einsum('bnd,de->bne', x, w).reshape(B, N, heads, d).transpose(0, 2, 1, 3)

    q, k, v = proj(wq), proj(wk), proj(wv)

    def l2n(t):
        return t / jnp.maximum(jnp.sqrt(jnp.sum(t * t, axis=-1, keepdims=True)), 1e-12)

    q, k = l2n(q), l2n(k)
    s = jnp.einsum('bhid,bhjd->bhij', q, k) * scale
    causal = jnp.tril(jnp.ones((N, N), dtype=bool))
    s = jnp.where(causal, s, -jnp.finfo(s.dtype).max)
    a = jax.nn.softmax(s, axis=-1)
    o = jnp.einsum('bhij,bhjd->bhid', a, v)
    o = o.transpose(0, 2, 1, 3).reshape(B, N, inner)
    return jnp.einsum('bne,ed->bnd', o, wo)


if __name__ == "__main__":
    # Small shapes consistent with the module defaults (dim_head=64, heads=8, scale=8).
    batch, seq, dim = 2, 256, 64
    heads, dim_head, scale = 8, 64, 8.0
    inner = heads * dim_head

    key = jax.random.PRNGKey(0)
    kx, kq, kk, kv, ko = jax.random.split(key, 5)
    x = jax.random.normal(kx, (batch, seq, dim), dtype=jnp.float32)
    bq = 1.0 / (dim ** 0.5)
    bo = 1.0 / (inner ** 0.5)
    wq = jax.random.uniform(kq, (dim, inner), minval=-bq, maxval=bq, dtype=jnp.float32)
    wk = jax.random.uniform(kk, (dim, inner), minval=-bq, maxval=bq, dtype=jnp.float32)
    wv = jax.random.uniform(kv, (dim, inner), minval=-bq, maxval=bq, dtype=jnp.float32)
    wo = jax.random.uniform(ko, (inner, dim), minval=-bo, maxval=bo, dtype=jnp.float32)

    fn = jax.jit(functools.partial(cosine_attention, heads=heads, scale=scale))
    y = jax.block_until_ready(fn(x, wq, wk, wv, wo))

    y_ref = cosine_attention_ref(x, wq, wk, wv, wo, heads=heads, scale=scale)
    assert y.shape == (batch, seq, dim)
    max_err = float(jnp.max(jnp.abs(y - y_ref)))
    assert jnp.allclose(y, y_ref, atol=2e-3, rtol=2e-3), max_err

    print("KERNEL_OK")
</pallas_src>

<mosaic_0001>
module attributes {stable_mosaic.version = 11 : i64} {
  func.func @_matmul_kernel(%arg0: i32, %arg1: i32, %arg2: i32, %arg3: memref<256x128xf32, #tpu.memory_space<vmem>>, %arg4: memref<128x256xf32, #tpu.memory_space<vmem>>, %arg5: memref<256x256xf32, #tpu.memory_space<vmem>>, %arg6: memref<256x256xf32, #tpu.memory_space<vmem>>) attributes {dimension_semantics = [#tpu.dimension_semantics<parallel>, #tpu.dimension_semantics<parallel>, #tpu.dimension_semantics<arbitrary>], iteration_bounds = array<i64: 2, 6, 1>, scalar_prefetch = 0 : i64, scratch_operands = 1 : i64, tpu.core_type = #tpu.core_type<tc>, window_params = [{transform_indices = @transform_0, window_bounds = array<i64: 256, 128>}, {transform_indices = @transform_1, window_bounds = array<i64: 128, 256>}, {transform_indices = @transform_2, window_bounds = array<i64: 256, 256>}]} {
    %c0_i32 = arith.constant 0 : i32
    %0 = arith.cmpi eq, %arg2, %c0_i32 : i32
    %1 = arith.extui %0 : i1 to i32
    %c0_i32_0 = arith.constant 0 : i32
    %2 = arith.cmpi ne, %1, %c0_i32_0 : i32
    scf.if %2 {
      %cst_10 = arith.constant 0.000000e+00 : f32
      %12 = vector.broadcast %cst_10 : f32 to vector<256x256xf32>
      %c0_11 = arith.constant 0 : index
      %c0_12 = arith.constant 0 : index
      %13 = vector.load %arg6[%c0_11, %c0_12] : memref<256x256xf32, #tpu.memory_space<vmem>>, vector<256x256xf32>
      tpu.vector_store %arg6[%c0_11, %c0_12], %12 {strides = array<i32>} : memref<256x256xf32, #tpu.memory_space<vmem>>, vector<256x256xf32>,
    } else {
    }
    %c0 = arith.constant 0 : index
    %c0_1 = arith.constant 0 : index
    %3 = vector.load %arg6[%c0, %c0_1] : memref<256x256xf32, #tpu.memory_space<vmem>>, vector<256x256xf32>
    %c0_2 = arith.constant 0 : index
    %c0_3 = arith.constant 0 : index
    %4 = vector.load %arg3[%c0_2, %c0_3] : memref<256x128xf32, #tpu.memory_space<vmem>>, vector<256x128xf32>
    %c0_4 = arith.constant 0 : index
    %c0_5 = arith.constant 0 : index
    %5 = vector.load %arg4[%c0_4, %c0_5] : memref<128x256xf32, #tpu.memory_space<vmem>>, vector<128x256xf32>
    %cst = arith.constant dense<0.000000e+00> : vector<256x256xf32>
    %6 = tpu.matmul %4, %5, %cst {dimension_numbers = #tpu.dot_dimension_numbers<[1], [0], [0], [1], [0, 0, 1, 1], [], []>} : vector<256x128xf32>, vector<128x256xf32>, vector<256x256xf32> -> vector<256x256xf32>
    %7 = arith.addf %3, %6 : vector<256x256xf32>
    %c0_6 = arith.constant 0 : index
    %c0_7 = arith.constant 0 : index
    %8 = vector.load %arg6[%c0_6, %c0_7] : memref<256x256xf32, #tpu.memory_space<vmem>>, vector<256x256xf32>
    tpu.vector_store %arg6[%c0_6, %c0_7], %7 {strides = array<i32>} : memref<256x256xf32, #tpu.memory_space<vmem>>, vector<256x256xf32>,
    %c0_i32_8 = arith.constant 0 : i32
    %9 = arith.cmpi eq, %arg2, %c0_i32_8 : i32
    %10 = arith.extui %9 : i1 to i32
    %c0_i32_9 = arith.constant 0 : i32
    %11 = arith.cmpi ne, %10, %c0_i32_9 : i32
    scf.if %11 {
      %c0_10 = arith.constant 0 : index
      %c0_11 = arith.constant 0 : index
      %12 = vector.load %arg6[%c0_10, %c0_11] : memref<256x256xf32, #tpu.memory_space<vmem>>, vector<256x256xf32>
      %c0_12 = arith.constant 0 : index
      %c0_13 = arith.constant 0 : index
      %13 = vector.load %arg5[%c0_12, %c0_13] : memref<256x256xf32, #tpu.memory_space<vmem>>, vector<256x256xf32>
      tpu.vector_store %arg5[%c0_12, %c0_13], %12 {strides = array<i32>} : memref<256x256xf32, #tpu.memory_space<vmem>>, vector<256x256xf32>,
    } else {
    }
    return
  }
  func.func @transform_0(%arg0: i32, %arg1: i32, %arg2: i32) -> (i32, i32) {
    %c0_i32 = arith.constant 0 : i32
    return %arg0, %arg2 : i32, i32
  }
  func.func @transform_1(%arg0: i32, %arg1: i32, %arg2: i32) -> (i32, i32) {
    %c0_i32 = arith.constant 0 : i32
    return %arg2, %arg1 : i32, i32
  }
  func.func @transform_2(%arg0: i32, %arg1: i32, %arg2: i32) -> (i32, i32) {
    %c0_i32 = arith.constant 0 : i32
    return %arg0, %arg1 : i32, i32
  }
}

module attributes {stable_mosaic.version = 11 : i64} {
  func.func @_cosattn_kernel(%arg0: i32, %arg1: i32, %arg2: i32, %arg3: memref<1x128x64xf32, #tpu.memory_space<vmem>>, %arg4: memref<1x128x64xf32, #tpu.memory_space<vmem>>, %arg5: memref<1x128x64xf32, #tpu.memory_space<vmem>>, %arg6: memref<1x128x64xf32, #tpu.memory_space<vmem>>, %arg7: memref<128x1xf32, #tpu.memory_space<vmem>>, %arg8: memref<128x1xf32, #tpu.memory_space<vmem>>, %arg9: memref<128x64xf32, #tpu.memory_space<vmem>>) attributes {dimension_semantics = [#tpu.dimension_semantics<parallel>, #tpu.dimension_semantics<parallel>, #tpu.dimension_semantics<arbitrary>], iteration_bounds = array<i64: 16, 2, 2>, scalar_prefetch = 0 : i64, scratch_operands = 3 : i64, tpu.core_type = #tpu.core_type<tc>, window_params = [{transform_indices = @transform_0, window_bounds = array<i64: 1, 128, 64>}, {transform_indices = @transform_1, window_bounds = array<i64: 1, 128, 64>}, {transform_indices = @transform_2, window_bounds = array<i64: 1, 128, 64>}, {transform_indices = @transform_3, window_bounds = array<i64: 1, 128, 64>}]} {
    %c0_i32 = arith.constant 0 : i32
    %0 = arith.cmpi eq, %arg2, %c0_i32 : i32
    %1 = arith.extui %0 : i1 to i32
    %c0_i32_0 = arith.constant 0 : i32
    %2 = arith.cmpi ne, %1, %c0_i32_0 : i32
    scf.if %2 {
      %cst = arith.constant 0xFF800000 : f32
      %13 = vector.broadcast %cst : f32 to vector<128x1xf32>
      %c0 = arith.constant 0 : index
      %c0_6 = arith.constant 0 : index
      %14 = vector.load %arg7[%c0, %c0_6] : memref<128x1xf32, #tpu.memory_space<vmem>>, vector<128x1xf32>
      tpu.vector_store %arg7[%c0, %c0_6], %13 {strides = array<i32>} : memref<128x1xf32, #tpu.memory_space<vmem>>, vector<128x1xf32>,
      %cst_7 = arith.constant 0.000000e+00 : f32
      %15 = vector.broadcast %cst_7 : f32 to vector<128x1xf32>
      %c0_8 = arith.constant 0 : index
      %c0_9 = arith.constant 0 : index
      %16 = vector.load %arg8[%c0_8, %c0_9] : memref<128x1xf32, #tpu.memory_space<vmem>>, vector<128x1xf32>
      tpu.vector_store %arg8[%c0_8, %c0_9], %15 {strides = array<i32>} : memref<128x1xf32, #tpu.memory_space<vmem>>, vector<128x1xf32>,
      %cst_10 = arith.constant 0.000000e+00 : f32
      %17 = vector.broadcast %cst_10 : f32 to vector<128x64xf32>
      %c0_11 = arith.constant 0 : index
      %c0_12 = arith.constant 0 : index
      %18 = vector.load %arg9[%c0_11, %c0_12] : memref<128x64xf32, #tpu.memory_space<vmem>>, vector<128x64xf32>
      tpu.vector_store %arg9[%c0_11, %c0_12], %17 {strides = array<i32>} : memref<128x64xf32, #tpu.memory_space<vmem>>, vector<128x64xf32>,
    } else {
    }
    %c128_i32 = arith.constant 128 : i32
    %3 = arith.muli %arg2, %c128_i32 : i32
    %c1_i32 = arith.constant 1 : i32
    %4 = arith.addi %arg1, %c1_i32 : i32
    %c128_i32_1 = arith.constant 128 : i32
    %5 = arith.muli %4, %c128_i32_1 : i32
    %c1_i32_2 = arith.constant 1 : i32
    %6 = arith.subi %5, %c1_i32_2 : i32
    %7 = arith.cmpi sle, %3, %6 : i32
    %8 = arith.extui %7 : i1 to i32
    %c0_i32_3 = arith.constant 0 : i32
    %9 = arith.cmpi ne, %8, %c0_i32_3 : i32
    scf.if %9 {
      %c0 = arith.constant 0 : index
      %c0_6 = arith.constant 0 : index
      %c0_7 = arith.constant 0 : index
      %13 = vector.load %arg3[%c0, %c0_6, %c0_7] : memref<1x128x64xf32, #tpu.memory_space<vmem>>, vector<1x128x64xf32>
      %14 = vector.shape_cast %13 : vector<1x128x64xf32> to vector<128x64xf32>
      %c0_8 = arith.constant 0 : index
      %c0_9 = arith.constant 0 : index
      %c0_10 = arith.constant 0 : index
      %15 = vector.load %arg4[%c0_8, %c0_9, %c0_10] : memref<1x128x64xf32, #tpu.memory_space<vmem>>, vector<1x128x64xf32>
      %16 = vector.shape_cast %15 : vector<1x128x64xf32> to vector<128x64xf32>
      %17 = arith.mulf %14, %14 : vector<128x64xf32>
      %cst = arith.constant dense<0.000000e+00> : vector<128xf32>
      %18 = vector.multi_reduction <add>, %17, %cst [1] : vector<128x64xf32> to vector<128xf32>
      %19 = vector.shape_cast %18 : vector<128xf32> to vector<128x1xf32>
      %cst_11 = arith.constant 1.000000e-24 : f32
      %20 = vector.broadcast %cst_11 : f32 to vector<128x1xf32>
      %21 = arith.addf %19, %20 : vector<128x1xf32>
      %22 = math.rsqrt %21 : vector<128x1xf32>
      %23 = vector.broadcast %22 : vector<128x1xf32> to vector<128x64xf32>
      %24 = arith.mulf %14, %23 : vector<128x64xf32>
      %25 = arith.mulf %16, %16 : vector<128x64xf32>
      %cst_12 = arith.constant dense<0.000000e+00> : vector<128xf32>
      %26 = vector.multi_reduction <add>, %25, %cst_12 [1] : vector<128x64xf32> to vector<128xf32>
      %27 = vector.shape_cast %26 : vector<128xf32> to vector<128x1xf32>
      %cst_13 = arith.constant 1.000000e-24 : f32
      %28 = vector.broadcast %cst_13 : f32 to vector<128x1xf32>
      %29 = arith.addf %27, %28 : vector<128x1xf32>
      %30 = math.rsqrt %29 : vector<128x1xf32>
      %31 = vector.broadcast %30 : vector<128x1xf32> to vector<128x64xf32>
      %32 = arith.mulf %16, %31 : vector<128x64xf32>
      %cst_14 = arith.constant dense<0.000000e+00> : vector<128x128xf32>
      %33 = tpu.matmul %24, %32, %cst_14 {dimension_numbers = #tpu.dot_dimension_numbers<[1], [1], [0], [0], [0, 0, 1, 0], [], []>} : vector<128x64xf32>, vector<128x64xf32>, vector<128x128xf32> -> vector<128x128xf32>
      %cst_15 = arith.constant 8.000000e+00 : f32
      %34 = vector.broadcast %cst_15 : f32 to vector<128x128xf32>
      %35 = arith.mulf %33, %34 : vector<128x128xf32>
      %c128_i32_16 = arith.constant 128 : i32
      %36 = arith.muli %arg1, %c128_i32_16 : i32
      %37 = tpu.iota {dimensions = array<i32: 0>} : vector<128x128xi32>
      %38 = vector.broadcast %36 : i32 to vector<128x128xi32>
      %39 = arith.addi %38, %37 : vector<128x128xi32>
      %c128_i32_17 = arith.constant 128 : i32
      %40 = arith.muli %arg2, %c128_i32_17 : i32
      %41 = tpu.iota {dimensions = array<i32: 1>} : vector<128x128xi32>
      %42 = vector.broadcast %40 : i32 to vector<128x128xi32>
      %43 = arith.addi %42, %41 : vector<128x128xi32>
      %44 = arith.cmpi sge, %39, %43 : vector<128x128xi32>
      %cst_18 = arith.constant -1.000000e+30 : f32
      %45 = vector.broadcast %cst_18 : f32 to vector<128x128xf32>
      %46 = arith.select %44, %35, %45 : vector<128x128xi1>, vector<128x128xf32>
      %c0_19 = arith.constant 0 : index
      %c0_20 = arith.constant 0 : index
      %47 = vector.load %arg7[%c0_19, %c0_20] : memref<128x1xf32, #tpu.memory_space<vmem>>, vector<128x1xf32>
      %cst_21 = arith.constant dense<0xFF800000> : vector<128xf32>
      %48 = vector.multi_reduction <maximumf>, %46, %cst_21 [1] : vector<128x128xf32> to vector<128xf32>
      %49 = vector.shape_cast %48 : vector<128xf32> to vector<128x1xf32>
      %50 = arith.maximumf %47, %49 : vector<128x1xf32>
      %51 = arith.subf %47, %50 : vector<128x1xf32>
      %52 = math.exp %51 : vector<128x1xf32>
      %53 = vector.broadcast %50 : vector<128x1xf32> to vector<128x128xf32>
      %54 = arith.subf %46, %53 : vector<128x128xf32>
      %55 = math.exp %54 : vector<128x128xf32>
      %c0_22 = arith.constant 0 : index
      %c0_23 = arith.constant 0 : index
      %56 = vector.load %arg8[%c0_22, %c0_23] : memref<128x1xf32, #tpu.memory_space<vmem>>, vector<128x1xf32>
      %57 = arith.mulf %52, %56 : vector<128x1xf32>
      %cst_24 = arith.constant dense<0.000000e+00> : vector<128xf32>
      %58 = vector.multi_reduction <add>, %55, %cst_24 [1] : vector<128x128xf32> to vector<128xf32>
      %59 = vector.shape_cast %58 : vector<128xf32> to vector<128x1xf32>
      %60 = arith.addf %57, %59 : vector<128x1xf32>
      %c0_25 = arith.constant 0 : index
      %c0_26 = arith.constant 0 : index
      %61 = vector.load %arg8[%c0_25, %c0_26] : memref<128x1xf32, #tpu.memory_space<vmem>>, vector<128x1xf32>
      tpu.vector_store %arg8[%c0_25, %c0_26], %60 {strides = array<i32>} : memref<128x1xf32, #tpu.memory_space<vmem>>, vector<128x1xf32>,
      %c0_27 = arith.constant 0 : index
      %c0_28 = arith.constant 0 : index
      %62 = vector.load %arg9[%c0_27, %c0_28] : memref<128x64xf32, #tpu.memory_space<vmem>>, vector<128x64xf32>
      %63 = vector.broadcast %52 : vector<128x1xf32> to vector<128x64xf32>
      %64 = arith.mulf %63, %62 : vector<128x64xf32>
      %c0_29 = arith.constant 0 : index
      %c0_30 = arith.constant 0 : index
      %c0_31 = arith.constant 0 : index
      %65 = vector.load %arg5[%c0_29, %c0_30, %c0_31] : memref<1x128x64xf32, #tpu.memory_space<vmem>>, vector<1x128x64xf32>
      %66 = vector.shape_cast %65 : vector<1x128x64xf32> to vector<128x64xf32>
      %cst_32 = arith.constant dense<0.000000e+00> : vector<128x64xf32>
      %67 = tpu.matmul %55, %66, %cst_32 {dimension_numbers = #tpu.dot_dimension_numbers<[1], [0], [0], [1], [0, 0, 1, 1], [], []>} : vector<128x128xf32>, vector<128x64xf32>, vector<128x64xf32> -> vector<128x64xf32>
      %68 = arith.addf %64, %67 : vector<128x64xf32>
      %c0_33 = arith.constant 0 : index
      %c0_34 = arith.constant 0 : index
      %69 = vector.load %arg9[%c0_33, %c0_34] : memref<128x64xf32, #tpu.memory_space<vmem>>, vector<128x64xf32>
      tpu.vector_store %arg9[%c0_33, %c0_34], %68 {strides = array<i32>} : memref<128x64xf32, #tpu.memory_space<vmem>>, vector<128x64xf32>,
      %c0_35 = arith.constant 0 : index
      %c0_36 = arith.constant 0 : index
      %70 = vector.load %arg7[%c0_35, %c0_36] : memref<128x1xf32, #tpu.memory_space<vmem>>, vector<128x1xf32>
      tpu.vector_store %arg7[%c0_35, %c0_36], %50 {strides = array<i32>} : memref<128x1xf32, #tpu.memory_space<vmem>>, vector<128x1xf32>,
    } else {
    }
    %c1_i32_4 = arith.constant 1 : i32
    %10 = arith.cmpi eq, %arg2, %c1_i32_4 : i32
    %11 = arith.extui %10 : i1 to i32
    %c0_i32_5 = arith.constant 0 : i32
    %12 = arith.cmpi ne, %11, %c0_i32_5 : i32
    scf.if %12 {
      %c0 = arith.constant 0 : index
      %c0_6 = arith.constant 0 : index
      %13 = vector.load %arg9[%c0, %c0_6] : memref<128x64xf32, #tpu.memory_space<vmem>>, vector<128x64xf32>
      %c0_7 = arith.constant 0 : index
      %c0_8 = arith.constant 0 : index
      %14 = vector.load %arg8[%c0_7, %c0_8] : memref<128x1xf32, #tpu.memory_space<vmem>>, vector<128x1xf32>
      %15 = vector.broadcast %14 : vector<128x1xf32> to vector<128x64xf32>
      %16 = arith.divf %13, %15 : vector<128x64xf32>
      %c0_9 = arith.constant 0 : index
      %c0_10 = arith.constant 0 : index
      %c0_11 = arith.constant 0 : index
      %17 = vector.load %arg6[%c0_9, %c0_10, %c0_11] : memref<1x128x64xf32, #tpu.memory_space<vmem>>, vector<1x128x64xf32>
      %18 = vector.shape_cast %17 : vector<1x128x64xf32> to vector<128x64xf32>
      %19 = vector.shape_cast %16 : vector<128x64xf32> to vector<1x128x64xf32>
      tpu.vector_store %arg6[%c0_9, %c0_10, %c0_11], %19 {strides = array<i32>} : memref<1x128x64xf32, #tpu.memory_space<vmem>>, vector<1x128x64xf32>,
    } else {
    }
    return
  }
  func.func @transform_0(%arg0: i32, %arg1: i32, %arg2: i32) -> (i32, i32, i32) {
    %c0_i32 = arith.constant 0 : i32
    %c0_i32_0 = arith.constant 0 : i32
    return %arg0, %arg1, %c0_i32 : i32, i32, i32
  }
  func.func @transform_1(%arg0: i32, %arg1: i32, %arg2: i32) -> (i32, i32, i32) {
    %c0_i32 = arith.constant 0 : i32
    %c0_i32_0 = arith.constant 0 : i32
    return %arg0, %arg2, %c0_i32 : i32, i32, i32
  }
  func.func @transform_2(%arg0: i32, %arg1: i32, %arg2: i32) -> (i32, i32, i32) {
    %c0_i32 = arith.constant 0 : i32
    %c0_i32_0 = arith.constant 0 : i32
    return %arg0, %arg2, %c0_i32 : i32, i32, i32
  }
  func.func @transform_3(%arg0: i32, %arg1: i32, %arg2: i32) -> (i32, i32, i32) {
    %c0_i32 = arith.constant 0 : i32
    %c0_i32_0 = arith.constant 0 : i32
    return %arg0, %arg1, %c0_i32 : i32, i32, i32
  }
}

module attributes {stable_mosaic.version = 11 : i64} {
  func.func @_matmul_kernel(%arg0: i32, %arg1: i32, %arg2: i32, %arg3: memref<256x512xf32, #tpu.memory_space<vmem>>, %arg4: memref<512x128xf32, #tpu.memory_space<vmem>>, %arg5: memref<256x128xf32, #tpu.memory_space<vmem>>, %arg6: memref<256x128xf32, #tpu.memory_space<vmem>>) attributes {dimension_semantics = [#tpu.dimension_semantics<parallel>, #tpu.dimension_semantics<parallel>, #tpu.dimension_semantics<arbitrary>], iteration_bounds = array<i64: 2, 1, 1>, scalar_prefetch = 0 : i64, scratch_operands = 1 : i64, tpu.core_type = #tpu.core_type<tc>, window_params = [{transform_indices = @transform_0, window_bounds = array<i64: 256, 512>}, {transform_indices = @transform_1, window_bounds = array<i64: 512, 128>}, {transform_indices = @transform_2, window_bounds = array<i64: 256, 128>}]} {
    %c0_i32 = arith.constant 0 : i32
    %0 = arith.cmpi eq, %arg2, %c0_i32 : i32
    %1 = arith.extui %0 : i1 to i32
    %c0_i32_0 = arith.constant 0 : i32
    %2 = arith.cmpi ne, %1, %c0_i32_0 : i32
    scf.if %2 {
      %cst_10 = arith.constant 0.000000e+00 : f32
      %12 = vector.broadcast %cst_10 : f32 to vector<256x128xf32>
      %c0_11 = arith.constant 0 : index
      %c0_12 = arith.constant 0 : index
      %13 = vector.load %arg6[%c0_11, %c0_12] : memref<256x128xf32, #tpu.memory_space<vmem>>, vector<256x128xf32>
      tpu.vector_store %arg6[%c0_11, %c0_12], %12 {strides = array<i32>} : memref<256x128xf32, #tpu.memory_space<vmem>>, vector<256x128xf32>,
    } else {
    }
    %c0 = arith.constant 0 : index
    %c0_1 = arith.constant 0 : index
    %3 = vector.load %arg6[%c0, %c0_1] : memref<256x128xf32, #tpu.memory_space<vmem>>, vector<256x128xf32>
    %c0_2 = arith.constant 0 : index
    %c0_3 = arith.constant 0 : index
    %4 = vector.load %arg3[%c0_2, %c0_3] : memref<256x512xf32, #tpu.memory_space<vmem>>, vector<256x512xf32>
    %c0_4 = arith.constant 0 : index
    %c0_5 = arith.constant 0 : index
    %5 = vector.load %arg4[%c0_4, %c0_5] : memref<512x128xf32, #tpu.memory_space<vmem>>, vector<512x128xf32>
    %cst = arith.constant dense<0.000000e+00> : vector<256x128xf32>
    %6 = tpu.matmul %4, %5, %cst {dimension_numbers = #tpu.dot_dimension_numbers<[1], [0], [0], [1], [0, 0, 1, 1], [], []>} : vector<256x512xf32>, vector<512x128xf32>, vector<256x128xf32> -> vector<256x128xf32>
    %7 = arith.addf %3, %6 : vector<256x128xf32>
    %c0_6 = arith.constant 0 : index
    %c0_7 = arith.constant 0 : index
    %8 = vector.load %arg6[%c0_6, %c0_7] : memref<256x128xf32, #tpu.memory_space<vmem>>, vector<256x128xf32>
    tpu.vector_store %arg6[%c0_6, %c0_7], %7 {strides = array<i32>} : memref<256x128xf32, #tpu.memory_space<vmem>>, vector<256x128xf32>,
    %c0_i32_8 = arith.constant 0 : i32
    %9 = arith.cmpi eq, %arg2, %c0_i32_8 : i32
    %10 = arith.extui %9 : i1 to i32
    %c0_i32_9 = arith.constant 0 : i32
    %11 = arith.cmpi ne, %10, %c0_i32_9 : i32
    scf.if %11 {
      %c0_10 = arith.constant 0 : index
      %c0_11 = arith.constant 0 : index
      %12 = vector.load %arg6[%c0_10, %c0_11] : memref<256x128xf32, #tpu.memory_space<vmem>>, vector<256x128xf32>
      %c0_12 = arith.constant 0 : index
      %c0_13 = arith.constant 0 : index
      %13 = vector.load %arg5[%c0_12, %c0_13] : memref<256x128xf32, #tpu.memory_space<vmem>>, vector<256x128xf32>
      tpu.vector_store %arg5[%c0_12, %c0_13], %12 {strides = array<i32>} : memref<256x128xf32, #tpu.memory_space<vmem>>, vector<256x128xf32>,
    } else {
    }
    return
  }
  func.func @transform_0(%arg0: i32, %arg1: i32, %arg2: i32) -> (i32, i32) {
    %c0_i32 = arith.constant 0 : i32
    return %arg0, %arg2 : i32, i32
  }
  func.func @transform_1(%arg0: i32, %arg1: i32, %arg2: i32) -> (i32, i32) {
    %c0_i32 = arith.constant 0 : i32
    return %arg2, %arg1 : i32, i32
  }
  func.func @transform_2(%arg0: i32, %arg1: i32, %arg2: i32) -> (i32, i32) {
    %c0_i32 = arith.constant 0 : i32
    return %arg0, %arg1 : i32, i32
  }
}

</mosaic_0001>

<llo_original>
// kernel: cosine_attention.3
$region0: #{cosine_attention.3}
  #allocation0 [shape = 'u32[]', space=smem, size = 0x4, offset = 0x4, fixed_abs, tag = 'smem constant byte address 0x4 - core index']
  #allocation1 [shape = 'u32[144,128]{1,0:T(1,128)}', space=vmem, size = 0x12000, scoped, tag = 'internal scratch']
  #allocation2 [shape = 'f32[256,256]{1,0:T(8,128)}', space=vmem, size = 0x40000, scoped, tag = 'scratch operand']
  %s0 = inlined_call_operand.vmem [shape: f32[512,128], index: 0, kind: input, shape index: {}]
  %s1 = inlined_call_operand.vmem [shape: f32[128,1536], index: 1, kind: input, shape index: {}]
  %s2 = inlined_call_operand.vmem [shape: f32[512,1536], index: 2, kind: output, shape index: {}]
  %s3 = sld [smem:[#allocation0]]
  $region91: #{cosine_attention.3} parent=0
    _
  %s5 = ssub.s32 1, %s3
  %s6 = scalar_select 0, %s5, %s3
  $region1: #{cosine_attention.3} parent=0
    #allocation3 [shape = 'u8[262144]{0}', space=vmem, size = 0x40000, scoped, tag = 'input window, operand 1']
    #allocation4 [shape = 'u8[524288]{0}', space=vmem, size = 0x80000, scoped, tag = 'output window, operand 0']
    loop: start=0, step=1, limit=14
    $region2: #{cosine_attention.3} parent=1 // loop_pre_header
      _
    $region3: #{cosine_attention.3} parent=1 // loop_header
      %s8 = sphi 0, %s12
      %p9 = scmp.ge.s32.totalorder %s8, 14
      %s15 = sphi 0, %s34
      %s16 = sphi 0, %s30
      %s17 = sphi 0, %s26
      %s18 = sphi 0, %s15
      %s19 = sphi 0, %s16
      %s20 = sphi 0, %s17
      %s21 = sphi 0, %s18
      %s22 = sphi 0, %s19
      %s23 = sphi 0, %s20
      %s39 = sphi 0, %s41
      %s42 = sphi 0, %s39
      %s43 = sphi 0, %s42
      %s59 = sphi 0, %s43
      %s67 = sphi 0, %s69
      %s70 = sphi 0, %s67
      %s71 = sphi 0, %s70
      %s87 = sphi 0, %s71
      %s95 = sphi 0, %s97
      %s98 = sphi 0, %s95
      %s99 = sphi 0, %s98
      %s115 = sphi 0, %s99
    $region4: #{cosine_attention.3} parent=1 // loop_header_branch
      %11 = sbr.rel (%p9) target = $region8
    $region5: #{cosine_attention.3} parent=1 // loop_body
      %s13 = ssub.s32 %s8, 1
      %s14 = ssub.s32 %s8, 2
      %s24 = sadd.s32 1, %s17
      %p25 = scmp.ge.s32.totalorder %s24, 1
      %s26 = scalar_select %p25, 0, %s24
      %s27 = sadd.s32 1, %s16
      %s28 = scalar_select %p25, %s27, %s16
      %p29 = scmp.ge.s32.totalorder %s28, 6
      %s30 = scalar_select %p29, 0, %s28
      %s31 = sadd.s32 1, %s15
      %s32 = scalar_select %p29, %s31, %s15
      %p33 = scmp.ge.s32.totalorder %s32, 2
      %s34 = scalar_select %p33, 0, %s32
      %s35 = ssub.s32 %s15, %s34
      %s36 = ssub.s32 %s17, %s26
      %s37 = sor.u32 %s35, %s36
      %p38 = scmp.eq.s32.totalorder %s37, 0
      %s40 = sadd.s32 %s39, 1
      %s41 = scalar_select %p38, %s39, %s40
      %p44 = pneg %p38
      %p45 = scmp.eq.s32.totalorder %s8, 11
      %p46 = por %p44, %p45
      %p47 = scmp.ne.s32.totalorder %s39, %s42
      %p48 = scmp.eq.s32.totalorder %s8, 0
      %p49 = por %p47, %p48
      %p50 = scmp.ne.s32.totalorder %s39, %s42
      %p51 = scmp.eq.s32.totalorder %s13, 11
      %p52 = por %p50, %p51
      %p53 = scmp.ne.s32.totalorder %s42, %s43
      %p54 = scmp.eq.s32.totalorder %s13, 0
      %p55 = por %p53, %p54
      %p56 = scmp.ne.s32.totalorder %s42, %s43
      %p57 = scmp.eq.s32.totalorder %s14, 11
      %p58 = por %p56, %p57
      %p60 = scmp.ne.s32.totalorder %s43, %s59
      %p61 = scmp.eq.s32.totalorder %s14, 0
      %p62 = por %p60, %p61
      %s63 = ssub.s32 %s17, %s26
      %s64 = ssub.s32 %s16, %s30
      %s65 = sor.u32 %s63, %s64
      %p66 = scmp.eq.s32.totalorder %s65, 0
      %s68 = sadd.s32 %s67, 1
      %s69 = scalar_select %p66, %s67, %s68
      %p72 = pneg %p66
      %p73 = scmp.eq.s32.totalorder %s8, 11
      %p74 = por %p72, %p73
      %p75 = scmp.ne.s32.totalorder %s67, %s70
      %p76 = scmp.eq.s32.totalorder %s8, 0
      %p77 = por %p75, %p76
      %p78 = scmp.ne.s32.totalorder %s67, %s70
      %p79 = scmp.eq.s32.totalorder %s13, 11
      %p80 = por %p78, %p79
      %p81 = scmp.ne.s32.totalorder %s70, %s71
      %p82 = scmp.eq.s32.totalorder %s13, 0
      %p83 = por %p81, %p82
      %p84 = scmp.ne.s32.totalorder %s70, %s71
      %p85 = scmp.eq.s32.totalorder %s14, 11
      %p86 = por %p84, %p85
      %p88 = scmp.ne.s32.totalorder %s71, %s87
      %p89 = scmp.eq.s32.totalorder %s14, 0
      %p90 = por %p88, %p89
      %s91 = ssub.s32 %s15, %s34
      %s92 = ssub.s32 %s16, %s30
      %s93 = sor.u32 %s91, %s92
      %p94 = scmp.eq.s32.totalorder %s93, 0
      %s96 = sadd.s32 %s95, 1
      %s97 = scalar_select %p94, %s95, %s96
      %p100 = pneg %p94
      %p101 = scmp.eq.s32.totalorder %s8, 11
      %p102 = por %p100, %p101
      %p103 = scmp.ne.s32.totalorder %s95, %s98
      %p104 = scmp.eq.s32.totalorder %s8, 0
      %p105 = por %p103, %p104
      %p106 = scmp.ne.s32.totalorder %s95, %s98
      %p107 = scmp.eq.s32.totalorder %s13, 11
      %p108 = por %p106, %p107
      %p109 = scmp.ne.s32.totalorder %s98, %s99
      %p110 = scmp.eq.s32.totalorder %s13, 0
      %p111 = por %p109, %p110
      %p112 = scmp.ne.s32.totalorder %s98, %s99
      %p113 = scmp.eq.s32.totalorder %s14, 11
      %p114 = por %p112, %p113
      %p116 = scmp.ne.s32.totalorder %s99, %s115
      %p117 = scmp.eq.s32.totalorder %s14, 0
      %p118 = por %p116, %p117
      %p119 = scmp.le.s32.totalorder 1, %s8
      %p120 = scmp.lt.s32.totalorder %s8, 13
      %p121 = pnand %p119, %p120
      %p122 = pneg %p121
      // Predicated region
      $region9: #{cosine_attention.3} parent=5 // pred_check
        _
      $region10: #{cosine_attention.3} parent=5 // pred_check_branch
        %124 = sbr.rel (%p121) target = $region12
      $region11: #{cosine_attention.3} parent=5 // pred_region
        %s125 = ssub.s32 %s8, 1
      $region12: #{cosine_attention.3} parent=5 // pred_fallthru
        _
      %p126 = scmp.lt.s32.totalorder %s8, 12
      // Predicated region
      $region13: #{cosine_attention.3} parent=5 // pred_check
        %p127 = pneg %p126
      $region14: #{cosine_attention.3} parent=5 // pred_check_branch
        %129 = sbr.rel (%p127) target = $region16
      $region15: #{cosine_attention.3} parent=5 // pred_region
        // Predicated region
        $region17: #{cosine_attention.3} parent=15 // pred_check
          %p130 = pneg %p49
        $region18: #{cosine_attention.3} parent=15 // pred_check_branch
          %132 = sbr.rel (%p130) target = $region20
        $region19: #{cosine_attention.3} parent=15 // pred_region
          %s133 = smul.u32 32, %s15
          %p134 = scmp.lt.s32.totalorder %s133, 63
          %s135 = scalar_select %p134, %s133, 63
          %p136 = scmp.lt.s32.totalorder %s17, 0
          %s137 = scalar_select %p136, %s17, 0
          %s138 = sadd.s32 %s137, %s135
          %s139 = smul.addr %s138, 8
          %s140 = scalar_lea.vmem %s0, %s139
          %s141 = smul.u32 32, %s15
        $region20: #{cosine_attention.3} parent=15 // pred_fallthru
          _
        // Predicated region
        $region21: #{cosine_attention.3} parent=15 // pred_check
          %p142 = pneg %p77
        $region22: #{cosine_attention.3} parent=15 // pred_check_branch
          %144 = sbr.rel (%p142) target = $region24
        $region23: #{cosine_attention.3} parent=15 // pred_region
          %s145 = sand.u32 %s67, 1
          %s146 = sand.u32 %s67, 1
          %s147 = smul.addr %s146, 256
          %s148 = scalar_lea.vmem [#allocation3], %s147
          %s149 = smul.u32 16, %s17
          %s150 = smul.u32 2, %s16
          %s151 = smul.addr %s149, 12
          %s152 = sadd.s32 %s150, %s151
          %s153 = smul.addr %s152, 8
          %s154 = scalar_lea.vmem %s1, %s153
          // Predicated region
          $region25: #{cosine_attention.3} parent=23 // pred_check
            _
          $region26: #{cosine_attention.3} parent=23 // pred_check_branch
            %156 = sbr.rel (0) target = $region28
          $region27: #{cosine_attention.3} parent=23 // pred_region
            // Predicated region
            $region29: #{cosine_attention.3} parent=27 // pred_check
              _
            $region30: #{cosine_attention.3} parent=27 // pred_check_branch
              %158 = sbr.rel (0) target = $region32
            $region31: #{cosine_attention.3} parent=27 // pred_region
              loop: start=0, step=1, limit=1
              $region33: #{cosine_attention.3} parent=31 // loop_pre_header
                _
              $region34: #{cosine_attention.3} parent=31 // loop_header
                %s160 = sphi 0, %s164
                %p161 = scmp.ge.s32.totalorder %s160, 1
                %s165 = sphi %s154, %s154
                %s166 = sphi %s148, %s148
              $region35: #{cosine_attention.3} parent=31 // loop_header_branch
                %163 = sbr.rel (%p161) target = $region39
              $region36: #{cosine_attention.3} parent=31 // loop_body
                %v167 = vld [vmem:[%s165] sm:$0xff]
                %168 = vst [vmem:[%s166] sm:$0xff] %v167
                %v169 = vld [vmem:[%s165 + $0x8] sm:$0xff]
                %170 = vst [vmem:[%s166 + $0x8] sm:$0xff] %v169
                %v171 = vld [vmem:[%s165 + $0x60] sm:$0xff]
                %172 = vst [vmem:[%s166 + $0x10] sm:$0xff] %v171
                %v173 = vld [vmem:[%s165 + $0x68] sm:$0xff]
                %174 = vst [vmem:[%s166 + $0x18] sm:$0xff] %v173
                %v175 = vld [vmem:[%s165 + $0xc0] sm:$0xff]
                %176 = vst [vmem:[%s166 + $0x20] sm:$0xff] %v175
                %v177 = vld [vmem:[%s165 + $0xc8] sm:$0xff]
                %178 = vst [vmem:[%s166 + $0x28] sm:$0xff] %v177
                %v179 = vld [vmem:[%s165 + $0x120] sm:$0xff]
                %180 = vst [vmem:[%s166 + $0x30] sm:$0xff] %v179
                %v181 = vld [vmem:[%s165 + $0x128] sm:$0xff]
                %182 = vst [vmem:[%s166 + $0x38] sm:$0xff] %v181
                %v183 = vld [vmem:[%s165 + $0x180] sm:$0xff]
                %184 = vst [vmem:[%s166 + $0x40] sm:$0xff] %v183
                %v185 = vld [vmem:[%s165 + $0x188] sm:$0xff]
                %186 = vst [vmem:[%s166 + $0x48] sm:$0xff] %v185
                %v187 = vld [vmem:[%s165 + $0x1e0] sm:$0xff]
                %188 = vst [vmem:[%s166 + $0x50] sm:$0xff] %v187
                %v189 = vld [vmem:[%s165 + $0x1e8] sm:$0xff]
                %190 = vst [vmem:[%s166 + $0x58] sm:$0xff] %v189
                %v191 = vld [vmem:[%s165 + $0x240] sm:$0xff]
                %192 = vst [vmem:[%s166 + $0x60] sm:$0xff] %v191
                %v193 = vld [vmem:[%s165 + $0x248] sm:$0xff]
                %194 = vst [vmem:[%s166 + $0x68] sm:$0xff] %v193
                %v195 = vld [vmem:[%s165 + $0x2a0] sm:$0xff]
                %196 = vst [vmem:[%s166 + $0x70] sm:$0xff] %v195
                %v197 = vld [vmem:[%s165 + $0x2a8] sm:$0xff]
                %198 = vst [vmem:[%s166 + $0x78] sm:$0xff] %v197
                %v199 = vld [vmem:[%s165 + $0x300] sm:$0xff]
                %200 = vst [vmem:[%s166 + $0x80] sm:$0xff] %v199
                %v201 = vld [vmem:[%s165 + $0x308] sm:$0xff]
                %202 = vst [vmem:[%s166 + $0x88] sm:$0xff] %v201
                %v203 = vld [vmem:[%s165 + $0x360] sm:$0xff]
                %204 = vst [vmem:[%s166 + $0x90] sm:$0xff] %v203
                %v205 = vld [vmem:[%s165 + $0x368] sm:$0xff]
                %206 = vst [vmem:[%s166 + $0x98] sm:$0xff] %v205
                %v207 = vld [vmem:[%s165 + $0x3c0] sm:$0xff]
                %208 = vst [vmem:[%s166 + $0xa0] sm:$0xff] %v207
                %v209 = vld [vmem:[%s165 + $0x3c8] sm:$0xff]
                %210 = vst [vmem:[%s166 + $0xa8] sm:$0xff] %v209
                %v211 = vld [vmem:[%s165 + $0x420] sm:$0xff]
                %212 = vst [vmem:[%s166 + $0xb0] sm:$0xff] %v211
                %v213 = vld [vmem:[%s165 + $0x428] sm:$0xff]
                %214 = vst [vmem:[%s166 + $0xb8] sm:$0xff] %v213
                %v215 = vld [vmem:[%s165 + $0x480] sm:$0xff]
                %216 = vst [vmem:[%s166 + $0xc0] sm:$0xff] %v215
                %v217 = vld [vmem:[%s165 + $0x488] sm:$0xff]
                %218 = vst [vmem:[%s166 + $0xc8] sm:$0xff] %v217
                %v219 = vld [vmem:[%s165 + $0x4e0] sm:$0xff]
                %220 = vst [vmem:[%s166 + $0xd0] sm:$0xff] %v219
                %v221 = vld [vmem:[%s165 + $0x4e8] sm:$0xff]
                %222 = vst [vmem:[%s166 + $0xd8] sm:$0xff] %v221
                %v223 = vld [vmem:[%s165 + $0x540] sm:$0xff]
                %224 = vst [vmem:[%s166 + $0xe0] sm:$0xff] %v223
                %v225 = vld [vmem:[%s165 + $0x548] sm:$0xff]
                %226 = vst [vmem:[%s166 + $0xe8] sm:$0xff] %v225
                %v227 = vld [vmem:[%s165 + $0x5a0] sm:$0xff]
                %228 = vst [vmem:[%s166 + $0xf0] sm:$0xff] %v227
                %v229 = vld [vmem:[%s165 + $0x5a8] sm:$0xff]
                %230 = vst [vmem:[%s166 + $0xf8] sm:$0xff] %v229
              $region37: #{cosine_attention.3} parent=31 // loop_footer
                %s164 = sadd.s32 1, %s160
              $region38: #{cosine_attention.3} parent=31 // loop_footer_branch
                %159 = sbr.rel target = $region34
              $region39: #{cosine_attention.3} parent=31 // loop_exit
                _
            $region32: #{cosine_attention.3} parent=27 // pred_fallthru
              _
            // Predicated region
            $region40: #{cosine_attention.3} parent=27 // pred_check
              _
            $region41: #{cosine_attention.3} parent=27 // pred_check_branch
              %232 = sbr.rel target = $region43
            $region42: #{cosine_attention.3} parent=27 // pred_region
              _
            $region43: #{cosine_attention.3} parent=27 // pred_fallthru
              _
          $region28: #{cosine_attention.3} parent=23 // pred_fallthru
            _
          %233 = vnop
        $region24: #{cosine_attention.3} parent=15 // pred_fallthru
          _
      $region16: #{cosine_attention.3} parent=5 // pred_fallthru
        _
      %p234 = scmp.le.s32.totalorder 1, %s8
      %p235 = scmp.lt.s32.totalorder %s8, 13
      %p236 = pnand %p234, %p235
      %p237 = pneg %p236
      // Predicated region
      $region44: #{cosine_attention.3} parent=5 // pred_check
        _
      $region45: #{cosine_attention.3} parent=5 // pred_check_branch
        %239 = sbr.rel (%p236) target = $region47
      $region46: #{cosine_attention.3} parent=5 // pred_region
        %s240 = ssub.s32 %s8, 1
        %s241 = sand.u32 %s70, 1
        %s242 = sand.u32 %s70, 1
        %s243 = smul.addr %s242, 256
        %s244 = scalar_lea.vmem [#allocation3], %s243
        // Predicated region
        $region48: #{cosine_attention.3} parent=46 // pred_check
          %p245 = pneg %p83
        $region49: #{cosine_attention.3} parent=46 // pred_check_branch
          %247 = sbr.rel (%p245) target = $region51
        $region50: #{cosine_attention.3} parent=46 // pred_region
          _
        $region51: #{cosine_attention.3} parent=46 // pred_fallthru
          _
        %s248 = smul.u32 32, %s18
        %p249 = scmp.lt.s32.totalorder %s248, 63
        %s250 = scalar_select %p249, %s248, 63
        %p251 = scmp.lt.s32.totalorder %s20, 0
        %s252 = scalar_select %p251, %s20, 0
        %s253 = sadd.s32 %s252, %s250
        %s254 = smul.addr %s253, 8
        %s255 = scalar_lea.vmem %s0, %s254
        %p256 = pneg %p55
        %p257 = pneg %p52
        %s258 = sand.u32 %s70, 1
        %s259 = sand.u32 %s70, 1
        %s260 = smul.addr %s259, 256
        %s261 = scalar_lea.vmem [#allocation3], %s260
        %p262 = pneg %p83
        %p263 = pneg %p80
        %p264 = pneg %p111
        %p265 = pneg %p108
        %s266 = sand.u32 %s98, 1
        %s267 = sand.u32 %s98, 1
        %s268 = smul.addr %s267, 512
        %s269 = scalar_lea.vmem [#allocation4], %s268
        %s270 = smul.u32 32, %s18
        %p271 = scmp.lt.s32.totalorder %s270, 63
        %s272 = scalar_select %p271, %s270, 63
        %p273 = scmp.lt.s32.totalorder %s20, 0
        %s274 = scalar_select %p273, %s20, 0
        %s275 = sadd.s32 %s274, %s272
        %s276 = smul.addr %s275, 8
        %s277 = scalar_lea.vmem %s0, %s276
        %s278 = smul.u32 32, %s18
        %s279 = smul.u32 16, %s20
        %s280 = smul.u32 2, %s19
        %s281 = smul.u32 32, %s18
        %s282 = smul.u32 2, %s19
        %p283 = scmp.eq.s32.totalorder %s20, 0
        // Predicated region
        $region52: #{cosine_attention.3} parent=46 // pred_check
          %p284 = pneg %p283
        $region53: #{cosine_attention.3} parent=46 // pred_check_branch
          %286 = sbr.rel (%p284) target = $region55
        $region54: #{cosine_attention.3} parent=46 // pred_region
          %287 = vst [vmem:[#allocation2] sm:$0xff] 0.0
          %288 = vst [vmem:[#allocation2 + $0x8] sm:$0xff] 0.0
          %289 = vst [vmem:[#allocation2 + $0x10] sm:$0xff] 0.0
          %290 = vst [vmem:[#allocation2 + $0x18] sm:$0xff] 0.0
          %291 = vst [vmem:[#allocation2 + $0x20] sm:$0xff] 0.0
          %292 = vst [vmem:[#allocation2 + $0x28] sm:$0xff] 0.0
          %293 = vst [vmem:[#allocation2 + $0x30] sm:$0xff] 0.0
          %294 = vst [vmem:[#allocation2 + $0x38] sm:$0xff] 0.0
          %295 = vst [vmem:[#allocation2 + $0x40] sm:$0xff] 0.0
          %296 = vst [vmem:[#allocation2 + $0x48] sm:$0xff] 0.0
          %297 = vst [vmem:[#allocation2 + $0x50] sm:$0xff] 0.0
          %298 = vst [vmem:[#allocation2 + $0x58] sm:$0xff] 0.0
          %299 = vst [vmem:[#allocation2 + $0x60] sm:$0xff] 0.0
          %300 = vst [vmem:[#allocation2 + $0x68] sm:$0xff] 0.0
          %301 = vst [vmem:[#allocation2 + $0x70] sm:$0xff] 0.0
          %302 = vst [vmem:[#allocation2 + $0x78] sm:$0xff] 0.0
          %303 = vst [vmem:[#allocation2 + $0x80] sm:$0xff] 0.0
          %304 = vst [vmem:[#allocation2 + $0x88] sm:$0xff] 0.0
          %305 = vst [vmem:[#allocation2 + $0x90] sm:$0xff] 0.0
          %306 = vst [vmem:[#allocation2 + $0x98] sm:$0xff] 0.0
          %307 = vst [vmem:[#allocation2 + $0xa0] sm:$0xff] 0.0
          %308 = vst [vmem:[#allocation2 + $0xa8] sm:$0xff] 0.0
          %309 = vst [vmem:[#allocation2 + $0xb0] sm:$0xff] 0.0
          %310 = vst [vmem:[#allocation2 + $0xb8] sm:$0xff] 0.0
          %311 = vst [vmem:[#allocation2 + $0xc0] sm:$0xff] 0.0
          %312 = vst [vmem:[#allocation2 + $0xc8] sm:$0xff] 0.0
          %313 = vst [vmem:[#allocation2 + $0xd0] sm:$0xff] 0.0
          %314 = vst [vmem:[#allocation2 + $0xd8] sm:$0xff] 0.0
          %315 = vst [vmem:[#allocation2 + $0xe0] sm:$0xff] 0.0
          %316 = vst [vmem:[#allocation2 + $0xe8] sm:$0xff] 0.0
          %317 = vst [vmem:[#allocation2 + $0xf0] sm:$0xff] 0.0
          %318 = vst [vmem:[#allocation2 + $0xf8] sm:$0xff] 0.0
          %319 = vst [vmem:[#allocation2 + $0x100] sm:$0xff] 0.0
          %320 = vst [vmem:[#allocation2 + $0x108] sm:$0xff] 0.0
          %321 = vst [vmem:[#allocation2 + $0x110] sm:$0xff] 0.0
          %322 = vst [vmem:[#allocation2 + $0x118] sm:$0xff] 0.0
          %323 = vst [vmem:[#allocation2 + $0x120] sm:$0xff] 0.0
          %324 = vst [vmem:[#allocation2 + $0x128] sm:$0xff] 0.0
          %325 = vst [vmem:[#allocation2 + $0x130] sm:$0xff] 0.0
          %326 = vst [vmem:[#allocation2 + $0x138] sm:$0xff] 0.0
          %327 = vst [vmem:[#allocation2 + $0x140] sm:$0xff] 0.0
          %328 = vst [vmem:[#allocation2 + $0x148] sm:$0xff] 0.0
          %329 = vst [vmem:[#allocation2 + $0x150] sm:$0xff] 0.0
          %330 = vst [vmem:[#allocation2 + $0x158] sm:$0xff] 0.0
          %331 = vst [vmem:[#allocation2 + $0x160] sm:$0xff] 0.0
          %332 = vst [vmem:[#allocation2 + $0x168] sm:$0xff] 0.0
          %333 = vst [vmem:[#allocation2 + $0x170] sm:$0xff] 0.0
          %334 = vst [vmem:[#allocation2 + $0x178] sm:$0xff] 0.0
          %335 = vst [vmem:[#allocation2 + $0x180] sm:$0xff] 0.0
          %336 = vst [vmem:[#allocation2 + $0x188] sm:$0xff] 0.0
          %337 = vst [vmem:[#allocation2 + $0x190] sm:$0xff] 0.0
          %338 = vst [vmem:[#allocation2 + $0x198] sm:$0xff] 0.0
          %339 = vst [vmem:[#allocation2 + $0x1a0] sm:$0xff] 0.0
          %340 = vst [vmem:[#allocation2 + $0x1a8] sm:$0xff] 0.0
          %341 = vst [vmem:[#allocation2 + $0x1b0] sm:$0xff] 0.0
          %342 = vst [vmem:[#allocation2 + $0x1b8] sm:$0xff] 0.0
          %343 = vst [vmem:[#allocation2 + $0x1c0] sm:$0xff] 0.0
          %344 = vst [vmem:[#allocation2 + $0x1c8] sm:$0xff] 0.0
          %345 = vst [vmem:[#allocation2 + $0x1d0] sm:$0xff] 0.0
          %346 = vst [vmem:[#allocation2 + $0x1d8] sm:$0xff] 0.0
          %347 = vst [vmem:[#allocation2 + $0x1e0] sm:$0xff] 0.0
          %348 = vst [vmem:[#allocation2 + $0x1e8] sm:$0xff] 0.0
          %349 = vst [vmem:[#allocation2 + $0x1f0] sm:$0xff] 0.0
          %350 = vst [vmem:[#allocation2 + $0x1f8] sm:$0xff] 0.0
        $region55: #{cosine_attention.3} parent=46 // pred_fallthru
          _
        %v351 = vld [vmem:[#allocation2] sm:$0xff]
        %v352 = vld [vmem:[#allocation2 + $0x8] sm:$0xff]
        %v353 = vld [vmem:[#allocation2 + $0x10] sm:$0xff]
        %v354 = vld [vmem:[#allocation2 + $0x18] sm:$0xff]
        %v355 = vld [vmem:[#allocation2 + $0x20] sm:$0xff]
        %v356 = vld [vmem:[#allocation2 + $0x28] sm:$0xff]
        %v357 = vld [vmem:[#allocation2 + $0x30] sm:$0xff]
        %v358 = vld [vmem:[#allocation2 + $0x38] sm:$0xff]
        %v359 = vld [vmem:[#allocation2 + $0x40] sm:$0xff]
        %v360 = vld [vmem:[#allocation2 + $0x48] sm:$0xff]
        %v361 = vld [vmem:[#allocation2 + $0x50] sm:$0xff]
        %v362 = vld [vmem:[#allocation2 + $0x58] sm:$0xff]
        %v363 = vld [vmem:[#allocation2 + $0x60] sm:$0xff]
        %v364 = vld [vmem:[#allocation2 + $0x68] sm:$0xff]
        %v365 = vld [vmem:[#allocation2 + $0x70] sm:$0xff]
        %v366 = vld [vmem:[#allocation2 + $0x78] sm:$0xff]
        %v367 = vld [vmem:[#allocation2 + $0x80] sm:$0xff]
        %v368 = vld [vmem:[#allocation2 + $0x88] sm:$0xff]
        %v369 = vld [vmem:[#allocation2 + $0x90] sm:$0xff]
        %v370 = vld [vmem:[#allocation2 + $0x98] sm:$0xff]
        %v371 = vld [vmem:[#allocation2 + $0xa0] sm:$0xff]
        %v372 = vld [vmem:[#allocation2 + $0xa8] sm:$0xff]
        %v373 = vld [vmem:[#allocation2 + $0xb0] sm:$0xff]
        %v374 = vld [vmem:[#allocation2 + $0xb8] sm:$0xff]
        %v375 = vld [vmem:[#allocation2 + $0xc0] sm:$0xff]
        %v376 = vld [vmem:[#allocation2 + $0xc8] sm:$0xff]
        %v377 = vld [vmem:[#allocation2 + $0xd0] sm:$0xff]
        %v378 = vld [vmem:[#allocation2 + $0xd8] sm:$0xff]
        %v379 = vld [vmem:[#allocation2 + $0xe0] sm:$0xff]
        %v380 = vld [vmem:[#allocation2 + $0xe8] sm:$0xff]
        %v381 = vld [vmem:[#allocation2 + $0xf0] sm:$0xff]
        %v382 = vld [vmem:[#allocation2 + $0xf8] sm:$0xff]
        %v383 = vld [vmem:[#allocation2 + $0x100] sm:$0xff]
        %v384 = vld [vmem:[#allocation2 + $0x108] sm:$0xff]
        %v385 = vld [vmem:[#allocation2 + $0x110] sm:$0xff]
        %v386 = vld [vmem:[#allocation2 + $0x118] sm:$0xff]
        %v387 = vld [vmem:[#allocation2 + $0x120] sm:$0xff]
        %v388 = vld [vmem:[#allocation2 + $0x128] sm:$0xff]
        %v389 = vld [vmem:[#allocation2 + $0x130] sm:$0xff]
        %v390 = vld [vmem:[#allocation2 + $0x138] sm:$0xff]
        %v391 = vld [vmem:[#allocation2 + $0x140] sm:$0xff]
        %v392 = vld [vmem:[#allocation2 + $0x148] sm:$0xff]
        %v393 = vld [vmem:[#allocation2 + $0x150] sm:$0xff]
        %v394 = vld [vmem:[#allocation2 + $0x158] sm:$0xff]
        %v395 = vld [vmem:[#allocation2 + $0x160] sm:$0xff]
        %v396 = vld [vmem:[#allocation2 + $0x168] sm:$0xff]
        %v397 = vld [vmem:[#allocation2 + $0x170] sm:$0xff]
        %v398 = vld [vmem:[#allocation2 + $0x178] sm:$0xff]
        %v399 = vld [vmem:[#allocation2 + $0x180] sm:$0xff]
        %v400 = vld [vmem:[#allocation2 + $0x188] sm:$0xff]
        %v401 = vld [vmem:[#allocation2 + $0x190] sm:$0xff]
        %v402 = vld [vmem:[#allocation2 + $0x198] sm:$0xff]
        %v403 = vld [vmem:[#allocation2 + $0x1a0] sm:$0xff]
        %v404 = vld [vmem:[#allocation2 + $0x1a8] sm:$0xff]
        %v405 = vld [vmem:[#allocation2 + $0x1b0] sm:$0xff]
        %v406 = vld [vmem:[#allocation2 + $0x1b8] sm:$0xff]
        %v407 = vld [vmem:[#allocation2 + $0x1c0] sm:$0xff]
        %v408 = vld [vmem:[#allocation2 + $0x1c8] sm:$0xff]
        %v409 = vld [vmem:[#allocation2 + $0x1d0] sm:$0xff]
        %v410 = vld [vmem:[#allocation2 + $0x1d8] sm:$0xff]
        %v411 = vld [vmem:[#allocation2 + $0x1e0] sm:$0xff]
        %v412 = vld [vmem:[#allocation2 + $0x1e8] sm:$0xff]
        %v413 = vld [vmem:[#allocation2 + $0x1f0] sm:$0xff]
        %v414 = vld [vmem:[#allocation2 + $0x1f8] sm:$0xff]
        %v415 = vld [vmem:[%s277] sm:$0xff]
        %v416 = vld [vmem:[%s277 + $0x8] sm:$0xff]
        %v417 = vld [vmem:[%s277 + $0x10] sm:$0xff]
        %v418 = vld [vmem:[%s277 + $0x18] sm:$0xff]
        %v419 = vld [vmem:[%s277 + $0x20] sm:$0xff]
        %v420 = vld [vmem:[%s277 + $0x28] sm:$0xff]
        %v421 = vld [vmem:[%s277 + $0x30] sm:$0xff]
        %v422 = vld [vmem:[%s277 + $0x38] sm:$0xff]
        %v423 = vld [vmem:[%s277 + $0x40] sm:$0xff]
        %v424 = vld [vmem:[%s277 + $0x48] sm:$0xff]
        %v425 = vld [vmem:[%s277 + $0x50] sm:$0xff]
        %v426 = vld [vmem:[%s277 + $0x58] sm:$0xff]
        %v427 = vld [vmem:[%s277 + $0x60] sm:$0xff]
        %v428 = vld [vmem:[%s277 + $0x68] sm:$0xff]
        %v429 = vld [vmem:[%s277 + $0x70] sm:$0xff]
        %v430 = vld [vmem:[%s277 + $0x78] sm:$0xff]
        %v431 = vld [vmem:[%s277 + $0x80] sm:$0xff]
        %v432 = vld [vmem:[%s277 + $0x88] sm:$0xff]
        %v433 = vld [vmem:[%s277 + $0x90] sm:$0xff]
        %v434 = vld [vmem:[%s277 + $0x98] sm:$0xff]
        %v435 = vld [vmem:[%s277 + $0xa0] sm:$0xff]
        %v436 = vld [vmem:[%s277 + $0xa8] sm:$0xff]
        %v437 = vld [vmem:[%s277 + $0xb0] sm:$0xff]
        %v438 = vld [vmem:[%s277 + $0xb8] sm:$0xff]
        %v439 = vld [vmem:[%s277 + $0xc0] sm:$0xff]
        %v440 = vld [vmem:[%s277 + $0xc8] sm:$0xff]
        %v441 = vld [vmem:[%s277 + $0xd0] sm:$0xff]
        %v442 = vld [vmem:[%s277 + $0xd8] sm:$0xff]
        %v443 = vld [vmem:[%s277 + $0xe0] sm:$0xff]
        %v444 = vld [vmem:[%s277 + $0xe8] sm:$0xff]
        %v445 = vld [vmem:[%s277 + $0xf0] sm:$0xff]
        %v446 = vld [vmem:[%s277 + $0xf8] sm:$0xff]
        %v447 = vld [vmem:[%s244] sm:$0xff]
        %v448 = vld [vmem:[%s244 + $0x8] sm:$0xff]
        %v449 = vld [vmem:[%s244 + $0x10] sm:$0xff]
        %v450 = vld [vmem:[%s244 + $0x18] sm:$0xff]
        %v451 = vld [vmem:[%s244 + $0x20] sm:$0xff]
        %v452 = vld [vmem:[%s244 + $0x28] sm:$0xff]
        %v453 = vld [vmem:[%s244 + $0x30] sm:$0xff]
        %v454 = vld [vmem:[%s244 + $0x38] sm:$0xff]
        %v455 = vld [vmem:[%s244 + $0x40] sm:$0xff]
        %v456 = vld [vmem:[%s244 + $0x48] sm:$0xff]
        %v457 = vld [vmem:[%s244 + $0x50] sm:$0xff]
        %v458 = vld [vmem:[%s244 + $0x58] sm:$0xff]
        %v459 = vld [vmem:[%s244 + $0x60] sm:$0xff]
        %v460 = vld [vmem:[%s244 + $0x68] sm:$0xff]
        %v461 = vld [vmem:[%s244 + $0x70] sm:$0xff]
        %v462 = vld [vmem:[%s244 + $0x78] sm:$0xff]
        %v463 = vld [vmem:[%s244 + $0x80] sm:$0xff]
        %v464 = vld [vmem:[%s244 + $0x88] sm:$0xff]
        %v465 = vld [vmem:[%s244 + $0x90] sm:$0xff]
        %v466 = vld [vmem:[%s244 + $0x98] sm:$0xff]
        %v467 = vld [vmem:[%s244 + $0xa0] sm:$0xff]
        %v468 = vld [vmem:[%s244 + $0xa8] sm:$0xff]
        %v469 = vld [vmem:[%s244 + $0xb0] sm:$0xff]
        %v470 = vld [vmem:[%s244 + $0xb8] sm:$0xff]
        %v471 = vld [vmem:[%s244 + $0xc0] sm:$0xff]
        %v472 = vld [vmem:[%s244 + $0xc8] sm:$0xff]
        %v473 = vld [vmem:[%s244 + $0xd0] sm:$0xff]
        %v474 = vld [vmem:[%s244 + $0xd8] sm:$0xff]
        %v475 = vld [vmem:[%s244 + $0xe0] sm:$0xff]
        %v476 = vld [vmem:[%s244 + $0xe8] sm:$0xff]
        %v477 = vld [vmem:[%s244 + $0xf0] sm:$0xff]
        %v478 = vld [vmem:[%s244 + $0xf8] sm:$0xff]
        %479 = vmatprep.subr.mxu0 %v478
        %480 = vmatpush1.msra.mxu0 %v477
        %481 = vmatprep.subr.mxu0 %v476
        %482 = vmatpush1.msra.mxu0 %v475
        %483 = vmatprep.subr.mxu0 %v474
        %484 = vmatpush1.msra.mxu0 %v473
        %485 = vmatprep.subr.mxu0 %v472
        %486 = vmatpush1.msra.mxu0 %v471
        %487 = vmatprep.subr.mxu0 %v470
        %488 = vmatpush1.msra.mxu0 %v469
        %489 = vmatprep.subr.mxu0 %v468
        %490 = vmatpush1.msra.mxu0 %v467
        %491 = vmatprep.subr.mxu0 %v466
        %492 = vmatpush1.msra.mxu0 %v465
        %493 = vmatprep.subr.mxu0 %v464
        %494 = vmatpush1.msra.mxu0 %v463
        %495 = vmatprep.subr.mxu0 %v462
        %496 = vmatpush1.msra.mxu0 %v461
        %497 = vmatprep.subr.mxu0 %v460
        %498 = vmatpush1.msra.mxu0 %v459
        %499 = vmatprep.subr.mxu0 %v458
        %500 = vmatpush1.msra.mxu0 %v457
        %501 = vmatprep.subr.mxu0 %v456
        %502 = vmatpush1.msra.mxu0 %v455
        %503 = vmatprep.subr.mxu0 %v454
        %504 = vmatpush1.msra.mxu0 %v453
        %505 = vmatprep.subr.mxu0 %v452
        %506 = vmatpush1.msra.mxu0 %v451
        %507 = vmatprep.subr.mxu0 %v450
        %508 = vmatpush1.msra.mxu0 %v449
        %509 = vmatprep.subr.mxu0 %v448
        %510 = vmatpush1.msra.mxu0 %v447
        %511 = vmatprep.subr.mxu0 0.0
        %512 = vmatpush2.msra.mxu0 0.0
        %513 = vmatprep.subr.mxu0 0.0
        %514 = vmatpush2.msra.mxu0 0.0
        %515 = vmatprep.subr.mxu0 0.0
        %516 = vmatpush2.msra.mxu0 0.0
        %517 = vmatprep.subr.mxu0 0.0
        %518 = vmatpush2.msra.mxu0 0.0
        %519 = vmatprep.subr.mxu0 0.0
        %520 = vmatpush2.msra.mxu0 0.0
        %521 = vmatprep.subr.mxu0 0.0
        %522 = vmatpush2.msra.mxu0 0.0
        %523 = vmatprep.subr.mxu0 0.0
        %524 = vmatpush2.msra.mxu0 0.0
        %525 = vmatprep.subr.mxu0 0.0
        %526 = vmatpush2.msra.mxu0 0.0
        %527 = vmatprep.subr.mxu0 0.0
        %528 = vmatpush2.msra.mxu0 0.0
        %529 = vmatprep.subr.mxu0 0.0
        %530 = vmatpush2.msra.mxu0 0.0
        %531 = vmatprep.subr.mxu0 0.0
        %532 = vmatpush2.msra.mxu0 0.0
        %533 = vmatprep.subr.mxu0 0.0
        %534 = vmatpush2.msra.mxu0 0.0
        %535 = vmatprep.subr.mxu0 0.0
        %536 = vmatpush2.msra.mxu0 0.0
        %537 = vmatprep.subr.mxu0 0.0
        %538 = vmatpush2.msra.mxu0 0.0
        %539 = vmatprep.subr.mxu0 0.0
        %540 = vmatpush2.msra.mxu0 0.0
        %541 = vmatprep.subr.mxu0 0.0
        %542 = vmatpush2.msra.mxu0 0.0
        %543 = vmatprep.mubr.f32.mxu0 0.0
        %544 = vmatmul.mubr.f32.gmra.mxu0 %v415
        %v545 = vpop.f32.mrf.mxu0
        %v546 = vadd.f32 0.0, %v545
        %v547 = vpop.f32.mrf.mxu0
        %v548 = vadd.f32 0.0, %v547
        %549 = vmatprep.mubr.f32.mxu0 0.0
        %550 = vmatmul.mubr.f32.gmra.mxu0 %v416
        %v551 = vpop.f32.mrf.mxu0
        %v552 = vadd.f32 0.0, %v551
        %v553 = vpop.f32.mrf.mxu0
        %v554 = vadd.f32 0.0, %v553
        %555 = vmatprep.mubr.f32.mxu0 0.0
        %556 = vmatmul.mubr.f32.gmra.mxu0 %v417
        %v557 = vpop.f32.mrf.mxu0
        %v558 = vadd.f32 0.0, %v557
        %v559 = vpop.f32.mrf.mxu0
        %v560 = vadd.f32 0.0, %v559
        %561 = vmatprep.mubr.f32.mxu0 0.0
        %562 = vmatmul.mubr.f32.gmra.mxu0 %v418
        %v563 = vpop.f32.mrf.mxu0
        %v564 = vadd.f32 0.0, %v563
        %v565 = vpop.f32.mrf.mxu0
        %v566 = vadd.f32 0.0, %v565
        %567 = vmatprep.mubr.f32.mxu0 0.0
        %568 = vmatmul.mubr.f32.gmra.mxu0 %v419
        %v569 = vpop.f32.mrf.mxu0
        %v570 = vadd.f32 0.0, %v569
        %v571 = vpop.f32.mrf.mxu0
        %v572 = vadd.f32 0.0, %v571
        %573 = vmatprep.mubr.f32.mxu0 0.0
        %574 = vmatmul.mubr.f32.gmra.mxu0 %v420
        %v575 = vpop.f32.mrf.mxu0
        %v576 = vadd.f32 0.0, %v575
        %v577 = vpop.f32.mrf.mxu0
        %v578 = vadd.f32 0.0, %v577
        %579 = vmatprep.mubr.f32.mxu0 0.0
        %580 = vmatmul.mubr.f32.gmra.mxu0 %v421
        %v581 = vpop.f32.mrf.mxu0
        %v582 = vadd.f32 0.0, %v581
        %v583 = vpop.f32.mrf.mxu0
        %v584 = vadd.f32 0.0, %v583
        %585 = vmatprep.mubr.f32.mxu0 0.0
        %586 = vmatmul.mubr.f32.gmra.mxu0 %v422
        %v587 = vpop.f32.mrf.mxu0
        %v588 = vadd.f32 0.0, %v587
        %v589 = vpop.f32.mrf.mxu0
        %v590 = vadd.f32 0.0, %v589
        %591 = vmatprep.mubr.f32.mxu0 0.0
        %592 = vmatmul.mubr.f32.gmra.mxu0 %v423
        %v593 = vpop.f32.mrf.mxu0
        %v594 = vadd.f32 0.0, %v593
        %v595 = vpop.f32.mrf.mxu0
        %v596 = vadd.f32 0.0, %v595
        %597 = vmatprep.mubr.f32.mxu0 0.0
        %598 = vmatmul.mubr.f32.gmra.mxu0 %v424
        %v599 = vpop.f32.mrf.mxu0
        %v600 = vadd.f32 0.0, %v599
        %v601 = vpop.f32.mrf.mxu0
        %v602 = vadd.f32 0.0, %v601
        %603 = vmatprep.mubr.f32.mxu0 0.0
        %604 = vmatmul.mubr.f32.gmra.mxu0 %v425
        %v605 = vpop.f32.mrf.mxu0
        %v606 = vadd.f32 0.0, %v605
        %v607 = vpop.f32.mrf.mxu0
        %v608 = vadd.f32 0.0, %v607
        %609 = vmatprep.mubr.f32.mxu0 0.0
        %610 = vmatmul.mubr.f32.gmra.mxu0 %v426
        %v611 = vpop.f32.mrf.mxu0
        %v612 = vadd.f32 0.0, %v611
        %v613 = vpop.f32.mrf.mxu0
        %v614 = vadd.f32 0.0, %v613
        %615 = vmatprep.mubr.f32.mxu0 0.0
        %616 = vmatmul.mubr.f32.gmra.mxu0 %v427
        %v617 = vpop.f32.mrf.mxu0
        %v618 = vadd.f32 0.0, %v617
        %v619 = vpop.f32.mrf.mxu0
        %v620 = vadd.f32 0.0, %v619
        %621 = vmatprep.mubr.f32.mxu0 0.0
        %622 = vmatmul.mubr.f32.gmra.mxu0 %v428
        %v623 = vpop.f32.mrf.mxu0
        %v624 = vadd.f32 0.0, %v623
        %v625 = vpop.f32.mrf.mxu0
        %v626 = vadd.f32 0.0, %v625
        %627 = vmatprep.mubr.f32.mxu0 0.0
        %628 = vmatmul.mubr.f32.gmra.mxu0 %v429
        %v629 = vpop.f32.mrf.mxu0
        %v630 = vadd.f32 0.0, %v629
        %v631 = vpop.f32.mrf.mxu0
        %v632 = vadd.f32 0.0, %v631
        %633 = vmatprep.mubr.f32.mxu0 0.0
        %634 = vmatmul.mubr.f32.gmra.mxu0 %v430
        %v635 = vpop.f32.mrf.mxu0
        %v636 = vadd.f32 0.0, %v635
        %v637 = vpop.f32.mrf.mxu0
        %v638 = vadd.f32 0.0, %v637
        %639 = vmatprep.mubr.f32.mxu0 0.0
        %640 = vmatmul.mubr.f32.gmra.mxu0 %v431
        %v641 = vpop.f32.mrf.mxu0
        %v642 = vadd.f32 0.0, %v641
        %v643 = vpop.f32.mrf.mxu0
        %v644 = vadd.f32 0.0, %v643
        %645 = vmatprep.mubr.f32.mxu0 0.0
        %646 = vmatmul.mubr.f32.gmra.mxu0 %v432
        %v647 = vpop.f32.mrf.mxu0
        %v648 = vadd.f32 0.0, %v647
        %v649 = vpop.f32.mrf.mxu0
        %v650 = vadd.f32 0.0, %v649
        %651 = vmatprep.mubr.f32.mxu0 0.0
        %652 = vmatmul.mubr.f32.gmra.mxu0 %v433
        %v653 = vpop.f32.mrf.mxu0
        %v654 = vadd.f32 0.0, %v653
        %v655 = vpop.f32.mrf.mxu0
        %v656 = vadd.f32 0.0, %v655
        %657 = vmatprep.mubr.f32.mxu0 0.0
        %658 = vmatmul.mubr.f32.gmra.mxu0 %v434
        %v659 = vpop.f32.mrf.mxu0
        %v660 = vadd.f32 0.0, %v659
        %v661 = vpop.f32.mrf.mxu0
        %v662 = vadd.f32 0.0, %v661
        %663 = vmatprep.mubr.f32.mxu0 0.0
        %664 = vmatmul.mubr.f32.gmra.mxu0 %v435
        %v665 = vpop.f32.mrf.mxu0
        %v666 = vadd.f32 0.0, %v665
        %v667 = vpop.f32.mrf.mxu0
        %v668 = vadd.f32 0.0, %v667
        %669 = vmatprep.mubr.f32.mxu0 0.0
        %670 = vmatmul.mubr.f32.gmra.mxu0 %v436
        %v671 = vpop.f32.mrf.mxu0
        %v672 = vadd.f32 0.0, %v671
        %v673 = vpop.f32.mrf.mxu0
        %v674 = vadd.f32 0.0, %v673
        %675 = vmatprep.mubr.f32.mxu0 0.0
        %676 = vmatmul.mubr.f32.gmra.mxu0 %v437
        %v677 = vpop.f32.mrf.mxu0
        %v678 = vadd.f32 0.0, %v677
        %v679 = vpop.f32.mrf.mxu0
        %v680 = vadd.f32 0.0, %v679
        %681 = vmatprep.mubr.f32.mxu0 0.0
        %682 = vmatmul.mubr.f32.gmra.mxu0 %v438
        %v683 = vpop.f32.mrf.mxu0
        %v684 = vadd.f32 0.0, %v683
        %v685 = vpop.f32.mrf.mxu0
        %v686 = vadd.f32 0.0, %v685
        %687 = vmatprep.mubr.f32.mxu0 0.0
        %688 = vmatmul.mubr.f32.gmra.mxu0 %v439
        %v689 = vpop.f32.mrf.mxu0
        %v690 = vadd.f32 0.0, %v689
        %v691 = vpop.f32.mrf.mxu0
        %v692 = vadd.f32 0.0, %v691
        %693 = vmatprep.mubr.f32.mxu0 0.0
        %694 = vmatmul.mubr.f32.gmra.mxu0 %v440
        %v695 = vpop.f32.mrf.mxu0
        %v696 = vadd.f32 0.0, %v695
        %v697 = vpop.f32.mrf.mxu0
        %v698 = vadd.f32 0.0, %v697
        %699 = vmatprep.mubr.f32.mxu0 0.0
        %700 = vmatmul.mubr.f32.gmra.mxu0 %v441
        %v701 = vpop.f32.mrf.mxu0
        %v702 = vadd.f32 0.0, %v701
        %v703 = vpop.f32.mrf.mxu0
        %v704 = vadd.f32 0.0, %v703
        %705 = vmatprep.mubr.f32.mxu0 0.0
        %706 = vmatmul.mubr.f32.gmra.mxu0 %v442
        %v707 = vpop.f32.mrf.mxu0
        %v708 = vadd.f32 0.0, %v707
        %v709 = vpop.f32.mrf.mxu0
        %v710 = vadd.f32 0.0, %v709
        %711 = vmatprep.mubr.f32.mxu0 0.0
        %712 = vmatmul.mubr.f32.gmra.mxu0 %v443
        %v713 = vpop.f32.mrf.mxu0
        %v714 = vadd.f32 0.0, %v713
        %v715 = vpop.f32.mrf.mxu0
        %v716 = vadd.f32 0.0, %v715
        %717 = vmatprep.mubr.f32.mxu0 0.0
        %718 = vmatmul.mubr.f32.gmra.mxu0 %v444
        %v719 = vpop.f32.mrf.mxu0
        %v720 = vadd.f32 0.0, %v719
        %v721 = vpop.f32.mrf.mxu0
        %v722 = vadd.f32 0.0, %v721
        %723 = vmatprep.mubr.f32.mxu0 0.0
        %724 = vmatmul.mubr.f32.gmra.mxu0 %v445
        %v725 = vpop.f32.mrf.mxu0
        %v726 = vadd.f32 0.0, %v725
        %v727 = vpop.f32.mrf.mxu0
        %v728 = vadd.f32 0.0, %v727
        %729 = vmatprep.mubr.f32.mxu0 0.0
        %730 = vmatmul.mubr.f32.gmra.mxu0 %v446
        %v731 = vpop.f32.mrf.mxu0
        %v732 = vadd.f32 0.0, %v731
        %v733 = vpop.f32.mrf.mxu0
        %v734 = vadd.f32 0.0, %v733
        %735 = vdwg.mxu0
        %v736 = vadd.f32 %v351, %v546
        %v737 = vadd.f32 %v352, %v548
        %v738 = vadd.f32 %v353, %v552
        %v739 = vadd.f32 %v354, %v554
        %v740 = vadd.f32 %v355, %v558
        %v741 = vadd.f32 %v356, %v560
        %v742 = vadd.f32 %v357, %v564
        %v743 = vadd.f32 %v358, %v566
        %v744 = vadd.f32 %v359, %v570
        %v745 = vadd.f32 %v360, %v572
        %v746 = vadd.f32 %v361, %v576
        %v747 = vadd.f32 %v362, %v578
        %v748 = vadd.f32 %v363, %v582
        %v749 = vadd.f32 %v364, %v584
        %v750 = vadd.f32 %v365, %v588
        %v751 = vadd.f32 %v366, %v590
        %v752 = vadd.f32 %v367, %v594
        %v753 = vadd.f32 %v368, %v596
        %v754 = vadd.f32 %v369, %v600
        %v755 = vadd.f32 %v370, %v602
        %v756 = vadd.f32 %v371, %v606
        %v757 = vadd.f32 %v372, %v608
        %v758 = vadd.f32 %v373, %v612
        %v759 = vadd.f32 %v374, %v614
        %v760 = vadd.f32 %v375, %v618
        %v761 = vadd.f32 %v376, %v620
        %v762 = vadd.f32 %v377, %v624
        %v763 = vadd.f32 %v378, %v626
        %v764 = vadd.f32 %v379, %v630
        %v765 = vadd.f32 %v380, %v632
        %v766 = vadd.f32 %v381, %v636
        %v767 = vadd.f32 %v382, %v638
        %v768 = vadd.f32 %v383, %v642
        %v769 = vadd.f32 %v384, %v644
        %v770 = vadd.f32 %v385, %v648
        %v771 = vadd.f32 %v386, %v650
        %v772 = vadd.f32 %v387, %v654
        %v773 = vadd.f32 %v388, %v656
        %v774 = vadd.f32 %v389, %v660
        %v775 = vadd.f32 %v390, %v662
        %v776 = vadd.f32 %v391, %v666
        %v777 = vadd.f32 %v392, %v668
        %v778 = vadd.f32 %v393, %v672
        %v779 = vadd.f32 %v394, %v674
        %v780 = vadd.f32 %v395, %v678
        %v781 = vadd.f32 %v396, %v680
        %v782 = vadd.f32 %v397, %v684
        %v783 = vadd.f32 %v398, %v686
        %v784 = vadd.f32 %v399, %v690
        %v785 = vadd.f32 %v400, %v692
        %v786 = vadd.f32 %v401, %v696
        %v787 = vadd.f32 %v402, %v698
        %v788 = vadd.f32 %v403, %v702
        %v789 = vadd.f32 %v404, %v704
        %v790 = vadd.f32 %v405, %v708
        %v791 = vadd.f32 %v406, %v710
        %v792 = vadd.f32 %v407, %v714
        %v793 = vadd.f32 %v408, %v716
        %v794 = vadd.f32 %v409, %v720
        %v795 = vadd.f32 %v410, %v722
        %v796 = vadd.f32 %v411, %v726
        %v797 = vadd.f32 %v412, %v728
        %v798 = vadd.f32 %v413, %v732
        %v799 = vadd.f32 %v414, %v734
        %800 = vst [vmem:[#allocation2] sm:$0xff] %v736
        %801 = vst [vmem:[#allocation2 + $0x8] sm:$0xff] %v737
        %802 = vst [vmem:[#allocation2 + $0x10] sm:$0xff] %v738
        %803 = vst [vmem:[#allocation2 + $0x18] sm:$0xff] %v739
        %804 = vst [vmem:[#allocation2 + $0x20] sm:$0xff] %v740
        %805 = vst [vmem:[#allocation2 + $0x28] sm:$0xff] %v741
        %806 = vst [vmem:[#allocation2 + $0x30] sm:$0xff] %v742
        %807 = vst [vmem:[#allocation2 + $0x38] sm:$0xff] %v743
        %808 = vst [vmem:[#allocation2 + $0x40] sm:$0xff] %v744
        %809 = vst [vmem:[#allocation2 + $0x48] sm:$0xff] %v745
        %810 = vst [vmem:[#allocation2 + $0x50] sm:$0xff] %v746
        %811 = vst [vmem:[#allocation2 + $0x58] sm:$0xff] %v747
        %812 = vst [vmem:[#allocation2 + $0x60] sm:$0xff] %v748
        %813 = vst [vmem:[#allocation2 + $0x68] sm:$0xff] %v749
        %814 = vst [vmem:[#allocation2 + $0x70] sm:$0xff] %v750
        %815 = vst [vmem:[#allocation2 + $0x78] sm:$0xff] %v751
        %816 = vst [vmem:[#allocation2 + $0x80] sm:$0xff] %v752
        %817 = vst [vmem:[#allocation2 + $0x88] sm:$0xff] %v753
        %818 = vst [vmem:[#allocation2 + $0x90] sm:$0xff] %v754
        %819 = vst [vmem:[#allocation2 + $0x98] sm:$0xff] %v755
        %820 = vst [vmem:[#allocation2 + $0xa0] sm:$0xff] %v756
        %821 = vst [vmem:[#allocation2 + $0xa8] sm:$0xff] %v757
        %822 = vst [vmem:[#allocation2 + $0xb0] sm:$0xff] %v758
        %823 = vst [vmem:[#allocation2 + $0xb8] sm:$0xff] %v759
        %824 = vst [vmem:[#allocation2 + $0xc0] sm:$0xff] %v760
        %825 = vst [vmem:[#allocation2 + $0xc8] sm:$0xff] %v761
        %826 = vst [vmem:[#allocation2 + $0xd0] sm:$0xff] %v762
        %827 = vst [vmem:[#allocation2 + $0xd8] sm:$0xff] %v763
        %828 = vst [vmem:[#allocation2 + $0xe0] sm:$0xff] %v764
        %829 = vst [vmem:[#allocation2 + $0xe8] sm:$0xff] %v765
        %830 = vst [vmem:[#allocation2 + $0xf0] sm:$0xff] %v766
        %831 = vst [vmem:[#allocation2 + $0xf8] sm:$0xff] %v767
        %832 = vst [vmem:[#allocation2 + $0x100] sm:$0xff] %v768
        %833 = vst [vmem:[#allocation2 + $0x108] sm:$0xff] %v769
        %834 = vst [vmem:[#allocation2 + $0x110] sm:$0xff] %v770
        %835 = vst [vmem:[#allocation2 + $0x118] sm:$0xff] %v771
        %836 = vst [vmem:[#allocation2 + $0x120] sm:$0xff] %v772
        %837 = vst [vmem:[#allocation2 + $0x128] sm:$0xff] %v773
        %838 = vst [vmem:[#allocation2 + $0x130] sm:$0xff] %v774
        %839 = vst [vmem:[#allocation2 + $0x138] sm:$0xff] %v775
        %840 = vst [vmem:[#allocation2 + $0x140] sm:$0xff] %v776
        %841 = vst [vmem:[#allocation2 + $0x148] sm:$0xff] %v777
        %842 = vst [vmem:[#allocation2 + $0x150] sm:$0xff] %v778
        %843 = vst [vmem:[#allocation2 + $0x158] sm:$0xff] %v779
        %844 = vst [vmem:[#allocation2 + $0x160] sm:$0xff] %v780
        %845 = vst [vmem:[#allocation2 + $0x168] sm:$0xff] %v781
        %846 = vst [vmem:[#allocation2 + $0x170] sm:$0xff] %v782
        %847 = vst [vmem:[#allocation2 + $0x178] sm:$0xff] %v783
        %848 = vst [vmem:[#allocation2 + $0x180] sm:$0xff] %v784
        %849 = vst [vmem:[#allocation2 + $0x188] sm:$0xff] %v785
        %850 = vst [vmem:[#allocation2 + $0x190] sm:$0xff] %v786
        %851 = vst [vmem:[#allocation2 + $0x198] sm:$0xff] %v787
        %852 = vst [vmem:[#allocation2 + $0x1a0] sm:$0xff] %v788
        %853 = vst [vmem:[#allocation2 + $0x1a8] sm:$0xff] %v789
        %854 = vst [vmem:[#allocation2 + $0x1b0] sm:$0xff] %v790
        %855 = vst [vmem:[#allocation2 + $0x1b8] sm:$0xff] %v791
        %856 = vst [vmem:[#allocation2 + $0x1c0] sm:$0xff] %v792
        %857 = vst [vmem:[#allocation2 + $0x1c8] sm:$0xff] %v793
        %858 = vst [vmem:[#allocation2 + $0x1d0] sm:$0xff] %v794
        %859 = vst [vmem:[#allocation2 + $0x1d8] sm:$0xff] %v795
        %860 = vst [vmem:[#allocation2 + $0x1e0] sm:$0xff] %v796
        %861 = vst [vmem:[#allocation2 + $0x1e8] sm:$0xff] %v797
        %862 = vst [vmem:[#allocation2 + $0x1f0] sm:$0xff] %v798
        %863 = vst [vmem:[#allocation2 + $0x1f8] sm:$0xff] %v799
        // Predicated region
        $region56: #{cosine_attention.3} parent=46 // pred_check
          %p864 = pneg %p283
        $region57: #{cosine_attention.3} parent=46 // pred_check_branch
          %866 = sbr.rel (%p864) target = $region59
        $region58: #{cosine_attention.3} parent=46 // pred_region
          %v867 = vld [vmem:[#allocation2] sm:$0xff]
          %v868 = vld [vmem:[#allocation2 + $0x8] sm:$0xff]
          %v869 = vld [vmem:[#allocation2 + $0x10] sm:$0xff]
          %v870 = vld [vmem:[#allocation2 + $0x18] sm:$0xff]
          %v871 = vld [vmem:[#allocation2 + $0x20] sm:$0xff]
          %v872 = vld [vmem:[#allocation2 + $0x28] sm:$0xff]
          %v873 = vld [vmem:[#allocation2 + $0x30] sm:$0xff]
          %v874 = vld [vmem:[#allocation2 + $0x38] sm:$0xff]
          %v875 = vld [vmem:[#allocation2 + $0x40] sm:$0xff]
          %v876 = vld [vmem:[#allocation2 + $0x48] sm:$0xff]
          %v877 = vld [vmem:[#allocation2 + $0x50] sm:$0xff]
          %v878 = vld [vmem:[#allocation2 + $0x58] sm:$0xff]
          %v879 = vld [vmem:[#allocation2 + $0x60] sm:$0xff]
          %v880 = vld [vmem:[#allocation2 + $0x68] sm:$0xff]
          %v881 = vld [vmem:[#allocation2 + $0x70] sm:$0xff]
          %v882 = vld [vmem:[#allocation2 + $0x78] sm:$0xff]
          %v883 = vld [vmem:[#allocation2 + $0x80] sm:$0xff]
          %v884 = vld [vmem:[#allocation2 + $0x88] sm:$0xff]
          %v885 = vld [vmem:[#allocation2 + $0x90] sm:$0xff]
          %v886 = vld [vmem:[#allocation2 + $0x98] sm:$0xff]
          %v887 = vld [vmem:[#allocation2 + $0xa0] sm:$0xff]
          %v888 = vld [vmem:[#allocation2 + $0xa8] sm:$0xff]
          %v889 = vld [vmem:[#allocation2 + $0xb0] sm:$0xff]
          %v890 = vld [vmem:[#allocation2 + $0xb8] sm:$0xff]
          %v891 = vld [vmem:[#allocation2 + $0xc0] sm:$0xff]
          %v892 = vld [vmem:[#allocation2 + $0xc8] sm:$0xff]
          %v893 = vld [vmem:[#allocation2 + $0xd0] sm:$0xff]
          %v894 = vld [vmem:[#allocation2 + $0xd8] sm:$0xff]
          %v895 = vld [vmem:[#allocation2 + $0xe0] sm:$0xff]
          %v896 = vld [vmem:[#allocation2 + $0xe8] sm:$0xff]
          %v897 = vld [vmem:[#allocation2 + $0xf0] sm:$0xff]
          %v898 = vld [vmem:[#allocation2 + $0xf8] sm:$0xff]
          %v899 = vld [vmem:[#allocation2 + $0x100] sm:$0xff]
          %v900 = vld [vmem:[#allocation2 + $0x108] sm:$0xff]
          %v901 = vld [vmem:[#allocation2 + $0x110] sm:$0xff]
          %v902 = vld [vmem:[#allocation2 + $0x118] sm:$0xff]
          %v903 = vld [vmem:[#allocation2 + $0x120] sm:$0xff]
          %v904 = vld [vmem:[#allocation2 + $0x128] sm:$0xff]
          %v905 = vld [vmem:[#allocation2 + $0x130] sm:$0xff]
          %v906 = vld [vmem:[#allocation2 + $0x138] sm:$0xff]
          %v907 = vld [vmem:[#allocation2 + $0x140] sm:$0xff]
          %v908 = vld [vmem:[#allocation2 + $0x148] sm:$0xff]
          %v909 = vld [vmem:[#allocation2 + $0x150] sm:$0xff]
          %v910 = vld [vmem:[#allocation2 + $0x158] sm:$0xff]
          %v911 = vld [vmem:[#allocation2 + $0x160] sm:$0xff]
          %v912 = vld [vmem:[#allocation2 + $0x168] sm:$0xff]
          %v913 = vld [vmem:[#allocation2 + $0x170] sm:$0xff]
          %v914 = vld [vmem:[#allocation2 + $0x178] sm:$0xff]
          %v915 = vld [vmem:[#allocation2 + $0x180] sm:$0xff]
          %v916 = vld [vmem:[#allocation2 + $0x188] sm:$0xff]
          %v917 = vld [vmem:[#allocation2 + $0x190] sm:$0xff]
          %v918 = vld [vmem:[#allocation2 + $0x198] sm:$0xff]
          %v919 = vld [vmem:[#allocation2 + $0x1a0] sm:$0xff]
          %v920 = vld [vmem:[#allocation2 + $0x1a8] sm:$0xff]
          %v921 = vld [vmem:[#allocation2 + $0x1b0] sm:$0xff]
          %v922 = vld [vmem:[#allocation2 + $0x1b8] sm:$0xff]
          %v923 = vld [vmem:[#allocation2 + $0x1c0] sm:$0xff]
          %v924 = vld [vmem:[#allocation2 + $0x1c8] sm:$0xff]
          %v925 = vld [vmem:[#allocation2 + $0x1d0] sm:$0xff]
          %v926 = vld [vmem:[#allocation2 + $0x1d8] sm:$0xff]
          %v927 = vld [vmem:[#allocation2 + $0x1e0] sm:$0xff]
          %v928 = vld [vmem:[#allocation2 + $0x1e8] sm:$0xff]
          %v929 = vld [vmem:[#allocation2 + $0x1f0] sm:$0xff]
          %v930 = vld [vmem:[#allocation2 + $0x1f8] sm:$0xff]
          %931 = vst [vmem:[%s269] sm:$0xff] %v867
          %932 = vst [vmem:[%s269 + $0x8] sm:$0xff] %v868
          %933 = vst [vmem:[%s269 + $0x10] sm:$0xff] %v869
          %934 = vst [vmem:[%s269 + $0x18] sm:$0xff] %v870
          %935 = vst [vmem:[%s269 + $0x20] sm:$0xff] %v871
          %936 = vst [vmem:[%s269 + $0x28] sm:$0xff] %v872
          %937 = vst [vmem:[%s269 + $0x30] sm:$0xff] %v873
          %938 = vst [vmem:[%s269 + $0x38] sm:$0xff] %v874
          %939 = vst [vmem:[%s269 + $0x40] sm:$0xff] %v875
          %940 = vst [vmem:[%s269 + $0x48] sm:$0xff] %v876
          %941 = vst [vmem:[%s269 + $0x50] sm:$0xff] %v877
          %942 = vst [vmem:[%s269 + $0x58] sm:$0xff] %v878
          %943 = vst [vmem:[%s269 + $0x60] sm:$0xff] %v879
          %944 = vst [vmem:[%s269 + $0x68] sm:$0xff] %v880
          %945 = vst [vmem:[%s269 + $0x70] sm:$0xff] %v881
          %946 = vst [vmem:[%s269 + $0x78] sm:$0xff] %v882
          %947 = vst [vmem:[%s269 + $0x80] sm:$0xff] %v883
          %948 = vst [vmem:[%s269 + $0x88] sm:$0xff] %v884
          %949 = vst [vmem:[%s269 + $0x90] sm:$0xff] %v885
          %950 = vst [vmem:[%s269 + $0x98] sm:$0xff] %v886
          %951 = vst [vmem:[%s269 + $0xa0] sm:$0xff] %v887
          %952 = vst [vmem:[%s269 + $0xa8] sm:$0xff] %v888
          %953 = vst [vmem:[%s269 + $0xb0] sm:$0xff] %v889
          %954 = vst [vmem:[%s269 + $0xb8] sm:$0xff] %v890
          %955 = vst [vmem:[%s269 + $0xc0] sm:$0xff] %v891
          %956 = vst [vmem:[%s269 + $0xc8] sm:$0xff] %v892
          %957 = vst [vmem:[%s269 + $0xd0] sm:$0xff] %v893
          %958 = vst [vmem:[%s269 + $0xd8] sm:$0xff] %v894
          %959 = vst [vmem:[%s269 + $0xe0] sm:$0xff] %v895
          %960 = vst [vmem:[%s269 + $0xe8] sm:$0xff] %v896
          %961 = vst [vmem:[%s269 + $0xf0] sm:$0xff] %v897
          %962 = vst [vmem:[%s269 + $0xf8] sm:$0xff] %v898
          %963 = vst [vmem:[%s269 + $0x100] sm:$0xff] %v899
          %964 = vst [vmem:[%s269 + $0x108] sm:$0xff] %v900
          %965 = vst [vmem:[%s269 + $0x110] sm:$0xff] %v901
          %966 = vst [vmem:[%s269 + $0x118] sm:$0xff] %v902
          %967 = vst [vmem:[%s269 + $0x120] sm:$0xff] %v903
          %968 = vst [vmem:[%s269 + $0x128] sm:$0xff] %v904
          %969 = vst [vmem:[%s269 + $0x130] sm:$0xff] %v905
          %970 = vst [vmem:[%s269 + $0x138] sm:$0xff] %v906
          %971 = vst [vmem:[%s269 + $0x140] sm:$0xff] %v907
          %972 = vst [vmem:[%s269 + $0x148] sm:$0xff] %v908
          %973 = vst [vmem:[%s269 + $0x150] sm:$0xff] %v909
          %974 = vst [vmem:[%s269 + $0x158] sm:$0xff] %v910
          %975 = vst [vmem:[%s269 + $0x160] sm:$0xff] %v911
          %976 = vst [vmem:[%s269 + $0x168] sm:$0xff] %v912
          %977 = vst [vmem:[%s269 + $0x170] sm:$0xff] %v913
          %978 = vst [vmem:[%s269 + $0x178] sm:$0xff] %v914
          %979 = vst [vmem:[%s269 + $0x180] sm:$0xff] %v915
          %980 = vst [vmem:[%s269 + $0x188] sm:$0xff] %v916
          %981 = vst [vmem:[%s269 + $0x190] sm:$0xff] %v917
          %982 = vst [vmem:[%s269 + $0x198] sm:$0xff] %v918
          %983 = vst [vmem:[%s269 + $0x1a0] sm:$0xff] %v919
          %984 = vst [vmem:[%s269 + $0x1a8] sm:$0xff] %v920
          %985 = vst [vmem:[%s269 + $0x1b0] sm:$0xff] %v921
          %986 = vst [vmem:[%s269 + $0x1b8] sm:$0xff] %v922
          %987 = vst [vmem:[%s269 + $0x1c0] sm:$0xff] %v923
          %988 = vst [vmem:[%s269 + $0x1c8] sm:$0xff] %v924
          %989 = vst [vmem:[%s269 + $0x1d0] sm:$0xff] %v925
          %990 = vst [vmem:[%s269 + $0x1d8] sm:$0xff] %v926
          %991 = vst [vmem:[%s269 + $0x1e0] sm:$0xff] %v927
          %992 = vst [vmem:[%s269 + $0x1e8] sm:$0xff] %v928
          %993 = vst [vmem:[%s269 + $0x1f0] sm:$0xff] %v929
          %994 = vst [vmem:[%s269 + $0x1f8] sm:$0xff] %v930
        $region59: #{cosine_attention.3} parent=46 // pred_fallthru
          _
        %s995 = sand.u32 %s98, 1
        %s996 = sand.u32 %s98, 1
        %s997 = smul.addr %s996, 512
        %s998 = scalar_lea.vmem [#allocation4], %s997
        // Predicated region
        $region60: #{cosine_attention.3} parent=46 // pred_check
          %p999 = pneg %p108
        $region61: #{cosine_attention.3} parent=46 // pred_check_branch
          %1001 = sbr.rel (%p999) target = $region63
        $region62: #{cosine_attention.3} parent=46 // pred_region
          %s1002 = smul.u32 32, %s18
          %s1003 = smul.u32 2, %s19
          %s1004 = smul.addr %s1002, 12
          %s1005 = sadd.s32 %s1003, %s1004
          %s1006 = smul.addr %s1005, 8
          %s1007 = scalar_lea.vmem %s2, %s1006
          // Predicated region
          $region64: #{cosine_attention.3} parent=62 // pred_check
            _
          $region65: #{cosine_attention.3} parent=62 // pred_check_branch
            %1009 = sbr.rel (0) target = $region67
          $region66: #{cosine_attention.3} parent=62 // pred_region
            // Predicated region
            $region68: #{cosine_attention.3} parent=66 // pred_check
              _
            $region69: #{cosine_attention.3} parent=66 // pred_check_branch
              %1011 = sbr.rel (0) target = $region71
            $region70: #{cosine_attention.3} parent=66 // pred_region
              loop: start=0, step=1, limit=1
              $region72: #{cosine_attention.3} parent=70 // loop_pre_header
                _
              $region73: #{cosine_attention.3} parent=70 // loop_header
                %s1013 = sphi 0, %s1017
                %p1014 = scmp.ge.s32.totalorder %s1013, 1
                %s1018 = sphi %s998, %s998
                %s1019 = sphi %s1007, %s1007
              $region74: #{cosine_attention.3} parent=70 // loop_header_branch
                %1016 = sbr.rel (%p1014) target = $region78
              $region75: #{cosine_attention.3} parent=70 // loop_body
                %v1020 = vld [vmem:[%s1018] sm:$0xff]
                %1021 = vst [vmem:[%s1019] sm:$0xff] %v1020
                %v1022 = vld [vmem:[%s1018 + $0x8] sm:$0xff]
                %1023 = vst [vmem:[%s1019 + $0x8] sm:$0xff] %v1022
                %v1024 = vld [vmem:[%s1018 + $0x10] sm:$0xff]
                %1025 = vst [vmem:[%s1019 + $0x60] sm:$0xff] %v1024
                %v1026 = vld [vmem:[%s1018 + $0x18] sm:$0xff]
                %1027 = vst [vmem:[%s1019 + $0x68] sm:$0xff] %v1026
                %v1028 = vld [vmem:[%s1018 + $0x20] sm:$0xff]
                %1029 = vst [vmem:[%s1019 + $0xc0] sm:$0xff] %v1028
                %v1030 = vld [vmem:[%s1018 + $0x28] sm:$0xff]
                %1031 = vst [vmem:[%s1019 + $0xc8] sm:$0xff] %v1030
                %v1032 = vld [vmem:[%s1018 + $0x30] sm:$0xff]
                %1033 = vst [vmem:[%s1019 + $0x120] sm:$0xff] %v1032
                %v1034 = vld [vmem:[%s1018 + $0x38] sm:$0xff]
                %1035 = vst [vmem:[%s1019 + $0x128] sm:$0xff] %v1034
                %v1036 = vld [vmem:[%s1018 + $0x40] sm:$0xff]
                %1037 = vst [vmem:[%s1019 + $0x180] sm:$0xff] %v1036
                %v1038 = vld [vmem:[%s1018 + $0x48] sm:$0xff]
                %1039 = vst [vmem:[%s1019 + $0x188] sm:$0xff] %v1038
                %v1040 = vld [vmem:[%s1018 + $0x50] sm:$0xff]
                %1041 = vst [vmem:[%s1019 + $0x1e0] sm:$0xff] %v1040
                %v1042 = vld [vmem:[%s1018 + $0x58] sm:$0xff]
                %1043 = vst [vmem:[%s1019 + $0x1e8] sm:$0xff] %v1042
                %v1044 = vld [vmem:[%s1018 + $0x60] sm:$0xff]
                %1045 = vst [vmem:[%s1019 + $0x240] sm:$0xff] %v1044
                %v1046 = vld [vmem:[%s1018 + $0x68] sm:$0xff]
                %1047 = vst [vmem:[%s1019 + $0x248] sm:$0xff] %v1046
                %v1048 = vld [vmem:[%s1018 + $0x70] sm:$0xff]
                %1049 = vst [vmem:[%s1019 + $0x2a0] sm:$0xff] %v1048
                %v1050 = vld [vmem:[%s1018 + $0x78] sm:$0xff]
                %1051 = vst [vmem:[%s1019 + $0x2a8] sm:$0xff] %v1050
                %v1052 = vld [vmem:[%s1018 + $0x80] sm:$0xff]
                %1053 = vst [vmem:[%s1019 + $0x300] sm:$0xff] %v1052
                %v1054 = vld [vmem:[%s1018 + $0x88] sm:$0xff]
                %1055 = vst [vmem:[%s1019 + $0x308] sm:$0xff] %v1054
                %v1056 = vld [vmem:[%s1018 + $0x90] sm:$0xff]
                %1057 = vst [vmem:[%s1019 + $0x360] sm:$0xff] %v1056
                %v1058 = vld [vmem:[%s1018 + $0x98] sm:$0xff]
                %1059 = vst [vmem:[%s1019 + $0x368] sm:$0xff] %v1058
                %v1060 = vld [vmem:[%s1018 + $0xa0] sm:$0xff]
                %1061 = vst [vmem:[%s1019 + $0x3c0] sm:$0xff] %v1060
                %v1062 = vld [vmem:[%s1018 + $0xa8] sm:$0xff]
                %1063 = vst [vmem:[%s1019 + $0x3c8] sm:$0xff] %v1062
                %v1064 = vld [vmem:[%s1018 + $0xb0] sm:$0xff]
                %1065 = vst [vmem:[%s1019 + $0x420] sm:$0xff] %v1064
                %v1066 = vld [vmem:[%s1018 + $0xb8] sm:$0xff]
                %1067 = vst [vmem:[%s1019 + $0x428] sm:$0xff] %v1066
                %v1068 = vld [vmem:[%s1018 + $0xc0] sm:$0xff]
                %1069 = vst [vmem:[%s1019 + $0x480] sm:$0xff] %v1068
                %v1070 = vld [vmem:[%s1018 + $0xc8] sm:$0xff]
                %1071 = vst [vmem:[%s1019 + $0x488] sm:$0xff] %v1070
                %v1072 = vld [vmem:[%s1018 + $0xd0] sm:$0xff]
                %1073 = vst [vmem:[%s1019 + $0x4e0] sm:$0xff] %v1072
                %v1074 = vld [vmem:[%s1018 + $0xd8] sm:$0xff]
                %1075 = vst [vmem:[%s1019 + $0x4e8] sm:$0xff] %v1074
                %v1076 = vld [vmem:[%s1018 + $0xe0] sm:$0xff]
                %1077 = vst [vmem:[%s1019 + $0x540] sm:$0xff] %v1076
                %v1078 = vld [vmem:[%s1018 + $0xe8] sm:$0xff]
                %1079 = vst [vmem:[%s1019 + $0x548] sm:$0xff] %v1078
                %v1080 = vld [vmem:[%s1018 + $0xf0] sm:$0xff]
                %1081 = vst [vmem:[%s1019 + $0x5a0] sm:$0xff] %v1080
                %v1082 = vld [vmem:[%s1018 + $0xf8] sm:$0xff]
                %1083 = vst [vmem:[%s1019 + $0x5a8] sm:$0xff] %v1082
                %v1084 = vld [vmem:[%s1018 + $0x100] sm:$0xff]
                %1085 = vst [vmem:[%s1019 + $0x600] sm:$0xff] %v1084
                %v1086 = vld [vmem:[%s1018 + $0x108] sm:$0xff]
                %1087 = vst [vmem:[%s1019 + $0x608] sm:$0xff] %v1086
                %v1088 = vld [vmem:[%s1018 + $0x110] sm:$0xff]
                %1089 = vst [vmem:[%s1019 + $0x660] sm:$0xff] %v1088
                %v1090 = vld [vmem:[%s1018 + $0x118] sm:$0xff]
                %1091 = vst [vmem:[%s1019 + $0x668] sm:$0xff] %v1090
                %v1092 = vld [vmem:[%s1018 + $0x120] sm:$0xff]
                %1093 = vst [vmem:[%s1019 + $0x6c0] sm:$0xff] %v1092
                %v1094 = vld [vmem:[%s1018 + $0x128] sm:$0xff]
                %1095 = vst [vmem:[%s1019 + $0x6c8] sm:$0xff] %v1094
                %v1096 = vld [vmem:[%s1018 + $0x130] sm:$0xff]
                %1097 = vst [vmem:[%s1019 + $0x720] sm:$0xff] %v1096
                %v1098 = vld [vmem:[%s1018 + $0x138] sm:$0xff]
                %1099 = vst [vmem:[%s1019 + $0x728] sm:$0xff] %v1098
                %v1100 = vld [vmem:[%s1018 + $0x140] sm:$0xff]
                %1101 = vst [vmem:[%s1019 + $0x780] sm:$0xff] %v1100
                %v1102 = vld [vmem:[%s1018 + $0x148] sm:$0xff]
                %1103 = vst [vmem:[%s1019 + $0x788] sm:$0xff] %v1102
                %v1104 = vld [vmem:[%s1018 + $0x150] sm:$0xff]
                %1105 = vst [vmem:[%s1019 + $0x7e0] sm:$0xff] %v1104
                %v1106 = vld [vmem:[%s1018 + $0x158] sm:$0xff]
                %1107 = vst [vmem:[%s1019 + $0x7e8] sm:$0xff] %v1106
                %v1108 = vld [vmem:[%s1018 + $0x160] sm:$0xff]
                %1109 = vst [vmem:[%s1019 + $0x840] sm:$0xff] %v1108
                %v1110 = vld [vmem:[%s1018 + $0x168] sm:$0xff]
                %1111 = vst [vmem:[%s1019 + $0x848] sm:$0xff] %v1110
                %v1112 = vld [vmem:[%s1018 + $0x170] sm:$0xff]
                %1113 = vst [vmem:[%s1019 + $0x8a0] sm:$0xff] %v1112
                %v1114 = vld [vmem:[%s1018 + $0x178] sm:$0xff]
                %1115 = vst [vmem:[%s1019 + $0x8a8] sm:$0xff] %v1114
                %v1116 = vld [vmem:[%s1018 + $0x180] sm:$0xff]
                %1117 = vst [vmem:[%s1019 + $0x900] sm:$0xff] %v1116
                %v1118 = vld [vmem:[%s1018 + $0x188] sm:$0xff]
                %1119 = vst [vmem:[%s1019 + $0x908] sm:$0xff] %v1118
                %v1120 = vld [vmem:[%s1018 + $0x190] sm:$0xff]
                %1121 = vst [vmem:[%s1019 + $0x960] sm:$0xff] %v1120
                %v1122 = vld [vmem:[%s1018 + $0x198] sm:$0xff]
                %1123 = vst [vmem:[%s1019 + $0x968] sm:$0xff] %v1122
                %v1124 = vld [vmem:[%s1018 + $0x1a0] sm:$0xff]
                %1125 = vst [vmem:[%s1019 + $0x9c0] sm:$0xff] %v1124
                %v1126 = vld [vmem:[%s1018 + $0x1a8] sm:$0xff]
                %1127 = vst [vmem:[%s1019 + $0x9c8] sm:$0xff] %v1126
                %v1128 = vld [vmem:[%s1018 + $0x1b0] sm:$0xff]
                %1129 = vst [vmem:[%s1019 + $0xa20] sm:$0xff] %v1128
                %v1130 = vld [vmem:[%s1018 + $0x1b8] sm:$0xff]
                %1131 = vst [vmem:[%s1019 + $0xa28] sm:$0xff] %v1130
                %v1132 = vld [vmem:[%s1018 + $0x1c0] sm:$0xff]
                %1133 = vst [vmem:[%s1019 + $0xa80] sm:$0xff] %v1132
                %v1134 = vld [vmem:[%s1018 + $0x1c8] sm:$0xff]
                %1135 = vst [vmem:[%s1019 + $0xa88] sm:$0xff] %v1134
                %v1136 = vld [vmem:[%s1018 + $0x1d0] sm:$0xff]
                %1137 = vst [vmem:[%s1019 + $0xae0] sm:$0xff] %v1136
                %v1138 = vld [vmem:[%s1018 + $0x1d8] sm:$0xff]
                %1139 = vst [vmem:[%s1019 + $0xae8] sm:$0xff] %v1138
                %v1140 = vld [vmem:[%s1018 + $0x1e0] sm:$0xff]
                %1141 = vst [vmem:[%s1019 + $0xb40] sm:$0xff] %v1140
                %v1142 = vld [vmem:[%s1018 + $0x1e8] sm:$0xff]
                %1143 = vst [vmem:[%s1019 + $0xb48] sm:$0xff] %v1142
                %v1144 = vld [vmem:[%s1018 + $0x1f0] sm:$0xff]
                %1145 = vst [vmem:[%s1019 + $0xba0] sm:$0xff] %v1144
                %v1146 = vld [vmem:[%s1018 + $0x1f8] sm:$0xff]
                %1147 = vst [vmem:[%s1019 + $0xba8] sm:$0xff] %v1146
              $region76: #{cosine_attention.3} parent=70 // loop_footer
                %s1017 = sadd.s32 1, %s1013
              $region77: #{cosine_attention.3} parent=70 // loop_footer_branch
                %1012 = sbr.rel target = $region73
              $region78: #{cosine_attention.3} parent=70 // loop_exit
                _
            $region71: #{cosine_attention.3} parent=66 // pred_fallthru
              _
            // Predicated region
            $region79: #{cosine_attention.3} parent=66 // pred_check
              _
            $region80: #{cosine_attention.3} parent=66 // pred_check_branch
              %1149 = sbr.rel target = $region82
            $region81: #{cosine_attention.3} parent=66 // pred_region
              _
            $region82: #{cosine_attention.3} parent=66 // pred_fallthru
              _
          $region67: #{cosine_attention.3} parent=62 // pred_fallthru
            _
          %1150 = vnop
        $region63: #{cosine_attention.3} parent=46 // pred_fallthru
          _
      $region47: #{cosine_attention.3} parent=5 // pred_fallthru
        _
      %p1151 = scmp.le.s32.totalorder 2, %s8
      // Predicated region
      $region83: #{cosine_attention.3} parent=5 // pred_check
        %p1152 = pneg %p1151
      $region84: #{cosine_attention.3} parent=5 // pred_check_branch
        %1154 = sbr.rel (%p1152) target = $region86
      $region85: #{cosine_attention.3} parent=5 // pred_region
        %s1155 = ssub.s32 %s8, 2
        // Predicated region
        $region87: #{cosine_attention.3} parent=85 // pred_check
          %p1156 = pneg %p114
        $region88: #{cosine_attention.3} parent=85 // pred_check_branch
          %1158 = sbr.rel (%p1156) target = $region90
        $region89: #{cosine_attention.3} parent=85 // pred_region
          %s1159 = sand.u32 %s99, 1
          %s1160 = sand.u32 %s99, 1
          %s1161 = smul.addr %s1160, 512
          %s1162 = scalar_lea.vmem [#allocation4], %s1161
        $region90: #{cosine_attention.3} parent=85 // pred_fallthru
          _
      $region86: #{cosine_attention.3} parent=5 // pred_fallthru
        _
    $region6: #{cosine_attention.3} parent=1 // loop_footer
      %s12 = sadd.s32 1, %s8
    $region7: #{cosine_attention.3} parent=1 // loop_footer_branch
      %7 = sbr.rel target = $region3
    $region8: #{cosine_attention.3} parent=1 // loop_exit
      _

// kernel: cosine_attention.4
$region0: #{cosine_attention.4}
  #allocation0 [shape = 'u32[]', space=smem, size = 0x4, offset = 0x4, fixed_abs, tag = 'smem constant byte address 0x4 - core index']
  #allocation1 [shape = 'u32[144,128]{1,0:T(1,128)}', space=vmem, size = 0x12000, scoped, tag = 'internal scratch']
  #allocation2 [shape = 'f32[128,1]{1,0:T(8,128)}', space=vmem, size = 0x10000, scoped, tag = 'scratch operand']
  #allocation3 [shape = 'f32[128,1]{1,0:T(8,128)}', space=vmem, size = 0x10000, scoped, tag = 'scratch operand']
  #allocation4 [shape = 'f32[128,64]{1,0:T(8,128)}', space=vmem, size = 0x10000, scoped, tag = 'scratch operand']
  %s0 = inlined_call_operand.vmem [shape: f32[16,256,64], index: 0, kind: input, shape index: {}]
  %s1 = inlined_call_operand.vmem [shape: f32[16,256,64], index: 1, kind: input, shape index: {}]
  %s2 = inlined_call_operand.vmem [shape: f32[16,256,64], index: 2, kind: input, shape index: {}]
  %s3 = inlined_call_operand.vmem [shape: f32[16,256,64], index: 3, kind: output, shape index: {}]
  %s4 = sld [smem:[#allocation0]]
  $region57: #{cosine_attention.4} parent=0
    _
  %s6 = ssub.s32 1, %s4
  %s7 = scalar_select 0, %s6, %s4
  loop: start=0, step=1, limit=66
  $region2: #{cosine_attention.4} parent=0 // loop_pre_header
    _
  $region3: #{cosine_attention.4} parent=0 // loop_header
    %s9 = sphi 0, %s13
    %p10 = scmp.ge.s32.totalorder %s9, 66
    %s16 = sphi 0, %s35
    %s17 = sphi 0, %s31
    %s18 = sphi 0, %s27
    %s19 = sphi 0, %s16
    %s20 = sphi 0, %s17
    %s21 = sphi 0, %s18
    %s22 = sphi 0, %s19
    %s23 = sphi 0, %s20
    %s24 = sphi 0, %s21
    %s40 = sphi 0, %s42
    %s43 = sphi 0, %s40
    %s44 = sphi 0, %s43
    %s60 = sphi 0, %s44
    %s68 = sphi 0, %s70
    %s71 = sphi 0, %s68
    %s72 = sphi 0, %s71
    %s88 = sphi 0, %s72
    %s96 = sphi 0, %s98
    %s99 = sphi 0, %s96
    %s100 = sphi 0, %s99
    %s116 = sphi 0, %s100
    %s124 = sphi 0, %s126
    %s127 = sphi 0, %s124
    %s128 = sphi 0, %s127
    %s144 = sphi 0, %s128
  $region4: #{cosine_attention.4} parent=0 // loop_header_branch
    %12 = sbr.rel (%p10) target = $region8
  $region5: #{cosine_attention.4} parent=0 // loop_body
    %s14 = ssub.s32 %s9, 1
    %s15 = ssub.s32 %s9, 2
    %s25 = sadd.s32 1, %s18
    %p26 = scmp.ge.s32.totalorder %s25, 2
    %s27 = scalar_select %p26, 0, %s25
    %s28 = sadd.s32 1, %s17
    %s29 = scalar_select %p26, %s28, %s17
    %p30 = scmp.ge.s32.totalorder %s29, 2
    %s31 = scalar_select %p30, 0, %s29
    %s32 = sadd.s32 1, %s16
    %s33 = scalar_select %p30, %s32, %s16
    %p34 = scmp.ge.s32.totalorder %s33, 16
    %s35 = scalar_select %p34, 0, %s33
    %s36 = ssub.s32 %s16, %s35
    %s37 = ssub.s32 %s17, %s31
    %s38 = sor.u32 %s36, %s37
    %p39 = scmp.eq.s32.totalorder %s38, 0
    %s41 = sadd.s32 %s40, 1
    %s42 = scalar_select %p39, %s40, %s41
    %p45 = pneg %p39
    %p46 = scmp.eq.s32.totalorder %s9, 63
    %p47 = por %p45, %p46
    %p48 = scmp.ne.s32.totalorder %s40, %s43
    %p49 = scmp.eq.s32.totalorder %s9, 0
    %p50 = por %p48, %p49
    %p51 = scmp.ne.s32.totalorder %s40, %s43
    %p52 = scmp.eq.s32.totalorder %s14, 63
    %p53 = por %p51, %p52
    %p54 = scmp.ne.s32.totalorder %s43, %s44
    %p55 = scmp.eq.s32.totalorder %s14, 0
    %p56 = por %p54, %p55
    %p57 = scmp.ne.s32.totalorder %s43, %s44
    %p58 = scmp.eq.s32.totalorder %s15, 63
    %p59 = por %p57, %p58
    %p61 = scmp.ne.s32.totalorder %s44, %s60
    %p62 = scmp.eq.s32.totalorder %s15, 0
    %p63 = por %p61, %p62
    %s64 = ssub.s32 %s16, %s35
    %s65 = ssub.s32 %s18, %s27
    %s66 = sor.u32 %s64, %s65
    %p67 = scmp.eq.s32.totalorder %s66, 0
    %s69 = sadd.s32 %s68, 1
    %s70 = scalar_select %p67, %s68, %s69
    %p73 = pneg %p67
    %p74 = scmp.eq.s32.totalorder %s9, 63
    %p75 = por %p73, %p74
    %p76 = scmp.ne.s32.totalorder %s68, %s71
    %p77 = scmp.eq.s32.totalorder %s9, 0
    %p78 = por %p76, %p77
    %p79 = scmp.ne.s32.totalorder %s68, %s71
    %p80 = scmp.eq.s32.totalorder %s14, 63
    %p81 = por %p79, %p80
    %p82 = scmp.ne.s32.totalorder %s71, %s72
    %p83 = scmp.eq.s32.totalorder %s14, 0
    %p84 = por %p82, %p83
    %p85 = scmp.ne.s32.totalorder %s71, %s72
    %p86 = scmp.eq.s32.totalorder %s15, 63
    %p87 = por %p85, %p86
    %p89 = scmp.ne.s32.totalorder %s72, %s88
    %p90 = scmp.eq.s32.totalorder %s15, 0
    %p91 = por %p89, %p90
    %s92 = ssub.s32 %s16, %s35
    %s93 = ssub.s32 %s18, %s27
    %s94 = sor.u32 %s92, %s93
    %p95 = scmp.eq.s32.totalorder %s94, 0
    %s97 = sadd.s32 %s96, 1
    %s98 = scalar_select %p95, %s96, %s97
    %p101 = pneg %p95
    %p102 = scmp.eq.s32.totalorder %s9, 63
    %p103 = por %p101, %p102
    %p104 = scmp.ne.s32.totalorder %s96, %s99
    %p105 = scmp.eq.s32.totalorder %s9, 0
    %p106 = por %p104, %p105
    %p107 = scmp.ne.s32.totalorder %s96, %s99
    %p108 = scmp.eq.s32.totalorder %s14, 63
    %p109 = por %p107, %p108
    %p110 = scmp.ne.s32.totalorder %s99, %s100
    %p111 = scmp.eq.s32.totalorder %s14, 0
    %p112 = por %p110, %p111
    %p113 = scmp.ne.s32.totalorder %s99, %s100
    %p114 = scmp.eq.s32.totalorder %s15, 63
    %p115 = por %p113, %p114
    %p117 = scmp.ne.s32.totalorder %s100, %s116
    %p118 = scmp.eq.s32.totalorder %s15, 0
    %p119 = por %p117, %p118
    %s120 = ssub.s32 %s16, %s35
    %s121 = ssub.s32 %s17, %s31
    %s122 = sor.u32 %s120, %s121
    %p123 = scmp.eq.s32.totalorder %s122, 0
    %s125 = sadd.s32 %s124, 1
    %s126 = scalar_select %p123, %s124, %s125
    %p129 = pneg %p123
    %p130 = scmp.eq.s32.totalorder %s9, 63
    %p131 = por %p129, %p130
    %p132 = scmp.ne.s32.totalorder %s124, %s127
    %p133 = scmp.eq.s32.totalorder %s9, 0
    %p134 = por %p132, %p133
    %p135 = scmp.ne.s32.totalorder %s124, %s127
    %p136 = scmp.eq.s32.totalorder %s14, 63
    %p137 = por %p135, %p136
    %p138 = scmp.ne.s32.totalorder %s127, %s128
    %p139 = scmp.eq.s32.totalorder %s14, 0
    %p140 = por %p138, %p139
    %p141 = scmp.ne.s32.totalorder %s127, %s128
    %p142 = scmp.eq.s32.totalorder %s15, 63
    %p143 = por %p141, %p142
    %p145 = scmp.ne.s32.totalorder %s128, %s144
    %p146 = scmp.eq.s32.totalorder %s15, 0
    %p147 = por %p145, %p146
    %p148 = scmp.le.s32.totalorder 1, %s9
    %p149 = scmp.lt.s32.totalorder %s9, 65
    %p150 = pnand %p148, %p149
    %p151 = pneg %p150
    // Predicated region
    $region9: #{cosine_attention.4} parent=5 // pred_check
      _
    $region10: #{cosine_attention.4} parent=5 // pred_check_branch
      %153 = sbr.rel (%p150) target = $region12
    $region11: #{cosine_attention.4} parent=5 // pred_region
      %s154 = ssub.s32 %s9, 1
    $region12: #{cosine_attention.4} parent=5 // pred_fallthru
      _
    %p155 = scmp.lt.s32.totalorder %s9, 64
    // Predicated region
    $region13: #{cosine_attention.4} parent=5 // pred_check
      %p156 = pneg %p155
    $region14: #{cosine_attention.4} parent=5 // pred_check_branch
      %158 = sbr.rel (%p156) target = $region16
    $region15: #{cosine_attention.4} parent=5 // pred_region
      // Predicated region
      $region17: #{cosine_attention.4} parent=15 // pred_check
        %p159 = pneg %p50
      $region18: #{cosine_attention.4} parent=15 // pred_check_branch
        %161 = sbr.rel (%p159) target = $region20
      $region19: #{cosine_attention.4} parent=15 // pred_region
        %s162 = smul.u32 16, %s17
        %p163 = scmp.lt.s32.totalorder %s16, 15
        %s164 = scalar_select %p163, %s16, 15
        %p165 = scmp.lt.s32.totalorder %s162, 31
        %s166 = scalar_select %p165, %s162, 31
        %s167 = smul.addr %s164, 32
        %s168 = sadd.s32 %s166, %s167
        %s169 = smul.addr %s168, 8
        %s170 = scalar_lea.vmem %s0, %s169
        %s171 = smul.u32 16, %s17
      $region20: #{cosine_attention.4} parent=15 // pred_fallthru
        _
      // Predicated region
      $region21: #{cosine_attention.4} parent=15 // pred_check
        %p172 = pneg %p78
      $region22: #{cosine_attention.4} parent=15 // pred_check_branch
        %174 = sbr.rel (%p172) target = $region24
      $region23: #{cosine_attention.4} parent=15 // pred_region
        %s175 = smul.u32 16, %s18
        %p176 = scmp.lt.s32.totalorder %s16, 15
        %s177 = scalar_select %p176, %s16, 15
        %p178 = scmp.lt.s32.totalorder %s175, 31
        %s179 = scalar_select %p178, %s175, 31
        %s180 = smul.addr %s177, 32
        %s181 = sadd.s32 %s179, %s180
        %s182 = smul.addr %s181, 8
        %s183 = scalar_lea.vmem %s1, %s182
        %s184 = smul.u32 16, %s18
      $region24: #{cosine_attention.4} parent=15 // pred_fallthru
        _
      // Predicated region
      $region25: #{cosine_attention.4} parent=15 // pred_check
        %p185 = pneg %p106
      $region26: #{cosine_attention.4} parent=15 // pred_check_branch
        %187 = sbr.rel (%p185) target = $region28
      $region27: #{cosine_attention.4} parent=15 // pred_region
        %s188 = smul.u32 16, %s18
        %p189 = scmp.lt.s32.totalorder %s16, 15
        %s190 = scalar_select %p189, %s16, 15
        %p191 = scmp.lt.s32.totalorder %s188, 31
        %s192 = scalar_select %p191, %s188, 31
        %s193 = smul.addr %s190, 32
        %s194 = sadd.s32 %s192, %s193
        %s195 = smul.addr %s194, 8
        %s196 = scalar_lea.vmem %s2, %s195
        %s197 = smul.u32 16, %s18
      $region28: #{cosine_attention.4} parent=15 // pred_fallthru
        _
    $region16: #{cosine_attention.4} parent=5 // pred_fallthru
      _
    %p198 = scmp.le.s32.totalorder 1, %s9
    %p199 = scmp.lt.s32.totalorder %s9, 65
    %p200 = pnand %p198, %p199
    %p201 = pneg %p200
    // Predicated region
    $region29: #{cosine_attention.4} parent=5 // pred_check
      _
    $region30: #{cosine_attention.4} parent=5 // pred_check_branch
      %203 = sbr.rel (%p200) target = $region32
    $region31: #{cosine_attention.4} parent=5 // pred_region
      %s204 = ssub.s32 %s9, 1
      %s205 = smul.u32 16, %s20
      %p206 = scmp.lt.s32.totalorder %s19, 15
      %s207 = scalar_select %p206, %s19, 15
      %p208 = scmp.lt.s32.totalorder %s205, 31
      %s209 = scalar_select %p208, %s205, 31
      %s210 = smul.addr %s207, 32
      %s211 = sadd.s32 %s209, %s210
      %s212 = smul.addr %s211, 8
      %s213 = scalar_lea.vmem %s0, %s212
      %p214 = pneg %p56
      %p215 = pneg %p53
      %s216 = smul.u32 16, %s21
      %p217 = scmp.lt.s32.totalorder %s19, 15
      %s218 = scalar_select %p217, %s19, 15
      %p219 = scmp.lt.s32.totalorder %s216, 31
      %s220 = scalar_select %p219, %s216, 31
      %s221 = smul.addr %s218, 32
      %s222 = sadd.s32 %s220, %s221
      %s223 = smul.addr %s222, 8
      %s224 = scalar_lea.vmem %s1, %s223
      %p225 = pneg %p84
      %p226 = pneg %p81
      %s227 = smul.u32 16, %s21
      %p228 = scmp.lt.s32.totalorder %s19, 15
      %s229 = scalar_select %p228, %s19, 15
      %p230 = scmp.lt.s32.totalorder %s227, 31
      %s231 = scalar_select %p230, %s227, 31
      %s232 = smul.addr %s229, 32
      %s233 = sadd.s32 %s231, %s232
      %s234 = smul.addr %s233, 8
      %s235 = scalar_lea.vmem %s2, %s234
      %p236 = pneg %p112
      %p237 = pneg %p109
      %p238 = pneg %p140
      %p239 = pneg %p137
      %s240 = smul.u32 16, %s20
      %p241 = scmp.lt.s32.totalorder %s19, 15
      %s242 = scalar_select %p241, %s19, 15
      %p243 = scmp.lt.s32.totalorder %s240, 31
      %s244 = scalar_select %p243, %s240, 31
      %s245 = smul.addr %s242, 32
      %s246 = sadd.s32 %s244, %s245
      %s247 = smul.addr %s246, 8
      %s248 = scalar_lea.vmem %s3, %s247
      %s249 = smul.u32 16, %s20
      %p250 = scmp.lt.s32.totalorder %s19, 15
      %s251 = scalar_select %p250, %s19, 15
      %p252 = scmp.lt.s32.totalorder %s249, 31
      %s253 = scalar_select %p252, %s249, 31
      %s254 = smul.addr %s251, 32
      %s255 = sadd.s32 %s253, %s254
      %s256 = smul.addr %s255, 8
      %s257 = scalar_lea.vmem %s0, %s256
      %s258 = smul.u32 16, %s20
      %s259 = smul.u32 16, %s21
      %p260 = scmp.lt.s32.totalorder %s19, 15
      %s261 = scalar_select %p260, %s19, 15
      %p262 = scmp.lt.s32.totalorder %s259, 31
      %s263 = scalar_select %p262, %s259, 31
      %s264 = smul.addr %s261, 32
      %s265 = sadd.s32 %s263, %s264
      %s266 = smul.addr %s265, 8
      %s267 = scalar_lea.vmem %s1, %s266
      %s268 = smul.u32 16, %s21
      %s269 = smul.u32 16, %s21
      %p270 = scmp.lt.s32.totalorder %s19, 15
      %s271 = scalar_select %p270, %s19, 15
      %p272 = scmp.lt.s32.totalorder %s269, 31
      %s273 = scalar_select %p272, %s269, 31
      %s274 = smul.addr %s271, 32
      %s275 = sadd.s32 %s273, %s274
      %s276 = smul.addr %s275, 8
      %s277 = scalar_lea.vmem %s2, %s276
      %s278 = smul.u32 16, %s21
      %s279 = smul.u32 16, %s20
      %p280 = scmp.lt.s32.totalorder %s19, 15
      %s281 = scalar_select %p280, %s19, 15
      %p282 = scmp.lt.s32.totalorder %s279, 31
      %s283 = scalar_select %p282, %s279, 31
      %s284 = smul.addr %s281, 32
      %s285 = sadd.s32 %s283, %s284
      %s286 = smul.addr %s285, 8
      %s287 = scalar_lea.vmem %s3, %s286
      %s288 = smul.u32 16, %s20
      %p289 = scmp.eq.s32.totalorder %s21, 0
      // Predicated region
      $region33: #{cosine_attention.4} parent=31 // pred_check
        %p290 = pneg %p289
      $region34: #{cosine_attention.4} parent=31 // pred_check_branch
        %292 = sbr.rel (%p290) target = $region36
      $region35: #{cosine_attention.4} parent=31 // pred_region
        %vm293 = vcmask 7168
        %294 = vst.msk [vmem:[#allocation2] sm:$0xff] %vm293, -inf
        %295 = vst.msk [vmem:[#allocation2 + $0x8] sm:$0xff] %vm293, -inf
        %296 = vst.msk [vmem:[#allocation2 + $0x10] sm:$0xff] %vm293, -inf
        %297 = vst.msk [vmem:[#allocation2 + $0x18] sm:$0xff] %vm293, -inf
        %298 = vst.msk [vmem:[#allocation2 + $0x20] sm:$0xff] %vm293, -inf
        %299 = vst.msk [vmem:[#allocation2 + $0x28] sm:$0xff] %vm293, -inf
        %300 = vst.msk [vmem:[#allocation2 + $0x30] sm:$0xff] %vm293, -inf
        %301 = vst.msk [vmem:[#allocation2 + $0x38] sm:$0xff] %vm293, -inf
        %302 = vst.msk [vmem:[#allocation2 + $0x40] sm:$0xff] %vm293, -inf
        %303 = vst.msk [vmem:[#allocation2 + $0x48] sm:$0xff] %vm293, -inf
        %304 = vst.msk [vmem:[#allocation2 + $0x50] sm:$0xff] %vm293, -inf
        %305 = vst.msk [vmem:[#allocation2 + $0x58] sm:$0xff] %vm293, -inf
        %306 = vst.msk [vmem:[#allocation2 + $0x60] sm:$0xff] %vm293, -inf
        %307 = vst.msk [vmem:[#allocation2 + $0x68] sm:$0xff] %vm293, -inf
        %308 = vst.msk [vmem:[#allocation2 + $0x70] sm:$0xff] %vm293, -inf
        %309 = vst.msk [vmem:[#allocation2 + $0x78] sm:$0xff] %vm293, -inf
        %310 = vst.msk [vmem:[#allocation3] sm:$0xff] %vm293, 0.0
        %311 = vst.msk [vmem:[#allocation3 + $0x8] sm:$0xff] %vm293, 0.0
        %312 = vst.msk [vmem:[#allocation3 + $0x10] sm:$0xff] %vm293, 0.0
        %313 = vst.msk [vmem:[#allocation3 + $0x18] sm:$0xff] %vm293, 0.0
        %314 = vst.msk [vmem:[#allocation3 + $0x20] sm:$0xff] %vm293, 0.0
        %315 = vst.msk [vmem:[#allocation3 + $0x28] sm:$0xff] %vm293, 0.0
        %316 = vst.msk [vmem:[#allocation3 + $0x30] sm:$0xff] %vm293, 0.0
        %317 = vst.msk [vmem:[#allocation3 + $0x38] sm:$0xff] %vm293, 0.0
        %318 = vst.msk [vmem:[#allocation3 + $0x40] sm:$0xff] %vm293, 0.0
        %319 = vst.msk [vmem:[#allocation3 + $0x48] sm:$0xff] %vm293, 0.0
        %320 = vst.msk [vmem:[#allocation3 + $0x50] sm:$0xff] %vm293, 0.0
        %321 = vst.msk [vmem:[#allocation3 + $0x58] sm:$0xff] %vm293, 0.0
        %322 = vst.msk [vmem:[#allocation3 + $0x60] sm:$0xff] %vm293, 0.0
        %323 = vst.msk [vmem:[#allocation3 + $0x68] sm:$0xff] %vm293, 0.0
        %324 = vst.msk [vmem:[#allocation3 + $0x70] sm:$0xff] %vm293, 0.0
        %325 = vst.msk [vmem:[#allocation3 + $0x78] sm:$0xff] %vm293, 0.0
        %vm326 = vcmask 523264
        %327 = vst.msk [vmem:[#allocation4] sm:$0xff] %vm326, 0.0
        %328 = vst.msk [vmem:[#allocation4 + $0x8] sm:$0xff] %vm326, 0.0
        %329 = vst.msk [vmem:[#allocation4 + $0x10] sm:$0xff] %vm326, 0.0
        %330 = vst.msk [vmem:[#allocation4 + $0x18] sm:$0xff] %vm326, 0.0
        %331 = vst.msk [vmem:[#allocation4 + $0x20] sm:$0xff] %vm326, 0.0
        %332 = vst.msk [vmem:[#allocation4 + $0x28] sm:$0xff] %vm326, 0.0
        %333 = vst.msk [vmem:[#allocation4 + $0x30] sm:$0xff] %vm326, 0.0
        %334 = vst.msk [vmem:[#allocation4 + $0x38] sm:$0xff] %vm326, 0.0
        %335 = vst.msk [vmem:[#allocation4 + $0x40] sm:$0xff] %vm326, 0.0
        %336 = vst.msk [vmem:[#allocation4 + $0x48] sm:$0xff] %vm326, 0.0
        %337 = vst.msk [vmem:[#allocation4 + $0x50] sm:$0xff] %vm326, 0.0
        %338 = vst.msk [vmem:[#allocation4 + $0x58] sm:$0xff] %vm326, 0.0
        %339 = vst.msk [vmem:[#allocation4 + $0x60] sm:$0xff] %vm326, 0.0
        %340 = vst.msk [vmem:[#allocation4 + $0x68] sm:$0xff] %vm326, 0.0
        %341 = vst.msk [vmem:[#allocation4 + $0x70] sm:$0xff] %vm326, 0.0
        %342 = vst.msk [vmem:[#allocation4 + $0x78] sm:$0xff] %vm326, 0.0
      $region36: #{cosine_attention.4} parent=31 // pred_fallthru
        _
      %s343 = smul.u32 %s21, 128
      %s344 = sadd.s32 %s20, 1
      %s345 = smul.u32 %s344, 128
      %s346 = ssub.s32 %s345, 1
      %p347 = scmp.le.s32.totalorder %s343, %s346
      // Predicated region
      $region37: #{cosine_attention.4} parent=31 // pred_check
        %p348 = pneg %p347
      $region38: #{cosine_attention.4} parent=31 // pred_check_branch
        %350 = sbr.rel (%p348) target = $region40
      $region39: #{cosine_attention.4} parent=31 // pred_region
        %v351 = vld [vmem:[%s257] sm:$0xff]
        %v352 = vld [vmem:[%s257 + $0x8] sm:$0xff]
        %v353 = vld [vmem:[%s257 + $0x10] sm:$0xff]
        %v354 = vld [vmem:[%s257 + $0x18] sm:$0xff]
        %v355 = vld [vmem:[%s257 + $0x20] sm:$0xff]
        %v356 = vld [vmem:[%s257 + $0x28] sm:$0xff]
        %v357 = vld [vmem:[%s257 + $0x30] sm:$0xff]
        %v358 = vld [vmem:[%s257 + $0x38] sm:$0xff]
        %v359 = vld [vmem:[%s257 + $0x40] sm:$0xff]
        %v360 = vld [vmem:[%s257 + $0x48] sm:$0xff]
        %v361 = vld [vmem:[%s257 + $0x50] sm:$0xff]
        %v362 = vld [vmem:[%s257 + $0x58] sm:$0xff]
        %v363 = vld [vmem:[%s257 + $0x60] sm:$0xff]
        %v364 = vld [vmem:[%s257 + $0x68] sm:$0xff]
        %v365 = vld [vmem:[%s257 + $0x70] sm:$0xff]
        %v366 = vld [vmem:[%s257 + $0x78] sm:$0xff]
        %v367 = vld [vmem:[%s267] sm:$0xff]
        %v368 = vld [vmem:[%s267 + $0x8] sm:$0xff]
        %v369 = vld [vmem:[%s267 + $0x10] sm:$0xff]
        %v370 = vld [vmem:[%s267 + $0x18] sm:$0xff]
        %v371 = vld [vmem:[%s267 + $0x20] sm:$0xff]
        %v372 = vld [vmem:[%s267 + $0x28] sm:$0xff]
        %v373 = vld [vmem:[%s267 + $0x30] sm:$0xff]
        %v374 = vld [vmem:[%s267 + $0x38] sm:$0xff]
        %v375 = vld [vmem:[%s267 + $0x40] sm:$0xff]
        %v376 = vld [vmem:[%s267 + $0x48] sm:$0xff]
        %v377 = vld [vmem:[%s267 + $0x50] sm:$0xff]
        %v378 = vld [vmem:[%s267 + $0x58] sm:$0xff]
        %v379 = vld [vmem:[%s267 + $0x60] sm:$0xff]
        %v380 = vld [vmem:[%s267 + $0x68] sm:$0xff]
        %v381 = vld [vmem:[%s267 + $0x70] sm:$0xff]
        %v382 = vld [vmem:[%s267 + $0x78] sm:$0xff]
        %v383 = vmul.f32 %v351, %v351
        %v384 = vmul.f32 %v352, %v352
        %v385 = vmul.f32 %v353, %v353
        %v386 = vmul.f32 %v354, %v354
        %v387 = vmul.f32 %v355, %v355
        %v388 = vmul.f32 %v356, %v356
        %v389 = vmul.f32 %v357, %v357
        %v390 = vmul.f32 %v358, %v358
        %v391 = vmul.f32 %v359, %v359
        %v392 = vmul.f32 %v360, %v360
        %v393 = vmul.f32 %v361, %v361
        %v394 = vmul.f32 %v362, %v362
        %v395 = vmul.f32 %v363, %v363
        %v396 = vmul.f32 %v364, %v364
        %v397 = vmul.f32 %v365, %v365
        %v398 = vmul.f32 %v366, %v366
        %vm399 = vcmask 523264
        %v400 = vsel %vm399, %v383, 0.0
        %401 = vadd.xlane.f32.xlu0 %v400
        %v402 = vpop.xlane.xlu0 %401
        %v403 = vsel %vm399, %v384, 0.0
        %404 = vadd.xlane.f32.xlu0 %v403
        %v405 = vpop.xlane.xlu0 %404
        %v406 = vsel %vm399, %v385, 0.0
        %407 = vadd.xlane.f32.xlu0 %v406
        %v408 = vpop.xlane.xlu0 %407
        %v409 = vsel %vm399, %v386, 0.0
        %410 = vadd.xlane.f32.xlu0 %v409
        %v411 = vpop.xlane.xlu0 %410
        %v412 = vsel %vm399, %v387, 0.0
        %413 = vadd.xlane.f32.xlu0 %v412
        %v414 = vpop.xlane.xlu0 %413
        %v415 = vsel %vm399, %v388, 0.0
        %416 = vadd.xlane.f32.xlu0 %v415
        %v417 = vpop.xlane.xlu0 %416
        %v418 = vsel %vm399, %v389, 0.0
        %419 = vadd.xlane.f32.xlu0 %v418
        %v420 = vpop.xlane.xlu0 %419
        %v421 = vsel %vm399, %v390, 0.0
        %422 = vadd.xlane.f32.xlu0 %v421
        %v423 = vpop.xlane.xlu0 %422
        %v424 = vsel %vm399, %v391, 0.0
        %425 = vadd.xlane.f32.xlu0 %v424
        %v426 = vpop.xlane.xlu0 %425
        %v427 = vsel %vm399, %v392, 0.0
        %428 = vadd.xlane.f32.xlu0 %v427
        %v429 = vpop.xlane.xlu0 %428
        %v430 = vsel %vm399, %v393, 0.0
        %431 = vadd.xlane.f32.xlu0 %v430
        %v432 = vpop.xlane.xlu0 %431
        %v433 = vsel %vm399, %v394, 0.0
        %434 = vadd.xlane.f32.xlu0 %v433
        %v435 = vpop.xlane.xlu0 %434
        %v436 = vsel %vm399, %v395, 0.0
        %437 = vadd.xlane.f32.xlu0 %v436
        %v438 = vpop.xlane.xlu0 %437
        %v439 = vsel %vm399, %v396, 0.0
        %440 = vadd.xlane.f32.xlu0 %v439
        %v441 = vpop.xlane.xlu0 %440
        %v442 = vsel %vm399, %v397, 0.0
        %443 = vadd.xlane.f32.xlu0 %v442
        %v444 = vpop.xlane.xlu0 %443
        %v445 = vsel %vm399, %v398, 0.0
        %446 = vadd.xlane.f32.xlu0 %v445
        %v447 = vpop.xlane.xlu0 %446
        %v448 = vadd.f32 %v402, 1e-24
        %v449 = vadd.f32 %v405, 1e-24
        %v450 = vadd.f32 %v408, 1e-24
        %v451 = vadd.f32 %v411, 1e-24
        %v452 = vadd.f32 %v414, 1e-24
        %v453 = vadd.f32 %v417, 1e-24
        %v454 = vadd.f32 %v420, 1e-24
        %v455 = vadd.f32 %v423, 1e-24
        %v456 = vadd.f32 %v426, 1e-24
        %v457 = vadd.f32 %v429, 1e-24
        %v458 = vadd.f32 %v432, 1e-24
        %v459 = vadd.f32 %v435, 1e-24
        %v460 = vadd.f32 %v438, 1e-24
        %v461 = vadd.f32 %v441, 1e-24
        %v462 = vadd.f32 %v444, 1e-24
        %v463 = vadd.f32 %v447, 1e-24
        %v464 = vrsqrt.pop %v448
        %v465 = vrsqrt.pop %v449
        %v466 = vrsqrt.pop %v450
        %v467 = vrsqrt.pop %v451
        %v468 = vrsqrt.pop %v452
        %v469 = vrsqrt.pop %v453
        %v470 = vrsqrt.pop %v454
        %v471 = vrsqrt.pop %v455
        %v472 = vrsqrt.pop %v456
        %v473 = vrsqrt.pop %v457
        %v474 = vrsqrt.pop %v458
        %v475 = vrsqrt.pop %v459
        %v476 = vrsqrt.pop %v460
        %v477 = vrsqrt.pop %v461
        %v478 = vrsqrt.pop %v462
        %v479 = vrsqrt.pop %v463
        %v480 = vmul.f32 %v351, %v464
        %v481 = vmul.f32 %v352, %v465
        %v482 = vmul.f32 %v353, %v466
        %v483 = vmul.f32 %v354, %v467
        %v484 = vmul.f32 %v355, %v468
        %v485 = vmul.f32 %v356, %v469
        %v486 = vmul.f32 %v357, %v470
        %v487 = vmul.f32 %v358, %v471
        %v488 = vmul.f32 %v359, %v472
        %v489 = vmul.f32 %v360, %v473
        %v490 = vmul.f32 %v361, %v474
        %v491 = vmul.f32 %v362, %v475
        %v492 = vmul.f32 %v363, %v476
        %v493 = vmul.f32 %v364, %v477
        %v494 = vmul.f32 %v365, %v478
        %v495 = vmul.f32 %v366, %v479
        %v496 = vmul.f32 %v367, %v367
        %v497 = vmul.f32 %v368, %v368
        %v498 = vmul.f32 %v369, %v369
        %v499 = vmul.f32 %v370, %v370
        %v500 = vmul.f32 %v371, %v371
        %v501 = vmul.f32 %v372, %v372
        %v502 = vmul.f32 %v373, %v373
        %v503 = vmul.f32 %v374, %v374
        %v504 = vmul.f32 %v375, %v375
        %v505 = vmul.f32 %v376, %v376
        %v506 = vmul.f32 %v377, %v377
        %v507 = vmul.f32 %v378, %v378
        %v508 = vmul.f32 %v379, %v379
        %v509 = vmul.f32 %v380, %v380
        %v510 = vmul.f32 %v381, %v381
        %v511 = vmul.f32 %v382, %v382
        %v512 = vsel %vm399, %v496, 0.0
        %513 = vadd.xlane.f32.xlu0 %v512
        %v514 = vpop.xlane.xlu0 %513
        %v515 = vsel %vm399, %v497, 0.0
        %516 = vadd.xlane.f32.xlu0 %v515
        %v517 = vpop.xlane.xlu0 %516
        %v518 = vsel %vm399, %v498, 0.0
        %519 = vadd.xlane.f32.xlu0 %v518
        %v520 = vpop.xlane.xlu0 %519
        %v521 = vsel %vm399, %v499, 0.0
        %522 = vadd.xlane.f32.xlu0 %v521
        %v523 = vpop.xlane.xlu0 %522
        %v524 = vsel %vm399, %v500, 0.0
        %525 = vadd.xlane.f32.xlu0 %v524
        %v526 = vpop.xlane.xlu0 %525
        %v527 = vsel %vm399, %v501, 0.0
        %528 = vadd.xlane.f32.xlu0 %v527
        %v529 = vpop.xlane.xlu0 %528
        %v530 = vsel %vm399, %v502, 0.0
        %531 = vadd.xlane.f32.xlu0 %v530
        %v532 = vpop.xlane.xlu0 %531
        %v533 = vsel %vm399, %v503, 0.0
        %534 = vadd.xlane.f32.xlu0 %v533
        %v535 = vpop.xlane.xlu0 %534
        %v536 = vsel %vm399, %v504, 0.0
        %537 = vadd.xlane.f32.xlu0 %v536
        %v538 = vpop.xlane.xlu0 %537
        %v539 = vsel %vm399, %v505, 0.0
        %540 = vadd.xlane.f32.xlu0 %v539
        %v541 = vpop.xlane.xlu0 %540
        %v542 = vsel %vm399, %v506, 0.0
        %543 = vadd.xlane.f32.xlu0 %v542
        %v544 = vpop.xlane.xlu0 %543
        %v545 = vsel %vm399, %v507, 0.0
        %546 = vadd.xlane.f32.xlu0 %v545
        %v547 = vpop.xlane.xlu0 %546
        %v548 = vsel %vm399, %v508, 0.0
        %549 = vadd.xlane.f32.xlu0 %v548
        %v550 = vpop.xlane.xlu0 %549
        %v551 = vsel %vm399, %v509, 0.0
        %552 = vadd.xlane.f32.xlu0 %v551
        %v553 = vpop.xlane.xlu0 %552
        %v554 = vsel %vm399, %v510, 0.0
        %555 = vadd.xlane.f32.xlu0 %v554
        %v556 = vpop.xlane.xlu0 %555
        %v557 = vsel %vm399, %v511, 0.0
        %558 = vadd.xlane.f32.xlu0 %v557
        %v559 = vpop.xlane.xlu0 %558
        %v560 = vadd.f32 %v514, 1e-24
        %v561 = vadd.f32 %v517, 1e-24
        %v562 = vadd.f32 %v520, 1e-24
        %v563 = vadd.f32 %v523, 1e-24
        %v564 = vadd.f32 %v526, 1e-24
        %v565 = vadd.f32 %v529, 1e-24
        %v566 = vadd.f32 %v532, 1e-24
        %v567 = vadd.f32 %v535, 1e-24
        %v568 = vadd.f32 %v538, 1e-24
        %v569 = vadd.f32 %v541, 1e-24
        %v570 = vadd.f32 %v544, 1e-24
        %v571 = vadd.f32 %v547, 1e-24
        %v572 = vadd.f32 %v550, 1e-24
        %v573 = vadd.f32 %v553, 1e-24
        %v574 = vadd.f32 %v556, 1e-24
        %v575 = vadd.f32 %v559, 1e-24
        %v576 = vrsqrt.pop %v560
        %v577 = vrsqrt.pop %v561
        %v578 = vrsqrt.pop %v562
        %v579 = vrsqrt.pop %v563
        %v580 = vrsqrt.pop %v564
        %v581 = vrsqrt.pop %v565
        %v582 = vrsqrt.pop %v566
        %v583 = vrsqrt.pop %v567
        %v584 = vrsqrt.pop %v568
        %v585 = vrsqrt.pop %v569
        %v586 = vrsqrt.pop %v570
        %v587 = vrsqrt.pop %v571
        %v588 = vrsqrt.pop %v572
        %v589 = vrsqrt.pop %v573
        %v590 = vrsqrt.pop %v574
        %v591 = vrsqrt.pop %v575
        %v592 = vmul.f32 %v367, %v576
        %v593 = vmul.f32 %v368, %v577
        %v594 = vmul.f32 %v369, %v578
        %v595 = vmul.f32 %v370, %v579
        %v596 = vmul.f32 %v371, %v580
        %v597 = vmul.f32 %v372, %v581
        %v598 = vmul.f32 %v373, %v582
        %v599 = vmul.f32 %v374, %v583
        %v600 = vmul.f32 %v375, %v584
        %v601 = vmul.f32 %v376, %v585
        %v602 = vmul.f32 %v377, %v586
        %v603 = vmul.f32 %v378, %v587
        %v604 = vmul.f32 %v379, %v588
        %v605 = vmul.f32 %v380, %v589
        %v606 = vmul.f32 %v381, %v590
        %v607 = vmul.f32 %v382, %v591
        %v609 = vsel %vm399, %v480, 0
        %v612 = vsel %vm399, %v481, 0
        %v615 = vsel %vm399, %v482, 0
        %v618 = vsel %vm399, %v483, 0
        %v621 = vsel %vm399, %v484, 0
        %v624 = vsel %vm399, %v485, 0
        %v627 = vsel %vm399, %v486, 0
        %v630 = vsel %vm399, %v487, 0
        %v633 = vsel %vm399, %v488, 0
        %v636 = vsel %vm399, %v489, 0
        %v639 = vsel %vm399, %v490, 0
        %v642 = vsel %vm399, %v491, 0
        %v645 = vsel %vm399, %v492, 0
        %v648 = vsel %vm399, %v493, 0
        %v651 = vsel %vm399, %v494, 0
        %v654 = vsel %vm399, %v495, 0
        %v657 = vsel %vm399, %v592, 0
        %v660 = vsel %vm399, %v593, 0
        %v663 = vsel %vm399, %v594, 0
        %v666 = vsel %vm399, %v595, 0
        %v669 = vsel %vm399, %v596, 0
        %v672 = vsel %vm399, %v597, 0
        %v675 = vsel %vm399, %v598, 0
        %v678 = vsel %vm399, %v599, 0
        %v681 = vsel %vm399, %v600, 0
        %v684 = vsel %vm399, %v601, 0
        %v687 = vsel %vm399, %v602, 0
        %v690 = vsel %vm399, %v603, 0
        %v693 = vsel %vm399, %v604, 0
        %v696 = vsel %vm399, %v605, 0
        %v699 = vsel %vm399, %v606, 0
        %v702 = vsel %vm399, %v607, 0
        %704 = vmatprep.subr.mxu0 0.0
        %705 = vmatpush1.xpose.msra.mxu0 %v702
        %706 = vmatprep.subr.mxu0 0.0
        %707 = vmatpush1.xpose.msra.mxu0 %v699
        %708 = vmatprep.subr.mxu0 0.0
        %709 = vmatpush1.xpose.msra.mxu0 %v696
        %710 = vmatprep.subr.mxu0 0.0
        %711 = vmatpush1.xpose.msra.mxu0 %v693
        %712 = vmatprep.subr.mxu0 0.0
        %713 = vmatpush1.xpose.msra.mxu0 %v690
        %714 = vmatprep.subr.mxu0 0.0
        %715 = vmatpush1.xpose.msra.mxu0 %v687
        %716 = vmatprep.subr.mxu0 0.0
        %717 = vmatpush1.xpose.msra.mxu0 %v684
        %718 = vmatprep.subr.mxu0 0.0
        %719 = vmatpush1.xpose.msra.mxu0 %v681
        %720 = vmatprep.subr.mxu0 0.0
        %721 = vmatpush1.xpose.msra.mxu0 %v678
        %722 = vmatprep.subr.mxu0 0.0
        %723 = vmatpush1.xpose.msra.mxu0 %v675
        %724 = vmatprep.subr.mxu0 0.0
        %725 = vmatpush1.xpose.msra.mxu0 %v672
        %726 = vmatprep.subr.mxu0 0.0
        %727 = vmatpush1.xpose.msra.mxu0 %v669
        %728 = vmatprep.subr.mxu0 0.0
        %729 = vmatpush1.xpose.msra.mxu0 %v666
        %730 = vmatprep.subr.mxu0 0.0
        %731 = vmatpush1.xpose.msra.mxu0 %v663
        %732 = vmatprep.subr.mxu0 0.0
        %733 = vmatpush1.xpose.msra.mxu0 %v660
        %734 = vmatprep.subr.mxu0 0.0
        %735 = vmatpush1.xpose.msra.mxu0 %v657
        %736 = vmatprep.subr.mxu0 0.0
        %737 = vmatpush2.xpose.msra.mxu0 0.0
        %738 = vmatprep.subr.mxu0 0.0
        %739 = vmatpush2.xpose.msra.mxu0 0.0
        %740 = vmatprep.subr.mxu0 0.0
        %741 = vmatpush2.xpose.msra.mxu0 0.0
        %742 = vmatprep.subr.mxu0 0.0
        %743 = vmatpush2.xpose.msra.mxu0 0.0
        %744 = vmatprep.subr.mxu0 0.0
        %745 = vmatpush2.xpose.msra.mxu0 0.0
        %746 = vmatprep.subr.mxu0 0.0
        %747 = vmatpush2.xpose.msra.mxu0 0.0
        %748 = vmatprep.subr.mxu0 0.0
        %749 = vmatpush2.xpose.msra.mxu0 0.0
        %750 = vmatprep.subr.mxu0 0.0
        %751 = vmatpush2.xpose.msra.mxu0 0.0
        %752 = vmatprep.subr.mxu0 0.0
        %753 = vmatpush2.xpose.msra.mxu0 0.0
        %754 = vmatprep.subr.mxu0 0.0
        %755 = vmatpush2.xpose.msra.mxu0 0.0
        %756 = vmatprep.subr.mxu0 0.0
        %757 = vmatpush2.xpose.msra.mxu0 0.0
        %758 = vmatprep.subr.mxu0 0.0
        %759 = vmatpush2.xpose.msra.mxu0 0.0
        %760 = vmatprep.subr.mxu0 0.0
        %761 = vmatpush2.xpose.msra.mxu0 0.0
        %762 = vmatprep.subr.mxu0 0.0
        %763 = vmatpush2.xpose.msra.mxu0 0.0
        %764 = vmatprep.subr.mxu0 0.0
        %765 = vmatpush2.xpose.msra.mxu0 0.0
        %766 = vmatprep.subr.mxu0 0.0
        %767 = vmatpush2.xpose.msra.mxu0 0.0
        %768 = vmatprep.mubr.f32.mxu0 0.0
        %769 = vmatmul.mubr.f32.gmra.mxu0 %v609
        %v770 = vpop.f32.mrf.mxu0
        %v771 = vadd.f32 0.0, %v770
        %v772 = vpop.f32.mrf.mxu0
        %773 = vmatprep.mubr.f32.mxu0 0.0
        %774 = vmatmul.mubr.f32.gmra.mxu0 %v612
        %v775 = vpop.f32.mrf.mxu0
        %v776 = vadd.f32 0.0, %v775
        %v777 = vpop.f32.mrf.mxu0
        %778 = vmatprep.mubr.f32.mxu0 0.0
        %779 = vmatmul.mubr.f32.gmra.mxu0 %v615
        %v780 = vpop.f32.mrf.mxu0
        %v781 = vadd.f32 0.0, %v780
        %v782 = vpop.f32.mrf.mxu0
        %783 = vmatprep.mubr.f32.mxu0 0.0
        %784 = vmatmul.mubr.f32.gmra.mxu0 %v618
        %v785 = vpop.f32.mrf.mxu0
        %v786 = vadd.f32 0.0, %v785
        %v787 = vpop.f32.mrf.mxu0
        %788 = vmatprep.mubr.f32.mxu0 0.0
        %789 = vmatmul.mubr.f32.gmra.mxu0 %v621
        %v790 = vpop.f32.mrf.mxu0
        %v791 = vadd.f32 0.0, %v790
        %v792 = vpop.f32.mrf.mxu0
        %793 = vmatprep.mubr.f32.mxu0 0.0
        %794 = vmatmul.mubr.f32.gmra.mxu0 %v624
        %v795 = vpop.f32.mrf.mxu0
        %v796 = vadd.f32 0.0, %v795
        %v797 = vpop.f32.mrf.mxu0
        %798 = vmatprep.mubr.f32.mxu0 0.0
        %799 = vmatmul.mubr.f32.gmra.mxu0 %v627
        %v800 = vpop.f32.mrf.mxu0
        %v801 = vadd.f32 0.0, %v800
        %v802 = vpop.f32.mrf.mxu0
        %803 = vmatprep.mubr.f32.mxu0 0.0
        %804 = vmatmul.mubr.f32.gmra.mxu0 %v630
        %v805 = vpop.f32.mrf.mxu0
        %v806 = vadd.f32 0.0, %v805
        %v807 = vpop.f32.mrf.mxu0
        %808 = vmatprep.mubr.f32.mxu0 0.0
        %809 = vmatmul.mubr.f32.gmra.mxu0 %v633
        %v810 = vpop.f32.mrf.mxu0
        %v811 = vadd.f32 0.0, %v810
        %v812 = vpop.f32.mrf.mxu0
        %813 = vmatprep.mubr.f32.mxu0 0.0
        %814 = vmatmul.mubr.f32.gmra.mxu0 %v636
        %v815 = vpop.f32.mrf.mxu0
        %v816 = vadd.f32 0.0, %v815
        %v817 = vpop.f32.mrf.mxu0
        %818 = vmatprep.mubr.f32.mxu0 0.0
        %819 = vmatmul.mubr.f32.gmra.mxu0 %v639
        %v820 = vpop.f32.mrf.mxu0
        %v821 = vadd.f32 0.0, %v820
        %v822 = vpop.f32.mrf.mxu0
        %823 = vmatprep.mubr.f32.mxu0 0.0
        %824 = vmatmul.mubr.f32.gmra.mxu0 %v642
        %v825 = vpop.f32.mrf.mxu0
        %v826 = vadd.f32 0.0, %v825
        %v827 = vpop.f32.mrf.mxu0
        %828 = vmatprep.mubr.f32.mxu0 0.0
        %829 = vmatmul.mubr.f32.gmra.mxu0 %v645
        %v830 = vpop.f32.mrf.mxu0
        %v831 = vadd.f32 0.0, %v830
        %v832 = vpop.f32.mrf.mxu0
        %833 = vmatprep.mubr.f32.mxu0 0.0
        %834 = vmatmul.mubr.f32.gmra.mxu0 %v648
        %v835 = vpop.f32.mrf.mxu0
        %v836 = vadd.f32 0.0, %v835
        %v837 = vpop.f32.mrf.mxu0
        %838 = vmatprep.mubr.f32.mxu0 0.0
        %839 = vmatmul.mubr.f32.gmra.mxu0 %v651
        %v840 = vpop.f32.mrf.mxu0
        %v841 = vadd.f32 0.0, %v840
        %v842 = vpop.f32.mrf.mxu0
        %843 = vmatprep.mubr.f32.mxu0 0.0
        %844 = vmatmul.mubr.f32.gmra.mxu0 %v654
        %v845 = vpop.f32.mrf.mxu0
        %v846 = vadd.f32 0.0, %v845
        %v847 = vpop.f32.mrf.mxu0
        %848 = vdwg.mxu0
        %v849 = vmul.f32 %v771, 8.0
        %v850 = vmul.f32 %v776, 8.0
        %v851 = vmul.f32 %v781, 8.0
        %v852 = vmul.f32 %v786, 8.0
        %v853 = vmul.f32 %v791, 8.0
        %v854 = vmul.f32 %v796, 8.0
        %v855 = vmul.f32 %v801, 8.0
        %v856 = vmul.f32 %v806, 8.0
        %v857 = vmul.f32 %v811, 8.0
        %v858 = vmul.f32 %v816, 8.0
        %v859 = vmul.f32 %v821, 8.0
        %v860 = vmul.f32 %v826, 8.0
        %v861 = vmul.f32 %v831, 8.0
        %v862 = vmul.f32 %v836, 8.0
        %v863 = vmul.f32 %v841, 8.0
        %v864 = vmul.f32 %v846, 8.0
        %s865 = smul.u32 %s20, 128
        %v866 = vlaneseq
        %v867 = vshrl.u32 %v866, 7
        %v868 = vadd.s32 %v867, 8
        %v869 = vadd.s32 %v867, 16
        %v870 = vadd.s32 %v867, 24
        %v871 = vadd.s32 %v867, 32
        %v872 = vadd.s32 %v867, 40
        %v873 = vadd.s32 %v867, 48
        %v874 = vadd.s32 %v867, 56
        %v875 = vadd.s32 %v867, 64
        %v876 = vadd.s32 %v867, 72
        %v877 = vadd.s32 %v867, 80
        %v878 = vadd.s32 %v867, 88
        %v879 = vadd.s32 %v867, 96
        %v880 = vadd.s32 %v867, 104
        %v881 = vadd.s32 %v867, 112
        %v882 = vadd.s32 %v867, 120
        %v883 = vstv %s865
        %v884 = vadd.s32 %v883, %v867
        %v885 = vadd.s32 %v883, %v868
        %v886 = vadd.s32 %v883, %v869
        %v887 = vadd.s32 %v883, %v870
        %v888 = vadd.s32 %v883, %v871
        %v889 = vadd.s32 %v883, %v872
        %v890 = vadd.s32 %v883, %v873
        %v891 = vadd.s32 %v883, %v874
        %v892 = vadd.s32 %v883, %v875
        %v893 = vadd.s32 %v883, %v876
        %v894 = vadd.s32 %v883, %v877
        %v895 = vadd.s32 %v883, %v878
        %v896 = vadd.s32 %v883, %v879
        %v897 = vadd.s32 %v883, %v880
        %v898 = vadd.s32 %v883, %v881
        %v899 = vadd.s32 %v883, %v882
        %v900 = vlaneseq
        %v901 = vand.u32 %v900, 127
        %v902 = vstv %s343
        %v903 = vadd.s32 %v902, %v901
        %vm904 = vcmp.ge.s32.totalorder %v884, %v903
        %vm905 = vcmp.ge.s32.totalorder %v885, %v903
        %vm906 = vcmp.ge.s32.totalorder %v886, %v903
        %vm907 = vcmp.ge.s32.totalorder %v887, %v903
        %vm908 = vcmp.ge.s32.totalorder %v888, %v903
        %vm909 = vcmp.ge.s32.totalorder %v889, %v903
        %vm910 = vcmp.ge.s32.totalorder %v890, %v903
        %vm911 = vcmp.ge.s32.totalorder %v891, %v903
        %vm912 = vcmp.ge.s32.totalorder %v892, %v903
        %vm913 = vcmp.ge.s32.totalorder %v893, %v903
        %vm914 = vcmp.ge.s32.totalorder %v894, %v903
        %vm915 = vcmp.ge.s32.totalorder %v895, %v903
        %vm916 = vcmp.ge.s32.totalorder %v896, %v903
        %vm917 = vcmp.ge.s32.totalorder %v897, %v903
        %vm918 = vcmp.ge.s32.totalorder %v898, %v903
        %vm919 = vcmp.ge.s32.totalorder %v899, %v903
        %v920 = vsel %vm904, %v849, -1e+30
        %v921 = vsel %vm905, %v850, -1e+30
        %v922 = vsel %vm906, %v851, -1e+30
        %v923 = vsel %vm907, %v852, -1e+30
        %v924 = vsel %vm908, %v853, -1e+30
        %v925 = vsel %vm909, %v854, -1e+30
        %v926 = vsel %vm910, %v855, -1e+30
        %v927 = vsel %vm911, %v856, -1e+30
        %v928 = vsel %vm912, %v857, -1e+30
        %v929 = vsel %vm913, %v858, -1e+30
        %v930 = vsel %vm914, %v859, -1e+30
        %v931 = vsel %vm915, %v860, -1e+30
        %v932 = vsel %vm916, %v861, -1e+30
        %v933 = vsel %vm917, %v862, -1e+30
        %v934 = vsel %vm918, %v863, -1e+30
        %v935 = vsel %vm919, %v864, -1e+30
        %v936 = vld [vmem:[#allocation2] sm:$0xff]
        %v937 = vld [vmem:[#allocation2 + $0x8] sm:$0xff]
        %v938 = vld [vmem:[#allocation2 + $0x10] sm:$0xff]
        %v939 = vld [vmem:[#allocation2 + $0x18] sm:$0xff]
        %v940 = vld [vmem:[#allocation2 + $0x20] sm:$0xff]
        %v941 = vld [vmem:[#allocation2 + $0x28] sm:$0xff]
        %v942 = vld [vmem:[#allocation2 + $0x30] sm:$0xff]
        %v943 = vld [vmem:[#allocation2 + $0x38] sm:$0xff]
        %v944 = vld [vmem:[#allocation2 + $0x40] sm:$0xff]
        %v945 = vld [vmem:[#allocation2 + $0x48] sm:$0xff]
        %v946 = vld [vmem:[#allocation2 + $0x50] sm:$0xff]
        %v947 = vld [vmem:[#allocation2 + $0x58] sm:$0xff]
        %v948 = vld [vmem:[#allocation2 + $0x60] sm:$0xff]
        %v949 = vld [vmem:[#allocation2 + $0x68] sm:$0xff]
        %v950 = vld [vmem:[#allocation2 + $0x70] sm:$0xff]
        %v951 = vld [vmem:[#allocation2 + $0x78] sm:$0xff]
        %952 = vmax.xlane.f32.xlu0 %v920
        %v953 = vpop.xlane.xlu0 %952
        %954 = vmax.xlane.f32.xlu0 %v921
        %v955 = vpop.xlane.xlu0 %954
        %956 = vmax.xlane.f32.xlu0 %v922
        %v957 = vpop.xlane.xlu0 %956
        %958 = vmax.xlane.f32.xlu0 %v923
        %v959 = vpop.xlane.xlu0 %958
        %960 = vmax.xlane.f32.xlu0 %v924
        %v961 = vpop.xlane.xlu0 %960
        %962 = vmax.xlane.f32.xlu0 %v925
        %v963 = vpop.xlane.xlu0 %962
        %964 = vmax.xlane.f32.xlu0 %v926
        %v965 = vpop.xlane.xlu0 %964
        %966 = vmax.xlane.f32.xlu0 %v927
        %v967 = vpop.xlane.xlu0 %966
        %968 = vmax.xlane.f32.xlu0 %v928
        %v969 = vpop.xlane.xlu0 %968
        %970 = vmax.xlane.f32.xlu0 %v929
        %v971 = vpop.xlane.xlu0 %970
        %972 = vmax.xlane.f32.xlu0 %v930
        %v973 = vpop.xlane.xlu0 %972
        %974 = vmax.xlane.f32.xlu0 %v931
        %v975 = vpop.xlane.xlu0 %974
        %976 = vmax.xlane.f32.xlu0 %v932
        %v977 = vpop.xlane.xlu0 %976
        %978 = vmax.xlane.f32.xlu0 %v933
        %v979 = vpop.xlane.xlu0 %978
        %980 = vmax.xlane.f32.xlu0 %v934
        %v981 = vpop.xlane.xlu0 %980
        %982 = vmax.xlane.f32.xlu0 %v935
        %v983 = vpop.xlane.xlu0 %982
        %v984 = vmax.f32 %v936, %v953
        %v985 = vmax.f32 %v937, %v955
        %v986 = vmax.f32 %v938, %v957
        %v987 = vmax.f32 %v939, %v959
        %v988 = vmax.f32 %v940, %v961
        %v989 = vmax.f32 %v941, %v963
        %v990 = vmax.f32 %v942, %v965
        %v991 = vmax.f32 %v943, %v967
        %v992 = vmax.f32 %v944, %v969
        %v993 = vmax.f32 %v945, %v971
        %v994 = vmax.f32 %v946, %v973
        %v995 = vmax.f32 %v947, %v975
        %v996 = vmax.f32 %v948, %v977
        %v997 = vmax.f32 %v949, %v979
        %v998 = vmax.f32 %v950, %v981
        %v999 = vmax.f32 %v951, %v983
        %v1000 = vsub.f32 %v936, %v984
        %v1001 = vsub.f32 %v937, %v985
        %v1002 = vsub.f32 %v938, %v986
        %v1003 = vsub.f32 %v939, %v987
        %v1004 = vsub.f32 %v940, %v988
        %v1005 = vsub.f32 %v941, %v989
        %v1006 = vsub.f32 %v942, %v990
        %v1007 = vsub.f32 %v943, %v991
        %v1008 = vsub.f32 %v944, %v992
        %v1009 = vsub.f32 %v945, %v993
        %v1010 = vsub.f32 %v946, %v994
        %v1011 = vsub.f32 %v947, %v995
        %v1012 = vsub.f32 %v948, %v996
        %v1013 = vsub.f32 %v949, %v997
        %v1014 = vsub.f32 %v950, %v998
        %v1015 = vsub.f32 %v951, %v999
        %v1016 = vmul.f32 %v1000, 1.442695
        %v1017 = vpow.pop %v1016
        %v1018 = vmul.f32 %v1001, 1.442695
        %v1019 = vpow.pop %v1018
        %v1020 = vmul.f32 %v1002, 1.442695
        %v1021 = vpow.pop %v1020
        %v1022 = vmul.f32 %v1003, 1.442695
        %v1023 = vpow.pop %v1022
        %v1024 = vmul.f32 %v1004, 1.442695
        %v1025 = vpow.pop %v1024
        %v1026 = vmul.f32 %v1005, 1.442695
        %v1027 = vpow.pop %v1026
        %v1028 = vmul.f32 %v1006, 1.442695
        %v1029 = vpow.pop %v1028
        %v1030 = vmul.f32 %v1007, 1.442695
        %v1031 = vpow.pop %v1030
        %v1032 = vmul.f32 %v1008, 1.442695
        %v1033 = vpow.pop %v1032
        %v1034 = vmul.f32 %v1009, 1.442695
        %v1035 = vpow.pop %v1034
        %v1036 = vmul.f32 %v1010, 1.442695
        %v1037 = vpow.pop %v1036
        %v1038 = vmul.f32 %v1011, 1.442695
        %v1039 = vpow.pop %v1038
        %v1040 = vmul.f32 %v1012, 1.442695
        %v1041 = vpow.pop %v1040
        %v1042 = vmul.f32 %v1013, 1.442695
        %v1043 = vpow.pop %v1042
        %v1044 = vmul.f32 %v1014, 1.442695
        %v1045 = vpow.pop %v1044
        %v1046 = vmul.f32 %v1015, 1.442695
        %v1047 = vpow.pop %v1046
        %1049 = vset.pattern.permute.xlu0 0
        %1050 = vperm.xlu0 %1049, %v984
        %v1051 = vpop.permute.xlu0 %1050
        %1054 = vset.pattern.permute.xlu0 0
        %1055 = vperm.xlu0 %1054, %v985
        %v1056 = vpop.permute.xlu0 %1055
        %1059 = vset.pattern.permute.xlu0 0
        %1060 = vperm.xlu0 %1059, %v986
        %v1061 = vpop.permute.xlu0 %1060
        %1064 = vset.pattern.permute.xlu0 0
        %1065 = vperm.xlu0 %1064, %v987
        %v1066 = vpop.permute.xlu0 %1065
        %1069 = vset.pattern.permute.xlu0 0
        %1070 = vperm.xlu0 %1069, %v988
        %v1071 = vpop.permute.xlu0 %1070
        %1074 = vset.pattern.permute.xlu0 0
        %1075 = vperm.xlu0 %1074, %v989
        %v1076 = vpop.permute.xlu0 %1075
        %1079 = vset.pattern.permute.xlu0 0
        %1080 = vperm.xlu0 %1079, %v990
        %v1081 = vpop.permute.xlu0 %1080
        %1084 = vset.pattern.permute.xlu0 0
        %1085 = vperm.xlu0 %1084, %v991
        %v1086 = vpop.permute.xlu0 %1085
        %1089 = vset.pattern.permute.xlu0 0
        %1090 = vperm.xlu0 %1089, %v992
        %v1091 = vpop.permute.xlu0 %1090
        %1094 = vset.pattern.permute.xlu0 0
        %1095 = vperm.xlu0 %1094, %v993
        %v1096 = vpop.permute.xlu0 %1095
        %1099 = vset.pattern.permute.xlu0 0
        %1100 = vperm.xlu0 %1099, %v994
        %v1101 = vpop.permute.xlu0 %1100
        %1104 = vset.pattern.permute.xlu0 0
        %1105 = vperm.xlu0 %1104, %v995
        %v1106 = vpop.permute.xlu0 %1105
        %1109 = vset.pattern.permute.xlu0 0
        %1110 = vperm.xlu0 %1109, %v996
        %v1111 = vpop.permute.xlu0 %1110
        %1114 = vset.pattern.permute.xlu0 0
        %1115 = vperm.xlu0 %1114, %v997
        %v1116 = vpop.permute.xlu0 %1115
        %1119 = vset.pattern.permute.xlu0 0
        %1120 = vperm.xlu0 %1119, %v998
        %v1121 = vpop.permute.xlu0 %1120
        %1124 = vset.pattern.permute.xlu0 0
        %1125 = vperm.xlu0 %1124, %v999
        %v1126 = vpop.permute.xlu0 %1125
        %v1128 = vsub.f32 %v920, %v1051
        %v1129 = vsub.f32 %v921, %v1056
        %v1130 = vsub.f32 %v922, %v1061
        %v1131 = vsub.f32 %v923, %v1066
        %v1132 = vsub.f32 %v924, %v1071
        %v1133 = vsub.f32 %v925, %v1076
        %v1134 = vsub.f32 %v926, %v1081
        %v1135 = vsub.f32 %v927, %v1086
        %v1136 = vsub.f32 %v928, %v1091
        %v1137 = vsub.f32 %v929, %v1096
        %v1138 = vsub.f32 %v930, %v1101
        %v1139 = vsub.f32 %v931, %v1106
        %v1140 = vsub.f32 %v932, %v1111
        %v1141 = vsub.f32 %v933, %v1116
        %v1142 = vsub.f32 %v934, %v1121
        %v1143 = vsub.f32 %v935, %v1126
        %v1144 = vmul.f32 %v1128, 1.442695
        %v1145 = vpow.pop %v1144
        %v1146 = vmul.f32 %v1129, 1.442695
        %v1147 = vpow.pop %v1146
        %v1148 = vmul.f32 %v1130, 1.442695
        %v1149 = vpow.pop %v1148
        %v1150 = vmul.f32 %v1131, 1.442695
        %v1151 = vpow.pop %v1150
        %v1152 = vmul.f32 %v1132, 1.442695
        %v1153 = vpow.pop %v1152
        %v1154 = vmul.f32 %v1133, 1.442695
        %v1155 = vpow.pop %v1154
        %v1156 = vmul.f32 %v1134, 1.442695
        %v1157 = vpow.pop %v1156
        %v1158 = vmul.f32 %v1135, 1.442695
        %v1159 = vpow.pop %v1158
        %v1160 = vmul.f32 %v1136, 1.442695
        %v1161 = vpow.pop %v1160
        %v1162 = vmul.f32 %v1137, 1.442695
        %v1163 = vpow.pop %v1162
        %v1164 = vmul.f32 %v1138, 1.442695
        %v1165 = vpow.pop %v1164
        %v1166 = vmul.f32 %v1139, 1.442695
        %v1167 = vpow.pop %v1166
        %v1168 = vmul.f32 %v1140, 1.442695
        %v1169 = vpow.pop %v1168
        %v1170 = vmul.f32 %v1141, 1.442695
        %v1171 = vpow.pop %v1170
        %v1172 = vmul.f32 %v1142, 1.442695
        %v1173 = vpow.pop %v1172
        %v1174 = vmul.f32 %v1143, 1.442695
        %v1175 = vpow.pop %v1174
        %v1176 = vld [vmem:[#allocation3] sm:$0xff]
        %v1177 = vld [vmem:[#allocation3 + $0x8] sm:$0xff]
        %v1178 = vld [vmem:[#allocation3 + $0x10] sm:$0xff]
        %v1179 = vld [vmem:[#allocation3 + $0x18] sm:$0xff]
        %v1180 = vld [vmem:[#allocation3 + $0x20] sm:$0xff]
        %v1181 = vld [vmem:[#allocation3 + $0x28] sm:$0xff]
        %v1182 = vld [vmem:[#allocation3 + $0x30] sm:$0xff]
        %v1183 = vld [vmem:[#allocation3 + $0x38] sm:$0xff]
        %v1184 = vld [vmem:[#allocation3 + $0x40] sm:$0xff]
        %v1185 = vld [vmem:[#allocation3 + $0x48] sm:$0xff]
        %v1186 = vld [vmem:[#allocation3 + $0x50] sm:$0xff]
        %v1187 = vld [vmem:[#allocation3 + $0x58] sm:$0xff]
        %v1188 = vld [vmem:[#allocation3 + $0x60] sm:$0xff]
        %v1189 = vld [vmem:[#allocation3 + $0x68] sm:$0xff]
        %v1190 = vld [vmem:[#allocation3 + $0x70] sm:$0xff]
        %v1191 = vld [vmem:[#allocation3 + $0x78] sm:$0xff]
        %v1192 = vmul.f32 %v1017, %v1176
        %v1193 = vmul.f32 %v1019, %v1177
        %v1194 = vmul.f32 %v1021, %v1178
        %v1195 = vmul.f32 %v1023, %v1179
        %v1196 = vmul.f32 %v1025, %v1180
        %v1197 = vmul.f32 %v1027, %v1181
        %v1198 = vmul.f32 %v1029, %v1182
        %v1199 = vmul.f32 %v1031, %v1183
        %v1200 = vmul.f32 %v1033, %v1184
        %v1201 = vmul.f32 %v1035, %v1185
        %v1202 = vmul.f32 %v1037, %v1186
        %v1203 = vmul.f32 %v1039, %v1187
        %v1204 = vmul.f32 %v1041, %v1188
        %v1205 = vmul.f32 %v1043, %v1189
        %v1206 = vmul.f32 %v1045, %v1190
        %v1207 = vmul.f32 %v1047, %v1191
        %1208 = vadd.xlane.f32.xlu0 %v1145
        %v1209 = vpop.xlane.xlu0 %1208
        %1210 = vadd.xlane.f32.xlu0 %v1147
        %v1211 = vpop.xlane.xlu0 %1210
        %1212 = vadd.xlane.f32.xlu0 %v1149
        %v1213 = vpop.xlane.xlu0 %1212
        %1214 = vadd.xlane.f32.xlu0 %v1151
        %v1215 = vpop.xlane.xlu0 %1214
        %1216 = vadd.xlane.f32.xlu0 %v1153
        %v1217 = vpop.xlane.xlu0 %1216
        %1218 = vadd.xlane.f32.xlu0 %v1155
        %v1219 = vpop.xlane.xlu0 %1218
        %1220 = vadd.xlane.f32.xlu0 %v1157
        %v1221 = vpop.xlane.xlu0 %1220
        %1222 = vadd.xlane.f32.xlu0 %v1159
        %v1223 = vpop.xlane.xlu0 %1222
        %1224 = vadd.xlane.f32.xlu0 %v1161
        %v1225 = vpop.xlane.xlu0 %1224
        %1226 = vadd.xlane.f32.xlu0 %v1163
        %v1227 = vpop.xlane.xlu0 %1226
        %1228 = vadd.xlane.f32.xlu0 %v1165
        %v1229 = vpop.xlane.xlu0 %1228
        %1230 = vadd.xlane.f32.xlu0 %v1167
        %v1231 = vpop.xlane.xlu0 %1230
        %1232 = vadd.xlane.f32.xlu0 %v1169
        %v1233 = vpop.xlane.xlu0 %1232
        %1234 = vadd.xlane.f32.xlu0 %v1171
        %v1235 = vpop.xlane.xlu0 %1234
        %1236 = vadd.xlane.f32.xlu0 %v1173
        %v1237 = vpop.xlane.xlu0 %1236
        %1238 = vadd.xlane.f32.xlu0 %v1175
        %v1239 = vpop.xlane.xlu0 %1238
        %v1240 = vadd.f32 %v1192, %v1209
        %v1241 = vadd.f32 %v1193, %v1211
        %v1242 = vadd.f32 %v1194, %v1213
        %v1243 = vadd.f32 %v1195, %v1215
        %v1244 = vadd.f32 %v1196, %v1217
        %v1245 = vadd.f32 %v1197, %v1219
        %v1246 = vadd.f32 %v1198, %v1221
        %v1247 = vadd.f32 %v1199, %v1223
        %v1248 = vadd.f32 %v1200, %v1225
        %v1249 = vadd.f32 %v1201, %v1227
        %v1250 = vadd.f32 %v1202, %v1229
        %v1251 = vadd.f32 %v1203, %v1231
        %v1252 = vadd.f32 %v1204, %v1233
        %v1253 = vadd.f32 %v1205, %v1235
        %v1254 = vadd.f32 %v1206, %v1237
        %v1255 = vadd.f32 %v1207, %v1239
        %vm1256 = vcmask 7168
        %1257 = vst.msk [vmem:[#allocation3] sm:$0xff] %vm1256, %v1240
        %1258 = vst.msk [vmem:[#allocation3 + $0x8] sm:$0xff] %vm1256, %v1241
        %1259 = vst.msk [vmem:[#allocation3 + $0x10] sm:$0xff] %vm1256, %v1242
        %1260 = vst.msk [vmem:[#allocation3 + $0x18] sm:$0xff] %vm1256, %v1243
        %1261 = vst.msk [vmem:[#allocation3 + $0x20] sm:$0xff] %vm1256, %v1244
        %1262 = vst.msk [vmem:[#allocation3 + $0x28] sm:$0xff] %vm1256, %v1245
        %1263 = vst.msk [vmem:[#allocation3 + $0x30] sm:$0xff] %vm1256, %v1246
        %1264 = vst.msk [vmem:[#allocation3 + $0x38] sm:$0xff] %vm1256, %v1247
        %1265 = vst.msk [vmem:[#allocation3 + $0x40] sm:$0xff] %vm1256, %v1248
        %1266 = vst.msk [vmem:[#allocation3 + $0x48] sm:$0xff] %vm1256, %v1249
        %1267 = vst.msk [vmem:[#allocation3 + $0x50] sm:$0xff] %vm1256, %v1250
        %1268 = vst.msk [vmem:[#allocation3 + $0x58] sm:$0xff] %vm1256, %v1251
        %1269 = vst.msk [vmem:[#allocation3 + $0x60] sm:$0xff] %vm1256, %v1252
        %1270 = vst.msk [vmem:[#allocation3 + $0x68] sm:$0xff] %vm1256, %v1253
        %1271 = vst.msk [vmem:[#allocation3 + $0x70] sm:$0xff] %vm1256, %v1254
        %1272 = vst.msk [vmem:[#allocation3 + $0x78] sm:$0xff] %vm1256, %v1255
        %v1273 = vld [vmem:[#allocation4] sm:$0xff]
        %v1274 = vld [vmem:[#allocation4 + $0x8] sm:$0xff]
        %v1275 = vld [vmem:[#allocation4 + $0x10] sm:$0xff]
        %v1276 = vld [vmem:[#allocation4 + $0x18] sm:$0xff]
        %v1277 = vld [vmem:[#allocation4 + $0x20] sm:$0xff]
        %v1278 = vld [vmem:[#allocation4 + $0x28] sm:$0xff]
        %v1279 = vld [vmem:[#allocation4 + $0x30] sm:$0xff]
        %v1280 = vld [vmem:[#allocation4 + $0x38] sm:$0xff]
        %v1281 = vld [vmem:[#allocation4 + $0x40] sm:$0xff]
        %v1282 = vld [vmem:[#allocation4 + $0x48] sm:$0xff]
        %v1283 = vld [vmem:[#allocation4 + $0x50] sm:$0xff]
        %v1284 = vld [vmem:[#allocation4 + $0x58] sm:$0xff]
        %v1285 = vld [vmem:[#allocation4 + $0x60] sm:$0xff]
        %v1286 = vld [vmem:[#allocation4 + $0x68] sm:$0xff]
        %v1287 = vld [vmem:[#allocation4 + $0x70] sm:$0xff]
        %v1288 = vld [vmem:[#allocation4 + $0x78] sm:$0xff]
        %1290 = vset.pattern.permute.xlu0 0
        %1291 = vperm.xlu0 %1290, %v1017
        %v1292 = vpop.permute.xlu0 %1291
        %1295 = vset.pattern.permute.xlu0 0
        %1296 = vperm.xlu0 %1295, %v1019
        %v1297 = vpop.permute.xlu0 %1296
        %1300 = vset.pattern.permute.xlu0 0
        %1301 = vperm.xlu0 %1300, %v1021
        %v1302 = vpop.permute.xlu0 %1301
        %1305 = vset.pattern.permute.xlu0 0
        %1306 = vperm.xlu0 %1305, %v1023
        %v1307 = vpop.permute.xlu0 %1306
        %1310 = vset.pattern.permute.xlu0 0
        %1311 = vperm.xlu0 %1310, %v1025
        %v1312 = vpop.permute.xlu0 %1311
        %1315 = vset.pattern.permute.xlu0 0
        %1316 = vperm.xlu0 %1315, %v1027
        %v1317 = vpop.permute.xlu0 %1316
        %1320 = vset.pattern.permute.xlu0 0
        %1321 = vperm.xlu0 %1320, %v1029
        %v1322 = vpop.permute.xlu0 %1321
        %1325 = vset.pattern.permute.xlu0 0
        %1326 = vperm.xlu0 %1325, %v1031
        %v1327 = vpop.permute.xlu0 %1326
        %1330 = vset.pattern.permute.xlu0 0
        %1331 = vperm.xlu0 %1330, %v1033
        %v1332 = vpop.permute.xlu0 %1331
        %1335 = vset.pattern.permute.xlu0 0
        %1336 = vperm.xlu0 %1335, %v1035
        %v1337 = vpop.permute.xlu0 %1336
        %1340 = vset.pattern.permute.xlu0 0
        %1341 = vperm.xlu0 %1340, %v1037
        %v1342 = vpop.permute.xlu0 %1341
        %1345 = vset.pattern.permute.xlu0 0
        %1346 = vperm.xlu0 %1345, %v1039
        %v1347 = vpop.permute.xlu0 %1346
        %1350 = vset.pattern.permute.xlu0 0
        %1351 = vperm.xlu0 %1350, %v1041
        %v1352 = vpop.permute.xlu0 %1351
        %1355 = vset.pattern.permute.xlu0 0
        %1356 = vperm.xlu0 %1355, %v1043
        %v1357 = vpop.permute.xlu0 %1356
        %1360 = vset.pattern.permute.xlu0 0
        %1361 = vperm.xlu0 %1360, %v1045
        %v1362 = vpop.permute.xlu0 %1361
        %1365 = vset.pattern.permute.xlu0 0
        %1366 = vperm.xlu0 %1365, %v1047
        %v1367 = vpop.permute.xlu0 %1366
        %v1369 = vmul.f32 %v1292, %v1273
        %v1370 = vmul.f32 %v1297, %v1274
        %v1371 = vmul.f32 %v1302, %v1275
        %v1372 = vmul.f32 %v1307, %v1276
        %v1373 = vmul.f32 %v1312, %v1277
        %v1374 = vmul.f32 %v1317, %v1278
        %v1375 = vmul.f32 %v1322, %v1279
        %v1376 = vmul.f32 %v1327, %v1280
        %v1377 = vmul.f32 %v1332, %v1281
        %v1378 = vmul.f32 %v1337, %v1282
        %v1379 = vmul.f32 %v1342, %v1283
        %v1380 = vmul.f32 %v1347, %v1284
        %v1381 = vmul.f32 %v1352, %v1285
        %v1382 = vmul.f32 %v1357, %v1286
        %v1383 = vmul.f32 %v1362, %v1287
        %v1384 = vmul.f32 %v1367, %v1288
        %v1385 = vld [vmem:[%s277] sm:$0xff]
        %v1386 = vld [vmem:[%s277 + $0x8] sm:$0xff]
        %v1387 = vld [vmem:[%s277 + $0x10] sm:$0xff]
        %v1388 = vld [vmem:[%s277 + $0x18] sm:$0xff]
        %v1389 = vld [vmem:[%s277 + $0x20] sm:$0xff]
        %v1390 = vld [vmem:[%s277 + $0x28] sm:$0xff]
        %v1391 = vld [vmem:[%s277 + $0x30] sm:$0xff]
        %v1392 = vld [vmem:[%s277 + $0x38] sm:$0xff]
        %v1393 = vld [vmem:[%s277 + $0x40] sm:$0xff]
        %v1394 = vld [vmem:[%s277 + $0x48] sm:$0xff]
        %v1395 = vld [vmem:[%s277 + $0x50] sm:$0xff]
        %v1396 = vld [vmem:[%s277 + $0x58] sm:$0xff]
        %v1397 = vld [vmem:[%s277 + $0x60] sm:$0xff]
        %v1398 = vld [vmem:[%s277 + $0x68] sm:$0xff]
        %v1399 = vld [vmem:[%s277 + $0x70] sm:$0xff]
        %v1400 = vld [vmem:[%s277 + $0x78] sm:$0xff]
        %1401 = vmatprep.subr.mxu0 0.0
        %1402 = vmatpush1.msra.mxu0 %v1400
        %1403 = vmatprep.subr.mxu0 0.0
        %1404 = vmatpush1.msra.mxu0 %v1399
        %1405 = vmatprep.subr.mxu0 0.0
        %1406 = vmatpush1.msra.mxu0 %v1398
        %1407 = vmatprep.subr.mxu0 0.0
        %1408 = vmatpush1.msra.mxu0 %v1397
        %1409 = vmatprep.subr.mxu0 0.0
        %1410 = vmatpush1.msra.mxu0 %v1396
        %1411 = vmatprep.subr.mxu0 0.0
        %1412 = vmatpush1.msra.mxu0 %v1395
        %1413 = vmatprep.subr.mxu0 0.0
        %1414 = vmatpush1.msra.mxu0 %v1394
        %1415 = vmatprep.subr.mxu0 0.0
        %1416 = vmatpush1.msra.mxu0 %v1393
        %1417 = vmatprep.subr.mxu0 0.0
        %1418 = vmatpush1.msra.mxu0 %v1392
        %1419 = vmatprep.subr.mxu0 0.0
        %1420 = vmatpush1.msra.mxu0 %v1391
        %1421 = vmatprep.subr.mxu0 0.0
        %1422 = vmatpush1.msra.mxu0 %v1390
        %1423 = vmatprep.subr.mxu0 0.0
        %1424 = vmatpush1.msra.mxu0 %v1389
        %1425 = vmatprep.subr.mxu0 0.0
        %1426 = vmatpush1.msra.mxu0 %v1388
        %1427 = vmatprep.subr.mxu0 0.0
        %1428 = vmatpush1.msra.mxu0 %v1387
        %1429 = vmatprep.subr.mxu0 0.0
        %1430 = vmatpush1.msra.mxu0 %v1386
        %1431 = vmatprep.subr.mxu0 0.0
        %1432 = vmatpush1.msra.mxu0 %v1385
        %1433 = vmatprep.subr.mxu0 0.0
        %1434 = vmatpush2.msra.mxu0 0.0
        %1435 = vmatprep.subr.mxu0 0.0
        %1436 = vmatpush2.msra.mxu0 0.0
        %1437 = vmatprep.subr.mxu0 0.0
        %1438 = vmatpush2.msra.mxu0 0.0
        %1439 = vmatprep.subr.mxu0 0.0
        %1440 = vmatpush2.msra.mxu0 0.0
        %1441 = vmatprep.subr.mxu0 0.0
        %1442 = vmatpush2.msra.mxu0 0.0
        %1443 = vmatprep.subr.mxu0 0.0
        %1444 = vmatpush2.msra.mxu0 0.0
        %1445 = vmatprep.subr.mxu0 0.0
        %1446 = vmatpush2.msra.mxu0 0.0
        %1447 = vmatprep.subr.mxu0 0.0
        %1448 = vmatpush2.msra.mxu0 0.0
        %1449 = vmatprep.subr.mxu0 0.0
        %1450 = vmatpush2.msra.mxu0 0.0
        %1451 = vmatprep.subr.mxu0 0.0
        %1452 = vmatpush2.msra.mxu0 0.0
        %1453 = vmatprep.subr.mxu0 0.0
        %1454 = vmatpush2.msra.mxu0 0.0
        %1455 = vmatprep.subr.mxu0 0.0
        %1456 = vmatpush2.msra.mxu0 0.0
        %1457 = vmatprep.subr.mxu0 0.0
        %1458 = vmatpush2.msra.mxu0 0.0
        %1459 = vmatprep.subr.mxu0 0.0
        %1460 = vmatpush2.msra.mxu0 0.0
        %1461 = vmatprep.subr.mxu0 0.0
        %1462 = vmatpush2.msra.mxu0 0.0
        %1463 = vmatprep.subr.mxu0 0.0
        %1464 = vmatpush2.msra.mxu0 0.0
        %1465 = vmatprep.mubr.f32.mxu0 0.0
        %1466 = vmatmul.mubr.f32.gmra.mxu0 %v1145
        %v1467 = vpop.f32.mrf.mxu0
        %v1468 = vadd.f32 0.0, %v1467
        %v1469 = vpop.f32.mrf.mxu0
        %1470 = vmatprep.mubr.f32.mxu0 0.0
        %1471 = vmatmul.mubr.f32.gmra.mxu0 %v1147
        %v1472 = vpop.f32.mrf.mxu0
        %v1473 = vadd.f32 0.0, %v1472
        %v1474 = vpop.f32.mrf.mxu0
        %1475 = vmatprep.mubr.f32.mxu0 0.0
        %1476 = vmatmul.mubr.f32.gmra.mxu0 %v1149
        %v1477 = vpop.f32.mrf.mxu0
        %v1478 = vadd.f32 0.0, %v1477
        %v1479 = vpop.f32.mrf.mxu0
        %1480 = vmatprep.mubr.f32.mxu0 0.0
        %1481 = vmatmul.mubr.f32.gmra.mxu0 %v1151
        %v1482 = vpop.f32.mrf.mxu0
        %v1483 = vadd.f32 0.0, %v1482
        %v1484 = vpop.f32.mrf.mxu0
        %1485 = vmatprep.mubr.f32.mxu0 0.0
        %1486 = vmatmul.mubr.f32.gmra.mxu0 %v1153
        %v1487 = vpop.f32.mrf.mxu0
        %v1488 = vadd.f32 0.0, %v1487
        %v1489 = vpop.f32.mrf.mxu0
        %1490 = vmatprep.mubr.f32.mxu0 0.0
        %1491 = vmatmul.mubr.f32.gmra.mxu0 %v1155
        %v1492 = vpop.f32.mrf.mxu0
        %v1493 = vadd.f32 0.0, %v1492
        %v1494 = vpop.f32.mrf.mxu0
        %1495 = vmatprep.mubr.f32.mxu0 0.0
        %1496 = vmatmul.mubr.f32.gmra.mxu0 %v1157
        %v1497 = vpop.f32.mrf.mxu0
        %v1498 = vadd.f32 0.0, %v1497
        %v1499 = vpop.f32.mrf.mxu0
        %1500 = vmatprep.mubr.f32.mxu0 0.0
        %1501 = vmatmul.mubr.f32.gmra.mxu0 %v1159
        %v1502 = vpop.f32.mrf.mxu0
        %v1503 = vadd.f32 0.0, %v1502
        %v1504 = vpop.f32.mrf.mxu0
        %1505 = vmatprep.mubr.f32.mxu0 0.0
        %1506 = vmatmul.mubr.f32.gmra.mxu0 %v1161
        %v1507 = vpop.f32.mrf.mxu0
        %v1508 = vadd.f32 0.0, %v1507
        %v1509 = vpop.f32.mrf.mxu0
        %1510 = vmatprep.mubr.f32.mxu0 0.0
        %1511 = vmatmul.mubr.f32.gmra.mxu0 %v1163
        %v1512 = vpop.f32.mrf.mxu0
        %v1513 = vadd.f32 0.0, %v1512
        %v1514 = vpop.f32.mrf.mxu0
        %1515 = vmatprep.mubr.f32.mxu0 0.0
        %1516 = vmatmul.mubr.f32.gmra.mxu0 %v1165
        %v1517 = vpop.f32.mrf.mxu0
        %v1518 = vadd.f32 0.0, %v1517
        %v1519 = vpop.f32.mrf.mxu0
        %1520 = vmatprep.mubr.f32.mxu0 0.0
        %1521 = vmatmul.mubr.f32.gmra.mxu0 %v1167
        %v1522 = vpop.f32.mrf.mxu0
        %v1523 = vadd.f32 0.0, %v1522
        %v1524 = vpop.f32.mrf.mxu0
        %1525 = vmatprep.mubr.f32.mxu0 0.0
        %1526 = vmatmul.mubr.f32.gmra.mxu0 %v1169
        %v1527 = vpop.f32.mrf.mxu0
        %v1528 = vadd.f32 0.0, %v1527
        %v1529 = vpop.f32.mrf.mxu0
        %1530 = vmatprep.mubr.f32.mxu0 0.0
        %1531 = vmatmul.mubr.f32.gmra.mxu0 %v1171
        %v1532 = vpop.f32.mrf.mxu0
        %v1533 = vadd.f32 0.0, %v1532
        %v1534 = vpop.f32.mrf.mxu0
        %1535 = vmatprep.mubr.f32.mxu0 0.0
        %1536 = vmatmul.mubr.f32.gmra.mxu0 %v1173
        %v1537 = vpop.f32.mrf.mxu0
        %v1538 = vadd.f32 0.0, %v1537
        %v1539 = vpop.f32.mrf.mxu0
        %1540 = vmatprep.mubr.f32.mxu0 0.0
        %1541 = vmatmul.mubr.f32.gmra.mxu0 %v1175
        %v1542 = vpop.f32.mrf.mxu0
        %v1543 = vadd.f32 0.0, %v1542
        %v1544 = vpop.f32.mrf.mxu0
        %1545 = vdwg.mxu0
        %v1546 = vadd.f32 %v1369, %v1468
        %v1547 = vadd.f32 %v1370, %v1473
        %v1548 = vadd.f32 %v1371, %v1478
        %v1549 = vadd.f32 %v1372, %v1483
        %v1550 = vadd.f32 %v1373, %v1488
        %v1551 = vadd.f32 %v1374, %v1493
        %v1552 = vadd.f32 %v1375, %v1498
        %v1553 = vadd.f32 %v1376, %v1503
        %v1554 = vadd.f32 %v1377, %v1508
        %v1555 = vadd.f32 %v1378, %v1513
        %v1556 = vadd.f32 %v1379, %v1518
        %v1557 = vadd.f32 %v1380, %v1523
        %v1558 = vadd.f32 %v1381, %v1528
        %v1559 = vadd.f32 %v1382, %v1533
        %v1560 = vadd.f32 %v1383, %v1538
        %v1561 = vadd.f32 %v1384, %v1543
        %1562 = vst.msk [vmem:[#allocation4] sm:$0xff] %vm399, %v1546
        %1563 = vst.msk [vmem:[#allocation4 + $0x8] sm:$0xff] %vm399, %v1547
        %1564 = vst.msk [vmem:[#allocation4 + $0x10] sm:$0xff] %vm399, %v1548
        %1565 = vst.msk [vmem:[#allocation4 + $0x18] sm:$0xff] %vm399, %v1549
        %1566 = vst.msk [vmem:[#allocation4 + $0x20] sm:$0xff] %vm399, %v1550
        %1567 = vst.msk [vmem:[#allocation4 + $0x28] sm:$0xff] %vm399, %v1551
        %1568 = vst.msk [vmem:[#allocation4 + $0x30] sm:$0xff] %vm399, %v1552
        %1569 = vst.msk [vmem:[#allocation4 + $0x38] sm:$0xff] %vm399, %v1553
        %1570 = vst.msk [vmem:[#allocation4 + $0x40] sm:$0xff] %vm399, %v1554
        %1571 = vst.msk [vmem:[#allocation4 + $0x48] sm:$0xff] %vm399, %v1555
        %1572 = vst.msk [vmem:[#allocation4 + $0x50] sm:$0xff] %vm399, %v1556
        %1573 = vst.msk [vmem:[#allocation4 + $0x58] sm:$0xff] %vm399, %v1557
        %1574 = vst.msk [vmem:[#allocation4 + $0x60] sm:$0xff] %vm399, %v1558
        %1575 = vst.msk [vmem:[#allocation4 + $0x68] sm:$0xff] %vm399, %v1559
        %1576 = vst.msk [vmem:[#allocation4 + $0x70] sm:$0xff] %vm399, %v1560
        %1577 = vst.msk [vmem:[#allocation4 + $0x78] sm:$0xff] %vm399, %v1561
        %1578 = vst.msk [vmem:[#allocation2] sm:$0xff] %vm1256, %v984
        %1579 = vst.msk [vmem:[#allocation2 + $0x8] sm:$0xff] %vm1256, %v985
        %1580 = vst.msk [vmem:[#allocation2 + $0x10] sm:$0xff] %vm1256, %v986
        %1581 = vst.msk [vmem:[#allocation2 + $0x18] sm:$0xff] %vm1256, %v987
        %1582 = vst.msk [vmem:[#allocation2 + $0x20] sm:$0xff] %vm1256, %v988
        %1583 = vst.msk [vmem:[#allocation2 + $0x28] sm:$0xff] %vm1256, %v989
        %1584 = vst.msk [vmem:[#allocation2 + $0x30] sm:$0xff] %vm1256, %v990
        %1585 = vst.msk [vmem:[#allocation2 + $0x38] sm:$0xff] %vm1256, %v991
        %1586 = vst.msk [vmem:[#allocation2 + $0x40] sm:$0xff] %vm1256, %v992
        %1587 = vst.msk [vmem:[#allocation2 + $0x48] sm:$0xff] %vm1256, %v993
        %1588 = vst.msk [vmem:[#allocation2 + $0x50] sm:$0xff] %vm1256, %v994
        %1589 = vst.msk [vmem:[#allocation2 + $0x58] sm:$0xff] %vm1256, %v995
        %1590 = vst.msk [vmem:[#allocation2 + $0x60] sm:$0xff] %vm1256, %v996
        %1591 = vst.msk [vmem:[#allocation2 + $0x68] sm:$0xff] %vm1256, %v997
        %1592 = vst.msk [vmem:[#allocation2 + $0x70] sm:$0xff] %vm1256, %v998
        %1593 = vst.msk [vmem:[#allocation2 + $0x78] sm:$0xff] %vm1256, %v999
      $region40: #{cosine_attention.4} parent=31 // pred_fallthru
        _
      %p1594 = scmp.eq.s32.totalorder %s21, 1
      // Predicated region
      $region41: #{cosine_attention.4} parent=31 // pred_check
        %p1595 = pneg %p1594
      $region42: #{cosine_attention.4} parent=31 // pred_check_branch
        %1597 = sbr.rel (%p1595) target = $region44
      $region43: #{cosine_attention.4} parent=31 // pred_region
        %v1598 = vld [vmem:[#allocation4] sm:$0xff]
        %v1599 = vld [vmem:[#allocation4 + $0x8] sm:$0xff]
        %v1600 = vld [vmem:[#allocation4 + $0x10] sm:$0xff]
        %v1601 = vld [vmem:[#allocation4 + $0x18] sm:$0xff]
        %v1602 = vld [vmem:[#allocation4 + $0x20] sm:$0xff]
        %v1603 = vld [vmem:[#allocation4 + $0x28] sm:$0xff]
        %v1604 = vld [vmem:[#allocation4 + $0x30] sm:$0xff]
        %v1605 = vld [vmem:[#allocation4 + $0x38] sm:$0xff]
        %v1606 = vld [vmem:[#allocation4 + $0x40] sm:$0xff]
        %v1607 = vld [vmem:[#allocation4 + $0x48] sm:$0xff]
        %v1608 = vld [vmem:[#allocation4 + $0x50] sm:$0xff]
        %v1609 = vld [vmem:[#allocation4 + $0x58] sm:$0xff]
        %v1610 = vld [vmem:[#allocation4 + $0x60] sm:$0xff]
        %v1611 = vld [vmem:[#allocation4 + $0x68] sm:$0xff]
        %v1612 = vld [vmem:[#allocation4 + $0x70] sm:$0xff]
        %v1613 = vld [vmem:[#allocation4 + $0x78] sm:$0xff]
        %v1614 = vld [vmem:[#allocation3] sm:$0xff]
        %v1615 = vld [vmem:[#allocation3 + $0x8] sm:$0xff]
        %v1616 = vld [vmem:[#allocation3 + $0x10] sm:$0xff]
        %v1617 = vld [vmem:[#allocation3 + $0x18] sm:$0xff]
        %v1618 = vld [vmem:[#allocation3 + $0x20] sm:$0xff]
        %v1619 = vld [vmem:[#allocation3 + $0x28] sm:$0xff]
        %v1620 = vld [vmem:[#allocation3 + $0x30] sm:$0xff]
        %v1621 = vld [vmem:[#allocation3 + $0x38] sm:$0xff]
        %v1622 = vld [vmem:[#allocation3 + $0x40] sm:$0xff]
        %v1623 = vld [vmem:[#allocation3 + $0x48] sm:$0xff]
        %v1624 = vld [vmem:[#allocation3 + $0x50] sm:$0xff]
        %v1625 = vld [vmem:[#allocation3 + $0x58] sm:$0xff]
        %v1626 = vld [vmem:[#allocation3 + $0x60] sm:$0xff]
        %v1627 = vld [vmem:[#allocation3 + $0x68] sm:$0xff]
        %v1628 = vld [vmem:[#allocation3 + $0x70] sm:$0xff]
        %v1629 = vld [vmem:[#allocation3 + $0x78] sm:$0xff]
        %1631 = vset.pattern.permute.xlu0 0
        %1632 = vperm.xlu0 %1631, %v1614
        %v1633 = vpop.permute.xlu0 %1632
        %1636 = vset.pattern.permute.xlu0 0
        %1637 = vperm.xlu0 %1636, %v1615
        %v1638 = vpop.permute.xlu0 %1637
        %1641 = vset.pattern.permute.xlu0 0
        %1642 = vperm.xlu0 %1641, %v1616
        %v1643 = vpop.permute.xlu0 %1642
        %1646 = vset.pattern.permute.xlu0 0
        %1647 = vperm.xlu0 %1646, %v1617
        %v1648 = vpop.permute.xlu0 %1647
        %1651 = vset.pattern.permute.xlu0 0
        %1652 = vperm.xlu0 %1651, %v1618
        %v1653 = vpop.permute.xlu0 %1652
        %1656 = vset.pattern.permute.xlu0 0
        %1657 = vperm.xlu0 %1656, %v1619
        %v1658 = vpop.permute.xlu0 %1657
        %1661 = vset.pattern.permute.xlu0 0
        %1662 = vperm.xlu0 %1661, %v1620
        %v1663 = vpop.permute.xlu0 %1662
        %1666 = vset.pattern.permute.xlu0 0
        %1667 = vperm.xlu0 %1666, %v1621
        %v1668 = vpop.permute.xlu0 %1667
        %1671 = vset.pattern.permute.xlu0 0
        %1672 = vperm.xlu0 %1671, %v1622
        %v1673 = vpop.permute.xlu0 %1672
        %1676 = vset.pattern.permute.xlu0 0
        %1677 = vperm.xlu0 %1676, %v1623
        %v1678 = vpop.permute.xlu0 %1677
        %1681 = vset.pattern.permute.xlu0 0
        %1682 = vperm.xlu0 %1681, %v1624
        %v1683 = vpop.permute.xlu0 %1682
        %1686 = vset.pattern.permute.xlu0 0
        %1687 = vperm.xlu0 %1686, %v1625
        %v1688 = vpop.permute.xlu0 %1687
        %1691 = vset.pattern.permute.xlu0 0
        %1692 = vperm.xlu0 %1691, %v1626
        %v1693 = vpop.permute.xlu0 %1692
        %1696 = vset.pattern.permute.xlu0 0
        %1697 = vperm.xlu0 %1696, %v1627
        %v1698 = vpop.permute.xlu0 %1697
        %1701 = vset.pattern.permute.xlu0 0
        %1702 = vperm.xlu0 %1701, %v1628
        %v1703 = vpop.permute.xlu0 %1702
        %1706 = vset.pattern.permute.xlu0 0
        %1707 = vperm.xlu0 %1706, %v1629
        %v1708 = vpop.permute.xlu0 %1707
        %v1710 = vrcp.pop %v1633
        %v1711 = vmul.f32 %v1598, %v1710
        %v1712 = vrcp.pop %v1638
        %v1713 = vmul.f32 %v1599, %v1712
        %v1714 = vrcp.pop %v1643
        %v1715 = vmul.f32 %v1600, %v1714
        %v1716 = vrcp.pop %v1648
        %v1717 = vmul.f32 %v1601, %v1716
        %v1718 = vrcp.pop %v1653
        %v1719 = vmul.f32 %v1602, %v1718
        %v1720 = vrcp.pop %v1658
        %v1721 = vmul.f32 %v1603, %v1720
        %v1722 = vrcp.pop %v1663
        %v1723 = vmul.f32 %v1604, %v1722
        %v1724 = vrcp.pop %v1668
        %v1725 = vmul.f32 %v1605, %v1724
        %v1726 = vrcp.pop %v1673
        %v1727 = vmul.f32 %v1606, %v1726
        %v1728 = vrcp.pop %v1678
        %v1729 = vmul.f32 %v1607, %v1728
        %v1730 = vrcp.pop %v1683
        %v1731 = vmul.f32 %v1608, %v1730
        %v1732 = vrcp.pop %v1688
        %v1733 = vmul.f32 %v1609, %v1732
        %v1734 = vrcp.pop %v1693
        %v1735 = vmul.f32 %v1610, %v1734
        %v1736 = vrcp.pop %v1698
        %v1737 = vmul.f32 %v1611, %v1736
        %v1738 = vrcp.pop %v1703
        %v1739 = vmul.f32 %v1612, %v1738
        %v1740 = vrcp.pop %v1708
        %v1741 = vmul.f32 %v1613, %v1740
        %vm1742 = vcmask 523264
        %1743 = vst.msk [vmem:[%s287] sm:$0xff] %vm1742, %v1711
        %1744 = vst.msk [vmem:[%s287 + $0x8] sm:$0xff] %vm1742, %v1713
        %1745 = vst.msk [vmem:[%s287 + $0x10] sm:$0xff] %vm1742, %v1715
        %1746 = vst.msk [vmem:[%s287 + $0x18] sm:$0xff] %vm1742, %v1717
        %1747 = vst.msk [vmem:[%s287 + $0x20] sm:$0xff] %vm1742, %v1719
        %1748 = vst.msk [vmem:[%s287 + $0x28] sm:$0xff] %vm1742, %v1721
        %1749 = vst.msk [vmem:[%s287 + $0x30] sm:$0xff] %vm1742, %v1723
        %1750 = vst.msk [vmem:[%s287 + $0x38] sm:$0xff] %vm1742, %v1725
        %1751 = vst.msk [vmem:[%s287 + $0x40] sm:$0xff] %vm1742, %v1727
        %1752 = vst.msk [vmem:[%s287 + $0x48] sm:$0xff] %vm1742, %v1729
        %1753 = vst.msk [vmem:[%s287 + $0x50] sm:$0xff] %vm1742, %v1731
        %1754 = vst.msk [vmem:[%s287 + $0x58] sm:$0xff] %vm1742, %v1733
        %1755 = vst.msk [vmem:[%s287 + $0x60] sm:$0xff] %vm1742, %v1735
        %1756 = vst.msk [vmem:[%s287 + $0x68] sm:$0xff] %vm1742, %v1737
        %1757 = vst.msk [vmem:[%s287 + $0x70] sm:$0xff] %vm1742, %v1739
        %1758 = vst.msk [vmem:[%s287 + $0x78] sm:$0xff] %vm1742, %v1741
      $region44: #{cosine_attention.4} parent=31 // pred_fallthru
        _
      %s1759 = smul.u32 16, %s20
      %p1760 = scmp.lt.s32.totalorder %s19, 15
      %s1761 = scalar_select %p1760, %s19, 15
      %p1762 = scmp.lt.s32.totalorder %s1759, 31
      %s1763 = scalar_select %p1762, %s1759, 31
      %s1764 = smul.addr %s1761, 32
      %s1765 = sadd.s32 %s1763, %s1764
      %s1766 = smul.addr %s1765, 8
      %s1767 = scalar_lea.vmem %s3, %s1766
      // Predicated region
      $region45: #{cosine_attention.4} parent=31 // pred_check
        %p1768 = pneg %p137
      $region46: #{cosine_attention.4} parent=31 // pred_check_branch
        %1770 = sbr.rel (%p1768) target = $region48
      $region47: #{cosine_attention.4} parent=31 // pred_region
        %s1771 = smul.u32 16, %s20
      $region48: #{cosine_attention.4} parent=31 // pred_fallthru
        _
    $region32: #{cosine_attention.4} parent=5 // pred_fallthru
      _
    %p1772 = scmp.le.s32.totalorder 2, %s9
    // Predicated region
    $region49: #{cosine_attention.4} parent=5 // pred_check
      %p1773 = pneg %p1772
    $region50: #{cosine_attention.4} parent=5 // pred_check_branch
      %1775 = sbr.rel (%p1773) target = $region52
    $region51: #{cosine_attention.4} parent=5 // pred_region
      %s1776 = ssub.s32 %s9, 2
      // Predicated region
      $region53: #{cosine_attention.4} parent=51 // pred_check
        %p1777 = pneg %p143
      $region54: #{cosine_attention.4} parent=51 // pred_check_branch
        %1779 = sbr.rel (%p1777) target = $region56
      $region55: #{cosine_attention.4} parent=51 // pred_region
        %s1780 = smul.u32 16, %s23
        %p1781 = scmp.lt.s32.totalorder %s22, 15
        %s1782 = scalar_select %p1781, %s22, 15
        %p1783 = scmp.lt.s32.totalorder %s1780, 31
        %s1784 = scalar_select %p1783, %s1780, 31
        %s1785 = smul.addr %s1782, 32
        %s1786 = sadd.s32 %s1784, %s1785
        %s1787 = smul.addr %s1786, 8
        %s1788 = scalar_lea.vmem %s3, %s1787
      $region56: #{cosine_attention.4} parent=51 // pred_fallthru
        _
    $region52: #{cosine_attention.4} parent=5 // pred_fallthru
      _
  $region6: #{cosine_attention.4} parent=0 // loop_footer
    %s13 = sadd.s32 1, %s9
  $region7: #{cosine_attention.4} parent=0 // loop_footer_branch
    %8 = sbr.rel target = $region3
  $region8: #{cosine_attention.4} parent=0 // loop_exit
    _

// kernel: cosine_attention.5
$region0: #{cosine_attention.5}
  #allocation0 [shape = 'u32[]', space=smem, size = 0x4, offset = 0x4, fixed_abs, tag = 'smem constant byte address 0x4 - core index']
  #allocation1 [shape = 'u32[144,128]{1,0:T(1,128)}', space=vmem, size = 0x12000, scoped, tag = 'internal scratch']
  #allocation2 [shape = 'f32[256,128]{1,0:T(8,128)}', space=vmem, size = 0x20000, scoped, tag = 'scratch operand']
  %s0 = inlined_call_operand.vmem [shape: f32[512,512], index: 0, kind: input, shape index: {}]
  %s1 = inlined_call_operand.vmem [shape: f32[512,128], index: 1, kind: input, shape index: {}]
  %s2 = inlined_call_operand.vmem [shape: f32[512,128], index: 2, kind: output, shape index: {}]
  %s3 = sld [smem:[#allocation0]]
  $region49: #{cosine_attention.5} parent=0
    _
  %s5 = ssub.s32 1, %s3
  %s6 = scalar_select 0, %s5, %s3
  loop: start=0, step=1, limit=4
  $region2: #{cosine_attention.5} parent=0 // loop_pre_header
    _
  $region3: #{cosine_attention.5} parent=0 // loop_header
    %s8 = sphi 0, %s12
    %p9 = scmp.ge.s32.totalorder %s8, 4
    %s15 = sphi 0, %s34
    %s16 = sphi 0, %s30
    %s17 = sphi 0, %s26
    %s18 = sphi 0, %s15
    %s19 = sphi 0, %s16
    %s20 = sphi 0, %s17
    %s21 = sphi 0, %s18
    %s22 = sphi 0, %s19
    %s23 = sphi 0, %s20
    %s39 = sphi 0, %s41
    %s42 = sphi 0, %s39
    %s43 = sphi 0, %s42
    %s59 = sphi 0, %s43
    %s67 = sphi 0, %s69
    %s70 = sphi 0, %s67
    %s71 = sphi 0, %s70
    %s87 = sphi 0, %s71
    %s95 = sphi 0, %s97
    %s98 = sphi 0, %s95
    %s99 = sphi 0, %s98
    %s115 = sphi 0, %s99
  $region4: #{cosine_attention.5} parent=0 // loop_header_branch
    %11 = sbr.rel (%p9) target = $region8
  $region5: #{cosine_attention.5} parent=0 // loop_body
    %s13 = ssub.s32 %s8, 1
    %s14 = ssub.s32 %s8, 2
    %s24 = sadd.s32 1, %s17
    %p25 = scmp.ge.s32.totalorder %s24, 1
    %s26 = scalar_select %p25, 0, %s24
    %s27 = sadd.s32 1, %s16
    %s28 = scalar_select %p25, %s27, %s16
    %p29 = scmp.ge.s32.totalorder %s28, 1
    %s30 = scalar_select %p29, 0, %s28
    %s31 = sadd.s32 1, %s15
    %s32 = scalar_select %p29, %s31, %s15
    %p33 = scmp.ge.s32.totalorder %s32, 2
    %s34 = scalar_select %p33, 0, %s32
    %s35 = ssub.s32 %s15, %s34
    %s36 = ssub.s32 %s17, %s26
    %s37 = sor.u32 %s35, %s36
    %p38 = scmp.eq.s32.totalorder %s37, 0
    %s40 = sadd.s32 %s39, 1
    %s41 = scalar_select %p38, %s39, %s40
    %p44 = pneg %p38
    %p45 = scmp.eq.s32.totalorder %s8, 1
    %p46 = por %p44, %p45
    %p47 = scmp.ne.s32.totalorder %s39, %s42
    %p48 = scmp.eq.s32.totalorder %s8, 0
    %p49 = por %p47, %p48
    %p50 = scmp.ne.s32.totalorder %s39, %s42
    %p51 = scmp.eq.s32.totalorder %s13, 1
    %p52 = por %p50, %p51
    %p53 = scmp.ne.s32.totalorder %s42, %s43
    %p54 = scmp.eq.s32.totalorder %s13, 0
    %p55 = por %p53, %p54
    %p56 = scmp.ne.s32.totalorder %s42, %s43
    %p57 = scmp.eq.s32.totalorder %s14, 1
    %p58 = por %p56, %p57
    %p60 = scmp.ne.s32.totalorder %s43, %s59
    %p61 = scmp.eq.s32.totalorder %s14, 0
    %p62 = por %p60, %p61
    %s63 = ssub.s32 %s17, %s26
    %s64 = ssub.s32 %s16, %s30
    %s65 = sor.u32 %s63, %s64
    %p66 = scmp.eq.s32.totalorder %s65, 0
    %s68 = sadd.s32 %s67, 1
    %s69 = scalar_select %p66, %s67, %s68
    %p72 = pneg %p66
    %p73 = scmp.eq.s32.totalorder %s8, 1
    %p74 = por %p72, %p73
    %p75 = scmp.ne.s32.totalorder %s67, %s70
    %p76 = scmp.eq.s32.totalorder %s8, 0
    %p77 = por %p75, %p76
    %p78 = scmp.ne.s32.totalorder %s67, %s70
    %p79 = scmp.eq.s32.totalorder %s13, 1
    %p80 = por %p78, %p79
    %p81 = scmp.ne.s32.totalorder %s70, %s71
    %p82 = scmp.eq.s32.totalorder %s13, 0
    %p83 = por %p81, %p82
    %p84 = scmp.ne.s32.totalorder %s70, %s71
    %p85 = scmp.eq.s32.totalorder %s14, 1
    %p86 = por %p84, %p85
    %p88 = scmp.ne.s32.totalorder %s71, %s87
    %p89 = scmp.eq.s32.totalorder %s14, 0
    %p90 = por %p88, %p89
    %s91 = ssub.s32 %s15, %s34
    %s92 = ssub.s32 %s16, %s30
    %s93 = sor.u32 %s91, %s92
    %p94 = scmp.eq.s32.totalorder %s93, 0
    %s96 = sadd.s32 %s95, 1
    %s97 = scalar_select %p94, %s95, %s96
    %p100 = pneg %p94
    %p101 = scmp.eq.s32.totalorder %s8, 1
    %p102 = por %p100, %p101
    %p103 = scmp.ne.s32.totalorder %s95, %s98
    %p104 = scmp.eq.s32.totalorder %s8, 0
    %p105 = por %p103, %p104
    %p106 = scmp.ne.s32.totalorder %s95, %s98
    %p107 = scmp.eq.s32.totalorder %s13, 1
    %p108 = por %p106, %p107
    %p109 = scmp.ne.s32.totalorder %s98, %s99
    %p110 = scmp.eq.s32.totalorder %s13, 0
    %p111 = por %p109, %p110
    %p112 = scmp.ne.s32.totalorder %s98, %s99
    %p113 = scmp.eq.s32.totalorder %s14, 1
    %p114 = por %p112, %p113
    %p116 = scmp.ne.s32.totalorder %s99, %s115
    %p117 = scmp.eq.s32.totalorder %s14, 0
    %p118 = por %p116, %p117
    %p119 = scmp.le.s32.totalorder 1, %s8
    %p120 = scmp.lt.s32.totalorder %s8, 3
    %p121 = pnand %p119, %p120
    %p122 = pneg %p121
    // Predicated region
    $region9: #{cosine_attention.5} parent=5 // pred_check
      _
    $region10: #{cosine_attention.5} parent=5 // pred_check_branch
      %124 = sbr.rel (%p121) target = $region12
    $region11: #{cosine_attention.5} parent=5 // pred_region
      %s125 = ssub.s32 %s8, 1
      // Predicated region
      $region13: #{cosine_attention.5} parent=11 // pred_check
        %p126 = pneg %p83
      $region14: #{cosine_attention.5} parent=11 // pred_check_branch
        %128 = sbr.rel (%p126) target = $region16
      $region15: #{cosine_attention.5} parent=11 // pred_region
        %s129 = smul.u32 64, %s20
        %p130 = scmp.lt.s32.totalorder %s129, 63
        %s131 = scalar_select %p130, %s129, 63
        %p132 = scmp.lt.s32.totalorder %s19, 0
        %s133 = scalar_select %p132, %s19, 0
        %s134 = sadd.s32 %s133, %s131
        %s135 = smul.addr %s134, 8
        %s136 = scalar_lea.vmem %s1, %s135
        %s137 = smul.u32 64, %s20
      $region16: #{cosine_attention.5} parent=11 // pred_fallthru
        _
    $region12: #{cosine_attention.5} parent=5 // pred_fallthru
      _
    %p138 = scmp.lt.s32.totalorder %s8, 2
    // Predicated region
    $region17: #{cosine_attention.5} parent=5 // pred_check
      %p139 = pneg %p138
    $region18: #{cosine_attention.5} parent=5 // pred_check_branch
      %141 = sbr.rel (%p139) target = $region20
    $region19: #{cosine_attention.5} parent=5 // pred_region
      // Predicated region
      $region21: #{cosine_attention.5} parent=19 // pred_check
        %p142 = pneg %p49
      $region22: #{cosine_attention.5} parent=19 // pred_check_branch
        %144 = sbr.rel (%p142) target = $region24
      $region23: #{cosine_attention.5} parent=19 // pred_region
        %s145 = smul.u32 32, %s15
        %s146 = smul.u32 4, %s17
        %p147 = scmp.lt.s32.totalorder %s145, 63
        %s148 = scalar_select %p147, %s145, 63
        %p149 = scmp.lt.s32.totalorder %s146, 3
        %s150 = scalar_select %p149, %s146, 3
        %s151 = smul.addr %s148, 4
        %s152 = sadd.s32 %s150, %s151
        %s153 = smul.addr %s152, 8
        %s154 = scalar_lea.vmem %s0, %s153
        %s155 = smul.u32 32, %s15
        %s156 = smul.u32 4, %s17
      $region24: #{cosine_attention.5} parent=19 // pred_fallthru
        _
    $region20: #{cosine_attention.5} parent=5 // pred_fallthru
      _
    %p157 = scmp.le.s32.totalorder 1, %s8
    %p158 = scmp.lt.s32.totalorder %s8, 3
    %p159 = pnand %p157, %p158
    %p160 = pneg %p159
    // Predicated region
    $region25: #{cosine_attention.5} parent=5 // pred_check
      _
    $region26: #{cosine_attention.5} parent=5 // pred_check_branch
      %162 = sbr.rel (%p159) target = $region28
    $region27: #{cosine_attention.5} parent=5 // pred_region
      %s163 = ssub.s32 %s8, 1
      %s164 = smul.u32 32, %s18
      %s165 = smul.u32 4, %s20
      %p166 = scmp.lt.s32.totalorder %s164, 63
      %s167 = scalar_select %p166, %s164, 63
      %p168 = scmp.lt.s32.totalorder %s165, 3
      %s169 = scalar_select %p168, %s165, 3
      %s170 = smul.addr %s167, 4
      %s171 = sadd.s32 %s169, %s170
      %s172 = smul.addr %s171, 8
      %s173 = scalar_lea.vmem %s0, %s172
      %p174 = pneg %p55
      %p175 = pneg %p52
      %s176 = smul.u32 64, %s20
      %p177 = scmp.lt.s32.totalorder %s176, 63
      %s178 = scalar_select %p177, %s176, 63
      %p179 = scmp.lt.s32.totalorder %s19, 0
      %s180 = scalar_select %p179, %s19, 0
      %s181 = sadd.s32 %s180, %s178
      %s182 = smul.addr %s181, 8
      %s183 = scalar_lea.vmem %s1, %s182
      %p184 = pneg %p83
      %p185 = pneg %p80
      %p186 = pneg %p111
      %p187 = pneg %p108
      %s188 = smul.u32 32, %s18
      %p189 = scmp.lt.s32.totalorder %s188, 63
      %s190 = scalar_select %p189, %s188, 63
      %p191 = scmp.lt.s32.totalorder %s19, 0
      %s192 = scalar_select %p191, %s19, 0
      %s193 = sadd.s32 %s192, %s190
      %s194 = smul.addr %s193, 8
      %s195 = scalar_lea.vmem %s2, %s194
      %s196 = smul.u32 32, %s18
      %s197 = smul.u32 4, %s20
      %p198 = scmp.lt.s32.totalorder %s196, 63
      %s199 = scalar_select %p198, %s196, 63
      %p200 = scmp.lt.s32.totalorder %s197, 3
      %s201 = scalar_select %p200, %s197, 3
      %s202 = smul.addr %s199, 4
      %s203 = sadd.s32 %s201, %s202
      %s204 = smul.addr %s203, 8
      %s205 = scalar_lea.vmem %s0, %s204
      %s206 = smul.u32 32, %s18
      %s207 = smul.u32 4, %s20
      %s208 = smul.u32 64, %s20
      %p209 = scmp.lt.s32.totalorder %s208, 63
      %s210 = scalar_select %p209, %s208, 63
      %p211 = scmp.lt.s32.totalorder %s19, 0
      %s212 = scalar_select %p211, %s19, 0
      %s213 = sadd.s32 %s212, %s210
      %s214 = smul.addr %s213, 8
      %s215 = scalar_lea.vmem %s1, %s214
      %s216 = smul.u32 64, %s20
      %s217 = smul.u32 32, %s18
      %p218 = scmp.lt.s32.totalorder %s217, 63
      %s219 = scalar_select %p218, %s217, 63
      %p220 = scmp.lt.s32.totalorder %s19, 0
      %s221 = scalar_select %p220, %s19, 0
      %s222 = sadd.s32 %s221, %s219
      %s223 = smul.addr %s222, 8
      %s224 = scalar_lea.vmem %s2, %s223
      %s225 = smul.u32 32, %s18
      %p226 = scmp.eq.s32.totalorder %s20, 0
      // Predicated region
      $region29: #{cosine_attention.5} parent=27 // pred_check
        %p227 = pneg %p226
      $region30: #{cosine_attention.5} parent=27 // pred_check_branch
        %229 = sbr.rel (%p227) target = $region32
      $region31: #{cosine_attention.5} parent=27 // pred_region
        %230 = vst [vmem:[#allocation2] sm:$0xff] 0.0
        %231 = vst [vmem:[#allocation2 + $0x8] sm:$0xff] 0.0
        %232 = vst [vmem:[#allocation2 + $0x10] sm:$0xff] 0.0
        %233 = vst [vmem:[#allocation2 + $0x18] sm:$0xff] 0.0
        %234 = vst [vmem:[#allocation2 + $0x20] sm:$0xff] 0.0
        %235 = vst [vmem:[#allocation2 + $0x28] sm:$0xff] 0.0
        %236 = vst [vmem:[#allocation2 + $0x30] sm:$0xff] 0.0
        %237 = vst [vmem:[#allocation2 + $0x38] sm:$0xff] 0.0
        %238 = vst [vmem:[#allocation2 + $0x40] sm:$0xff] 0.0
        %239 = vst [vmem:[#allocation2 + $0x48] sm:$0xff] 0.0
        %240 = vst [vmem:[#allocation2 + $0x50] sm:$0xff] 0.0
        %241 = vst [vmem:[#allocation2 + $0x58] sm:$0xff] 0.0
        %242 = vst [vmem:[#allocation2 + $0x60] sm:$0xff] 0.0
        %243 = vst [vmem:[#allocation2 + $0x68] sm:$0xff] 0.0
        %244 = vst [vmem:[#allocation2 + $0x70] sm:$0xff] 0.0
        %245 = vst [vmem:[#allocation2 + $0x78] sm:$0xff] 0.0
        %246 = vst [vmem:[#allocation2 + $0x80] sm:$0xff] 0.0
        %247 = vst [vmem:[#allocation2 + $0x88] sm:$0xff] 0.0
        %248 = vst [vmem:[#allocation2 + $0x90] sm:$0xff] 0.0
        %249 = vst [vmem:[#allocation2 + $0x98] sm:$0xff] 0.0
        %250 = vst [vmem:[#allocation2 + $0xa0] sm:$0xff] 0.0
        %251 = vst [vmem:[#allocation2 + $0xa8] sm:$0xff] 0.0
        %252 = vst [vmem:[#allocation2 + $0xb0] sm:$0xff] 0.0
        %253 = vst [vmem:[#allocation2 + $0xb8] sm:$0xff] 0.0
        %254 = vst [vmem:[#allocation2 + $0xc0] sm:$0xff] 0.0
        %255 = vst [vmem:[#allocation2 + $0xc8] sm:$0xff] 0.0
        %256 = vst [vmem:[#allocation2 + $0xd0] sm:$0xff] 0.0
        %257 = vst [vmem:[#allocation2 + $0xd8] sm:$0xff] 0.0
        %258 = vst [vmem:[#allocation2 + $0xe0] sm:$0xff] 0.0
        %259 = vst [vmem:[#allocation2 + $0xe8] sm:$0xff] 0.0
        %260 = vst [vmem:[#allocation2 + $0xf0] sm:$0xff] 0.0
        %261 = vst [vmem:[#allocation2 + $0xf8] sm:$0xff] 0.0
      $region32: #{cosine_attention.5} parent=27 // pred_fallthru
        _
      %v262 = vld [vmem:[#allocation2] sm:$0xff]
      %v263 = vld [vmem:[#allocation2 + $0x8] sm:$0xff]
      %v264 = vld [vmem:[#allocation2 + $0x10] sm:$0xff]
      %v265 = vld [vmem:[#allocation2 + $0x18] sm:$0xff]
      %v266 = vld [vmem:[#allocation2 + $0x20] sm:$0xff]
      %v267 = vld [vmem:[#allocation2 + $0x28] sm:$0xff]
      %v268 = vld [vmem:[#allocation2 + $0x30] sm:$0xff]
      %v269 = vld [vmem:[#allocation2 + $0x38] sm:$0xff]
      %v270 = vld [vmem:[#allocation2 + $0x40] sm:$0xff]
      %v271 = vld [vmem:[#allocation2 + $0x48] sm:$0xff]
      %v272 = vld [vmem:[#allocation2 + $0x50] sm:$0xff]
      %v273 = vld [vmem:[#allocation2 + $0x58] sm:$0xff]
      %v274 = vld [vmem:[#allocation2 + $0x60] sm:$0xff]
      %v275 = vld [vmem:[#allocation2 + $0x68] sm:$0xff]
      %v276 = vld [vmem:[#allocation2 + $0x70] sm:$0xff]
      %v277 = vld [vmem:[#allocation2 + $0x78] sm:$0xff]
      %v278 = vld [vmem:[#allocation2 + $0x80] sm:$0xff]
      %v279 = vld [vmem:[#allocation2 + $0x88] sm:$0xff]
      %v280 = vld [vmem:[#allocation2 + $0x90] sm:$0xff]
      %v281 = vld [vmem:[#allocation2 + $0x98] sm:$0xff]
      %v282 = vld [vmem:[#allocation2 + $0xa0] sm:$0xff]
      %v283 = vld [vmem:[#allocation2 + $0xa8] sm:$0xff]
      %v284 = vld [vmem:[#allocation2 + $0xb0] sm:$0xff]
      %v285 = vld [vmem:[#allocation2 + $0xb8] sm:$0xff]
      %v286 = vld [vmem:[#allocation2 + $0xc0] sm:$0xff]
      %v287 = vld [vmem:[#allocation2 + $0xc8] sm:$0xff]
      %v288 = vld [vmem:[#allocation2 + $0xd0] sm:$0xff]
      %v289 = vld [vmem:[#allocation2 + $0xd8] sm:$0xff]
      %v290 = vld [vmem:[#allocation2 + $0xe0] sm:$0xff]
      %v291 = vld [vmem:[#allocation2 + $0xe8] sm:$0xff]
      %v292 = vld [vmem:[#allocation2 + $0xf0] sm:$0xff]
      %v293 = vld [vmem:[#allocation2 + $0xf8] sm:$0xff]
      %v294 = vld [vmem:[%s205] sm:$0xff]
      %v295 = vld [vmem:[%s205 + $0x8] sm:$0xff]
      %v296 = vld [vmem:[%s205 + $0x10] sm:$0xff]
      %v297 = vld [vmem:[%s205 + $0x18] sm:$0xff]
      %v298 = vld [vmem:[%s205 + $0x20] sm:$0xff]
      %v299 = vld [vmem:[%s205 + $0x28] sm:$0xff]
      %v300 = vld [vmem:[%s205 + $0x30] sm:$0xff]
      %v301 = vld [vmem:[%s205 + $0x38] sm:$0xff]
      %v302 = vld [vmem:[%s205 + $0x40] sm:$0xff]
      %v303 = vld [vmem:[%s205 + $0x48] sm:$0xff]
      %v304 = vld [vmem:[%s205 + $0x50] sm:$0xff]
      %v305 = vld [vmem:[%s205 + $0x58] sm:$0xff]
      %v306 = vld [vmem:[%s205 + $0x60] sm:$0xff]
      %v307 = vld [vmem:[%s205 + $0x68] sm:$0xff]
      %v308 = vld [vmem:[%s205 + $0x70] sm:$0xff]
      %v309 = vld [vmem:[%s205 + $0x78] sm:$0xff]
      %v310 = vld [vmem:[%s205 + $0x80] sm:$0xff]
      %v311 = vld [vmem:[%s205 + $0x88] sm:$0xff]
      %v312 = vld [vmem:[%s205 + $0x90] sm:$0xff]
      %v313 = vld [vmem:[%s205 + $0x98] sm:$0xff]
      %v314 = vld [vmem:[%s205 + $0xa0] sm:$0xff]
      %v315 = vld [vmem:[%s205 + $0xa8] sm:$0xff]
      %v316 = vld [vmem:[%s205 + $0xb0] sm:$0xff]
      %v317 = vld [vmem:[%s205 + $0xb8] sm:$0xff]
      %v318 = vld [vmem:[%s205 + $0xc0] sm:$0xff]
      %v319 = vld [vmem:[%s205 + $0xc8] sm:$0xff]
      %v320 = vld [vmem:[%s205 + $0xd0] sm:$0xff]
      %v321 = vld [vmem:[%s205 + $0xd8] sm:$0xff]
      %v322 = vld [vmem:[%s205 + $0xe0] sm:$0xff]
      %v323 = vld [vmem:[%s205 + $0xe8] sm:$0xff]
      %v324 = vld [vmem:[%s205 + $0xf0] sm:$0xff]
      %v325 = vld [vmem:[%s205 + $0xf8] sm:$0xff]
      %v326 = vld [vmem:[%s205 + $0x100] sm:$0xff]
      %v327 = vld [vmem:[%s205 + $0x108] sm:$0xff]
      %v328 = vld [vmem:[%s205 + $0x110] sm:$0xff]
      %v329 = vld [vmem:[%s205 + $0x118] sm:$0xff]
      %v330 = vld [vmem:[%s205 + $0x120] sm:$0xff]
      %v331 = vld [vmem:[%s205 + $0x128] sm:$0xff]
      %v332 = vld [vmem:[%s205 + $0x130] sm:$0xff]
      %v333 = vld [vmem:[%s205 + $0x138] sm:$0xff]
      %v334 = vld [vmem:[%s205 + $0x140] sm:$0xff]
      %v335 = vld [vmem:[%s205 + $0x148] sm:$0xff]
      %v336 = vld [vmem:[%s205 + $0x150] sm:$0xff]
      %v337 = vld [vmem:[%s205 + $0x158] sm:$0xff]
      %v338 = vld [vmem:[%s205 + $0x160] sm:$0xff]
      %v339 = vld [vmem:[%s205 + $0x168] sm:$0xff]
      %v340 = vld [vmem:[%s205 + $0x170] sm:$0xff]
      %v341 = vld [vmem:[%s205 + $0x178] sm:$0xff]
      %v342 = vld [vmem:[%s205 + $0x180] sm:$0xff]
      %v343 = vld [vmem:[%s205 + $0x188] sm:$0xff]
      %v344 = vld [vmem:[%s205 + $0x190] sm:$0xff]
      %v345 = vld [vmem:[%s205 + $0x198] sm:$0xff]
      %v346 = vld [vmem:[%s205 + $0x1a0] sm:$0xff]
      %v347 = vld [vmem:[%s205 + $0x1a8] sm:$0xff]
      %v348 = vld [vmem:[%s205 + $0x1b0] sm:$0xff]
      %v349 = vld [vmem:[%s205 + $0x1b8] sm:$0xff]
      %v350 = vld [vmem:[%s205 + $0x1c0] sm:$0xff]
      %v351 = vld [vmem:[%s205 + $0x1c8] sm:$0xff]
      %v352 = vld [vmem:[%s205 + $0x1d0] sm:$0xff]
      %v353 = vld [vmem:[%s205 + $0x1d8] sm:$0xff]
      %v354 = vld [vmem:[%s205 + $0x1e0] sm:$0xff]
      %v355 = vld [vmem:[%s205 + $0x1e8] sm:$0xff]
      %v356 = vld [vmem:[%s205 + $0x1f0] sm:$0xff]
      %v357 = vld [vmem:[%s205 + $0x1f8] sm:$0xff]
      %v358 = vld [vmem:[%s205 + $0x200] sm:$0xff]
      %v359 = vld [vmem:[%s205 + $0x208] sm:$0xff]
      %v360 = vld [vmem:[%s205 + $0x210] sm:$0xff]
      %v361 = vld [vmem:[%s205 + $0x218] sm:$0xff]
      %v362 = vld [vmem:[%s205 + $0x220] sm:$0xff]
      %v363 = vld [vmem:[%s205 + $0x228] sm:$0xff]
      %v364 = vld [vmem:[%s205 + $0x230] sm:$0xff]
      %v365 = vld [vmem:[%s205 + $0x238] sm:$0xff]
      %v366 = vld [vmem:[%s205 + $0x240] sm:$0xff]
      %v367 = vld [vmem:[%s205 + $0x248] sm:$0xff]
      %v368 = vld [vmem:[%s205 + $0x250] sm:$0xff]
      %v369 = vld [vmem:[%s205 + $0x258] sm:$0xff]
      %v370 = vld [vmem:[%s205 + $0x260] sm:$0xff]
      %v371 = vld [vmem:[%s205 + $0x268] sm:$0xff]
      %v372 = vld [vmem:[%s205 + $0x270] sm:$0xff]
      %v373 = vld [vmem:[%s205 + $0x278] sm:$0xff]
      %v374 = vld [vmem:[%s205 + $0x280] sm:$0xff]
      %v375 = vld [vmem:[%s205 + $0x288] sm:$0xff]
      %v376 = vld [vmem:[%s205 + $0x290] sm:$0xff]
      %v377 = vld [vmem:[%s205 + $0x298] sm:$0xff]
      %v378 = vld [vmem:[%s205 + $0x2a0] sm:$0xff]
      %v379 = vld [vmem:[%s205 + $0x2a8] sm:$0xff]
      %v380 = vld [vmem:[%s205 + $0x2b0] sm:$0xff]
      %v381 = vld [vmem:[%s205 + $0x2b8] sm:$0xff]
      %v382 = vld [vmem:[%s205 + $0x2c0] sm:$0xff]
      %v383 = vld [vmem:[%s205 + $0x2c8] sm:$0xff]
      %v384 = vld [vmem:[%s205 + $0x2d0] sm:$0xff]
      %v385 = vld [vmem:[%s205 + $0x2d8] sm:$0xff]
      %v386 = vld [vmem:[%s205 + $0x2e0] sm:$0xff]
      %v387 = vld [vmem:[%s205 + $0x2e8] sm:$0xff]
      %v388 = vld [vmem:[%s205 + $0x2f0] sm:$0xff]
      %v389 = vld [vmem:[%s205 + $0x2f8] sm:$0xff]
      %v390 = vld [vmem:[%s205 + $0x300] sm:$0xff]
      %v391 = vld [vmem:[%s205 + $0x308] sm:$0xff]
      %v392 = vld [vmem:[%s205 + $0x310] sm:$0xff]
      %v393 = vld [vmem:[%s205 + $0x318] sm:$0xff]
      %v394 = vld [vmem:[%s205 + $0x320] sm:$0xff]
      %v395 = vld [vmem:[%s205 + $0x328] sm:$0xff]
      %v396 = vld [vmem:[%s205 + $0x330] sm:$0xff]
      %v397 = vld [vmem:[%s205 + $0x338] sm:$0xff]
      %v398 = vld [vmem:[%s205 + $0x340] sm:$0xff]
      %v399 = vld [vmem:[%s205 + $0x348] sm:$0xff]
      %v400 = vld [vmem:[%s205 + $0x350] sm:$0xff]
      %v401 = vld [vmem:[%s205 + $0x358] sm:$0xff]
      %v402 = vld [vmem:[%s205 + $0x360] sm:$0xff]
      %v403 = vld [vmem:[%s205 + $0x368] sm:$0xff]
      %v404 = vld [vmem:[%s205 + $0x370] sm:$0xff]
      %v405 = vld [vmem:[%s205 + $0x378] sm:$0xff]
      %v406 = vld [vmem:[%s205 + $0x380] sm:$0xff]
      %v407 = vld [vmem:[%s205 + $0x388] sm:$0xff]
      %v408 = vld [vmem:[%s205 + $0x390] sm:$0xff]
      %v409 = vld [vmem:[%s205 + $0x398] sm:$0xff]
      %v410 = vld [vmem:[%s205 + $0x3a0] sm:$0xff]
      %v411 = vld [vmem:[%s205 + $0x3a8] sm:$0xff]
      %v412 = vld [vmem:[%s205 + $0x3b0] sm:$0xff]
      %v413 = vld [vmem:[%s205 + $0x3b8] sm:$0xff]
      %v414 = vld [vmem:[%s205 + $0x3c0] sm:$0xff]
      %v415 = vld [vmem:[%s205 + $0x3c8] sm:$0xff]
      %v416 = vld [vmem:[%s205 + $0x3d0] sm:$0xff]
      %v417 = vld [vmem:[%s205 + $0x3d8] sm:$0xff]
      %v418 = vld [vmem:[%s205 + $0x3e0] sm:$0xff]
      %v419 = vld [vmem:[%s205 + $0x3e8] sm:$0xff]
      %v420 = vld [vmem:[%s205 + $0x3f0] sm:$0xff]
      %v421 = vld [vmem:[%s205 + $0x3f8] sm:$0xff]
      %v422 = vld [vmem:[%s215] sm:$0xff]
      %v423 = vld [vmem:[%s215 + $0x8] sm:$0xff]
      %v424 = vld [vmem:[%s215 + $0x10] sm:$0xff]
      %v425 = vld [vmem:[%s215 + $0x18] sm:$0xff]
      %v426 = vld [vmem:[%s215 + $0x20] sm:$0xff]
      %v427 = vld [vmem:[%s215 + $0x28] sm:$0xff]
      %v428 = vld [vmem:[%s215 + $0x30] sm:$0xff]
      %v429 = vld [vmem:[%s215 + $0x38] sm:$0xff]
      %v430 = vld [vmem:[%s215 + $0x40] sm:$0xff]
      %v431 = vld [vmem:[%s215 + $0x48] sm:$0xff]
      %v432 = vld [vmem:[%s215 + $0x50] sm:$0xff]
      %v433 = vld [vmem:[%s215 + $0x58] sm:$0xff]
      %v434 = vld [vmem:[%s215 + $0x60] sm:$0xff]
      %v435 = vld [vmem:[%s215 + $0x68] sm:$0xff]
      %v436 = vld [vmem:[%s215 + $0x70] sm:$0xff]
      %v437 = vld [vmem:[%s215 + $0x78] sm:$0xff]
      %v438 = vld [vmem:[%s215 + $0x80] sm:$0xff]
      %v439 = vld [vmem:[%s215 + $0x88] sm:$0xff]
      %v440 = vld [vmem:[%s215 + $0x90] sm:$0xff]
      %v441 = vld [vmem:[%s215 + $0x98] sm:$0xff]
      %v442 = vld [vmem:[%s215 + $0xa0] sm:$0xff]
      %v443 = vld [vmem:[%s215 + $0xa8] sm:$0xff]
      %v444 = vld [vmem:[%s215 + $0xb0] sm:$0xff]
      %v445 = vld [vmem:[%s215 + $0xb8] sm:$0xff]
      %v446 = vld [vmem:[%s215 + $0xc0] sm:$0xff]
      %v447 = vld [vmem:[%s215 + $0xc8] sm:$0xff]
      %v448 = vld [vmem:[%s215 + $0xd0] sm:$0xff]
      %v449 = vld [vmem:[%s215 + $0xd8] sm:$0xff]
      %v450 = vld [vmem:[%s215 + $0xe0] sm:$0xff]
      %v451 = vld [vmem:[%s215 + $0xe8] sm:$0xff]
      %v452 = vld [vmem:[%s215 + $0xf0] sm:$0xff]
      %v453 = vld [vmem:[%s215 + $0xf8] sm:$0xff]
      %v454 = vld [vmem:[%s215 + $0x100] sm:$0xff]
      %v455 = vld [vmem:[%s215 + $0x108] sm:$0xff]
      %v456 = vld [vmem:[%s215 + $0x110] sm:$0xff]
      %v457 = vld [vmem:[%s215 + $0x118] sm:$0xff]
      %v458 = vld [vmem:[%s215 + $0x120] sm:$0xff]
      %v459 = vld [vmem:[%s215 + $0x128] sm:$0xff]
      %v460 = vld [vmem:[%s215 + $0x130] sm:$0xff]
      %v461 = vld [vmem:[%s215 + $0x138] sm:$0xff]
      %v462 = vld [vmem:[%s215 + $0x140] sm:$0xff]
      %v463 = vld [vmem:[%s215 + $0x148] sm:$0xff]
      %v464 = vld [vmem:[%s215 + $0x150] sm:$0xff]
      %v465 = vld [vmem:[%s215 + $0x158] sm:$0xff]
      %v466 = vld [vmem:[%s215 + $0x160] sm:$0xff]
      %v467 = vld [vmem:[%s215 + $0x168] sm:$0xff]
      %v468 = vld [vmem:[%s215 + $0x170] sm:$0xff]
      %v469 = vld [vmem:[%s215 + $0x178] sm:$0xff]
      %v470 = vld [vmem:[%s215 + $0x180] sm:$0xff]
      %v471 = vld [vmem:[%s215 + $0x188] sm:$0xff]
      %v472 = vld [vmem:[%s215 + $0x190] sm:$0xff]
      %v473 = vld [vmem:[%s215 + $0x198] sm:$0xff]
      %v474 = vld [vmem:[%s215 + $0x1a0] sm:$0xff]
      %v475 = vld [vmem:[%s215 + $0x1a8] sm:$0xff]
      %v476 = vld [vmem:[%s215 + $0x1b0] sm:$0xff]
      %v477 = vld [vmem:[%s215 + $0x1b8] sm:$0xff]
      %v478 = vld [vmem:[%s215 + $0x1c0] sm:$0xff]
      %v479 = vld [vmem:[%s215 + $0x1c8] sm:$0xff]
      %v480 = vld [vmem:[%s215 + $0x1d0] sm:$0xff]
      %v481 = vld [vmem:[%s215 + $0x1d8] sm:$0xff]
      %v482 = vld [vmem:[%s215 + $0x1e0] sm:$0xff]
      %v483 = vld [vmem:[%s215 + $0x1e8] sm:$0xff]
      %v484 = vld [vmem:[%s215 + $0x1f0] sm:$0xff]
      %v485 = vld [vmem:[%s215 + $0x1f8] sm:$0xff]
      %486 = vmatprep.subr.mxu0 0.0
      %487 = vmatpush1.msra.mxu0 %v437
      %488 = vmatprep.subr.mxu0 0.0
      %489 = vmatpush1.msra.mxu0 %v436
      %490 = vmatprep.subr.mxu0 0.0
      %491 = vmatpush1.msra.mxu0 %v435
      %492 = vmatprep.subr.mxu0 0.0
      %493 = vmatpush1.msra.mxu0 %v434
      %494 = vmatprep.subr.mxu0 0.0
      %495 = vmatpush1.msra.mxu0 %v433
      %496 = vmatprep.subr.mxu0 0.0
      %497 = vmatpush1.msra.mxu0 %v432
      %498 = vmatprep.subr.mxu0 0.0
      %499 = vmatpush1.msra.mxu0 %v431
      %500 = vmatprep.subr.mxu0 0.0
      %501 = vmatpush1.msra.mxu0 %v430
      %502 = vmatprep.subr.mxu0 0.0
      %503 = vmatpush1.msra.mxu0 %v429
      %504 = vmatprep.subr.mxu0 0.0
      %505 = vmatpush1.msra.mxu0 %v428
      %506 = vmatprep.subr.mxu0 0.0
      %507 = vmatpush1.msra.mxu0 %v427
      %508 = vmatprep.subr.mxu0 0.0
      %509 = vmatpush1.msra.mxu0 %v426
      %510 = vmatprep.subr.mxu0 0.0
      %511 = vmatpush1.msra.mxu0 %v425
      %512 = vmatprep.subr.mxu0 0.0
      %513 = vmatpush1.msra.mxu0 %v424
      %514 = vmatprep.subr.mxu0 0.0
      %515 = vmatpush1.msra.mxu0 %v423
      %516 = vmatprep.subr.mxu0 0.0
      %517 = vmatpush1.msra.mxu0 %v422
      %518 = vmatprep.subr.mxu0 0.0
      %519 = vmatpush2.msra.mxu0 %v453
      %520 = vmatprep.subr.mxu0 0.0
      %521 = vmatpush2.msra.mxu0 %v452
      %522 = vmatprep.subr.mxu0 0.0
      %523 = vmatpush2.msra.mxu0 %v451
      %524 = vmatprep.subr.mxu0 0.0
      %525 = vmatpush2.msra.mxu0 %v450
      %526 = vmatprep.subr.mxu0 0.0
      %527 = vmatpush2.msra.mxu0 %v449
      %528 = vmatprep.subr.mxu0 0.0
      %529 = vmatpush2.msra.mxu0 %v448
      %530 = vmatprep.subr.mxu0 0.0
      %531 = vmatpush2.msra.mxu0 %v447
      %532 = vmatprep.subr.mxu0 0.0
      %533 = vmatpush2.msra.mxu0 %v446
      %534 = vmatprep.subr.mxu0 0.0
      %535 = vmatpush2.msra.mxu0 %v445
      %536 = vmatprep.subr.mxu0 0.0
      %537 = vmatpush2.msra.mxu0 %v444
      %538 = vmatprep.subr.mxu0 0.0
      %539 = vmatpush2.msra.mxu0 %v443
      %540 = vmatprep.subr.mxu0 0.0
      %541 = vmatpush2.msra.mxu0 %v442
      %542 = vmatprep.subr.mxu0 0.0
      %543 = vmatpush2.msra.mxu0 %v441
      %544 = vmatprep.subr.mxu0 0.0
      %545 = vmatpush2.msra.mxu0 %v440
      %546 = vmatprep.subr.mxu0 0.0
      %547 = vmatpush2.msra.mxu0 %v439
      %548 = vmatprep.subr.mxu0 0.0
      %549 = vmatpush2.msra.mxu0 %v438
      %550 = vmatprep.mubr.f32.mxu0 %v295
      %551 = vmatmul.mubr.f32.gmra.mxu0 %v294
      %v552 = vpop.f32.mrf.mxu0
      %v553 = vadd.f32 0.0, %v552
      %v554 = vpop.f32.mrf.mxu0
      %555 = vmatprep.mubr.f32.mxu0 %v299
      %556 = vmatmul.mubr.f32.gmra.mxu0 %v298
      %v557 = vpop.f32.mrf.mxu0
      %v558 = vadd.f32 0.0, %v557
      %v559 = vpop.f32.mrf.mxu0
      %560 = vmatprep.mubr.f32.mxu0 %v303
      %561 = vmatmul.mubr.f32.gmra.mxu0 %v302
      %v562 = vpop.f32.mrf.mxu0
      %v563 = vadd.f32 0.0, %v562
      %v564 = vpop.f32.mrf.mxu0
      %565 = vmatprep.mubr.f32.mxu0 %v307
      %566 = vmatmul.mubr.f32.gmra.mxu0 %v306
      %v567 = vpop.f32.mrf.mxu0
      %v568 = vadd.f32 0.0, %v567
      %v569 = vpop.f32.mrf.mxu0
      %570 = vmatprep.mubr.f32.mxu0 %v311
      %571 = vmatmul.mubr.f32.gmra.mxu0 %v310
      %v572 = vpop.f32.mrf.mxu0
      %v573 = vadd.f32 0.0, %v572
      %v574 = vpop.f32.mrf.mxu0
      %575 = vmatprep.mubr.f32.mxu0 %v315
      %576 = vmatmul.mubr.f32.gmra.mxu0 %v314
      %v577 = vpop.f32.mrf.mxu0
      %v578 = vadd.f32 0.0, %v577
      %v579 = vpop.f32.mrf.mxu0
      %580 = vmatprep.mubr.f32.mxu0 %v319
      %581 = vmatmul.mubr.f32.gmra.mxu0 %v318
      %v582 = vpop.f32.mrf.mxu0
      %v583 = vadd.f32 0.0, %v582
      %v584 = vpop.f32.mrf.mxu0
      %585 = vmatprep.mubr.f32.mxu0 %v323
      %586 = vmatmul.mubr.f32.gmra.mxu0 %v322
      %v587 = vpop.f32.mrf.mxu0
      %v588 = vadd.f32 0.0, %v587
      %v589 = vpop.f32.mrf.mxu0
      %590 = vmatprep.mubr.f32.mxu0 %v327
      %591 = vmatmul.mubr.f32.gmra.mxu0 %v326
      %v592 = vpop.f32.mrf.mxu0
      %v593 = vadd.f32 0.0, %v592
      %v594 = vpop.f32.mrf.mxu0
      %595 = vmatprep.mubr.f32.mxu0 %v331
      %596 = vmatmul.mubr.f32.gmra.mxu0 %v330
      %v597 = vpop.f32.mrf.mxu0
      %v598 = vadd.f32 0.0, %v597
      %v599 = vpop.f32.mrf.mxu0
      %600 = vmatprep.mubr.f32.mxu0 %v335
      %601 = vmatmul.mubr.f32.gmra.mxu0 %v334
      %v602 = vpop.f32.mrf.mxu0
      %v603 = vadd.f32 0.0, %v602
      %v604 = vpop.f32.mrf.mxu0
      %605 = vmatprep.mubr.f32.mxu0 %v339
      %606 = vmatmul.mubr.f32.gmra.mxu0 %v338
      %v607 = vpop.f32.mrf.mxu0
      %v608 = vadd.f32 0.0, %v607
      %v609 = vpop.f32.mrf.mxu0
      %610 = vmatprep.mubr.f32.mxu0 %v343
      %611 = vmatmul.mubr.f32.gmra.mxu0 %v342
      %v612 = vpop.f32.mrf.mxu0
      %v613 = vadd.f32 0.0, %v612
      %v614 = vpop.f32.mrf.mxu0
      %615 = vmatprep.mubr.f32.mxu0 %v347
      %616 = vmatmul.mubr.f32.gmra.mxu0 %v346
      %v617 = vpop.f32.mrf.mxu0
      %v618 = vadd.f32 0.0, %v617
      %v619 = vpop.f32.mrf.mxu0
      %620 = vmatprep.mubr.f32.mxu0 %v351
      %621 = vmatmul.mubr.f32.gmra.mxu0 %v350
      %v622 = vpop.f32.mrf.mxu0
      %v623 = vadd.f32 0.0, %v622
      %v624 = vpop.f32.mrf.mxu0
      %625 = vmatprep.mubr.f32.mxu0 %v355
      %626 = vmatmul.mubr.f32.gmra.mxu0 %v354
      %v627 = vpop.f32.mrf.mxu0
      %v628 = vadd.f32 0.0, %v627
      %v629 = vpop.f32.mrf.mxu0
      %630 = vmatprep.mubr.f32.mxu0 %v359
      %631 = vmatmul.mubr.f32.gmra.mxu0 %v358
      %v632 = vpop.f32.mrf.mxu0
      %v633 = vadd.f32 0.0, %v632
      %v634 = vpop.f32.mrf.mxu0
      %635 = vmatprep.mubr.f32.mxu0 %v363
      %636 = vmatmul.mubr.f32.gmra.mxu0 %v362
      %v637 = vpop.f32.mrf.mxu0
      %v638 = vadd.f32 0.0, %v637
      %v639 = vpop.f32.mrf.mxu0
      %640 = vmatprep.mubr.f32.mxu0 %v367
      %641 = vmatmul.mubr.f32.gmra.mxu0 %v366
      %v642 = vpop.f32.mrf.mxu0
      %v643 = vadd.f32 0.0, %v642
      %v644 = vpop.f32.mrf.mxu0
      %645 = vmatprep.mubr.f32.mxu0 %v371
      %646 = vmatmul.mubr.f32.gmra.mxu0 %v370
      %v647 = vpop.f32.mrf.mxu0
      %v648 = vadd.f32 0.0, %v647
      %v649 = vpop.f32.mrf.mxu0
      %650 = vmatprep.mubr.f32.mxu0 %v375
      %651 = vmatmul.mubr.f32.gmra.mxu0 %v374
      %v652 = vpop.f32.mrf.mxu0
      %v653 = vadd.f32 0.0, %v652
      %v654 = vpop.f32.mrf.mxu0
      %655 = vmatprep.mubr.f32.mxu0 %v379
      %656 = vmatmul.mubr.f32.gmra.mxu0 %v378
      %v657 = vpop.f32.mrf.mxu0
      %v658 = vadd.f32 0.0, %v657
      %v659 = vpop.f32.mrf.mxu0
      %660 = vmatprep.mubr.f32.mxu0 %v383
      %661 = vmatmul.mubr.f32.gmra.mxu0 %v382
      %v662 = vpop.f32.mrf.mxu0
      %v663 = vadd.f32 0.0, %v662
      %v664 = vpop.f32.mrf.mxu0
      %665 = vmatprep.mubr.f32.mxu0 %v387
      %666 = vmatmul.mubr.f32.gmra.mxu0 %v386
      %v667 = vpop.f32.mrf.mxu0
      %v668 = vadd.f32 0.0, %v667
      %v669 = vpop.f32.mrf.mxu0
      %670 = vmatprep.mubr.f32.mxu0 %v391
      %671 = vmatmul.mubr.f32.gmra.mxu0 %v390
      %v672 = vpop.f32.mrf.mxu0
      %v673 = vadd.f32 0.0, %v672
      %v674 = vpop.f32.mrf.mxu0
      %675 = vmatprep.mubr.f32.mxu0 %v395
      %676 = vmatmul.mubr.f32.gmra.mxu0 %v394
      %v677 = vpop.f32.mrf.mxu0
      %v678 = vadd.f32 0.0, %v677
      %v679 = vpop.f32.mrf.mxu0
      %680 = vmatprep.mubr.f32.mxu0 %v399
      %681 = vmatmul.mubr.f32.gmra.mxu0 %v398
      %v682 = vpop.f32.mrf.mxu0
      %v683 = vadd.f32 0.0, %v682
      %v684 = vpop.f32.mrf.mxu0
      %685 = vmatprep.mubr.f32.mxu0 %v403
      %686 = vmatmul.mubr.f32.gmra.mxu0 %v402
      %v687 = vpop.f32.mrf.mxu0
      %v688 = vadd.f32 0.0, %v687
      %v689 = vpop.f32.mrf.mxu0
      %690 = vmatprep.mubr.f32.mxu0 %v407
      %691 = vmatmul.mubr.f32.gmra.mxu0 %v406
      %v692 = vpop.f32.mrf.mxu0
      %v693 = vadd.f32 0.0, %v692
      %v694 = vpop.f32.mrf.mxu0
      %695 = vmatprep.mubr.f32.mxu0 %v411
      %696 = vmatmul.mubr.f32.gmra.mxu0 %v410
      %v697 = vpop.f32.mrf.mxu0
      %v698 = vadd.f32 0.0, %v697
      %v699 = vpop.f32.mrf.mxu0
      %700 = vmatprep.mubr.f32.mxu0 %v415
      %701 = vmatmul.mubr.f32.gmra.mxu0 %v414
      %v702 = vpop.f32.mrf.mxu0
      %v703 = vadd.f32 0.0, %v702
      %v704 = vpop.f32.mrf.mxu0
      %705 = vmatprep.mubr.f32.mxu0 %v419
      %706 = vmatmul.mubr.f32.gmra.mxu0 %v418
      %v707 = vpop.f32.mrf.mxu0
      %v708 = vadd.f32 0.0, %v707
      %v709 = vpop.f32.mrf.mxu0
      %710 = vdwg.mxu0
      %711 = vmatprep.subr.mxu0 0.0
      %712 = vmatpush1.msra.mxu0 %v469
      %713 = vmatprep.subr.mxu0 0.0
      %714 = vmatpush1.msra.mxu0 %v468
      %715 = vmatprep.subr.mxu0 0.0
      %716 = vmatpush1.msra.mxu0 %v467
      %717 = vmatprep.subr.mxu0 0.0
      %718 = vmatpush1.msra.mxu0 %v466
      %719 = vmatprep.subr.mxu0 0.0
      %720 = vmatpush1.msra.mxu0 %v465
      %721 = vmatprep.subr.mxu0 0.0
      %722 = vmatpush1.msra.mxu0 %v464
      %723 = vmatprep.subr.mxu0 0.0
      %724 = vmatpush1.msra.mxu0 %v463
      %725 = vmatprep.subr.mxu0 0.0
      %726 = vmatpush1.msra.mxu0 %v462
      %727 = vmatprep.subr.mxu0 0.0
      %728 = vmatpush1.msra.mxu0 %v461
      %729 = vmatprep.subr.mxu0 0.0
      %730 = vmatpush1.msra.mxu0 %v460
      %731 = vmatprep.subr.mxu0 0.0
      %732 = vmatpush1.msra.mxu0 %v459
      %733 = vmatprep.subr.mxu0 0.0
      %734 = vmatpush1.msra.mxu0 %v458
      %735 = vmatprep.subr.mxu0 0.0
      %736 = vmatpush1.msra.mxu0 %v457
      %737 = vmatprep.subr.mxu0 0.0
      %738 = vmatpush1.msra.mxu0 %v456
      %739 = vmatprep.subr.mxu0 0.0
      %740 = vmatpush1.msra.mxu0 %v455
      %741 = vmatprep.subr.mxu0 0.0
      %742 = vmatpush1.msra.mxu0 %v454
      %743 = vmatprep.subr.mxu0 0.0
      %744 = vmatpush2.msra.mxu0 %v485
      %745 = vmatprep.subr.mxu0 0.0
      %746 = vmatpush2.msra.mxu0 %v484
      %747 = vmatprep.subr.mxu0 0.0
      %748 = vmatpush2.msra.mxu0 %v483
      %749 = vmatprep.subr.mxu0 0.0
      %750 = vmatpush2.msra.mxu0 %v482
      %751 = vmatprep.subr.mxu0 0.0
      %752 = vmatpush2.msra.mxu0 %v481
      %753 = vmatprep.subr.mxu0 0.0
      %754 = vmatpush2.msra.mxu0 %v480
      %755 = vmatprep.subr.mxu0 0.0
      %756 = vmatpush2.msra.mxu0 %v479
      %757 = vmatprep.subr.mxu0 0.0
      %758 = vmatpush2.msra.mxu0 %v478
      %759 = vmatprep.subr.mxu0 0.0
      %760 = vmatpush2.msra.mxu0 %v477
      %761 = vmatprep.subr.mxu0 0.0
      %762 = vmatpush2.msra.mxu0 %v476
      %763 = vmatprep.subr.mxu0 0.0
      %764 = vmatpush2.msra.mxu0 %v475
      %765 = vmatprep.subr.mxu0 0.0
      %766 = vmatpush2.msra.mxu0 %v474
      %767 = vmatprep.subr.mxu0 0.0
      %768 = vmatpush2.msra.mxu0 %v473
      %769 = vmatprep.subr.mxu0 0.0
      %770 = vmatpush2.msra.mxu0 %v472
      %771 = vmatprep.subr.mxu0 0.0
      %772 = vmatpush2.msra.mxu0 %v471
      %773 = vmatprep.subr.mxu0 0.0
      %774 = vmatpush2.msra.mxu0 %v470
      %775 = vmatprep.mubr.f32.mxu0 %v297
      %776 = vmatmul.mubr.f32.gmra.mxu0 %v296
      %v777 = vpop.f32.mrf.mxu0
      %v778 = vadd.f32 %v553, %v777
      %v779 = vpop.f32.mrf.mxu0
      %780 = vmatprep.mubr.f32.mxu0 %v301
      %781 = vmatmul.mubr.f32.gmra.mxu0 %v300
      %v782 = vpop.f32.mrf.mxu0
      %v783 = vadd.f32 %v558, %v782
      %v784 = vpop.f32.mrf.mxu0
      %785 = vmatprep.mubr.f32.mxu0 %v305
      %786 = vmatmul.mubr.f32.gmra.mxu0 %v304
      %v787 = vpop.f32.mrf.mxu0
      %v788 = vadd.f32 %v563, %v787
      %v789 = vpop.f32.mrf.mxu0
      %790 = vmatprep.mubr.f32.mxu0 %v309
      %791 = vmatmul.mubr.f32.gmra.mxu0 %v308
      %v792 = vpop.f32.mrf.mxu0
      %v793 = vadd.f32 %v568, %v792
      %v794 = vpop.f32.mrf.mxu0
      %795 = vmatprep.mubr.f32.mxu0 %v313
      %796 = vmatmul.mubr.f32.gmra.mxu0 %v312
      %v797 = vpop.f32.mrf.mxu0
      %v798 = vadd.f32 %v573, %v797
      %v799 = vpop.f32.mrf.mxu0
      %800 = vmatprep.mubr.f32.mxu0 %v317
      %801 = vmatmul.mubr.f32.gmra.mxu0 %v316
      %v802 = vpop.f32.mrf.mxu0
      %v803 = vadd.f32 %v578, %v802
      %v804 = vpop.f32.mrf.mxu0
      %805 = vmatprep.mubr.f32.mxu0 %v321
      %806 = vmatmul.mubr.f32.gmra.mxu0 %v320
      %v807 = vpop.f32.mrf.mxu0
      %v808 = vadd.f32 %v583, %v807
      %v809 = vpop.f32.mrf.mxu0
      %810 = vmatprep.mubr.f32.mxu0 %v325
      %811 = vmatmul.mubr.f32.gmra.mxu0 %v324
      %v812 = vpop.f32.mrf.mxu0
      %v813 = vadd.f32 %v588, %v812
      %v814 = vpop.f32.mrf.mxu0
      %815 = vmatprep.mubr.f32.mxu0 %v329
      %816 = vmatmul.mubr.f32.gmra.mxu0 %v328
      %v817 = vpop.f32.mrf.mxu0
      %v818 = vadd.f32 %v593, %v817
      %v819 = vpop.f32.mrf.mxu0
      %820 = vmatprep.mubr.f32.mxu0 %v333
      %821 = vmatmul.mubr.f32.gmra.mxu0 %v332
      %v822 = vpop.f32.mrf.mxu0
      %v823 = vadd.f32 %v598, %v822
      %v824 = vpop.f32.mrf.mxu0
      %825 = vmatprep.mubr.f32.mxu0 %v337
      %826 = vmatmul.mubr.f32.gmra.mxu0 %v336
      %v827 = vpop.f32.mrf.mxu0
      %v828 = vadd.f32 %v603, %v827
      %v829 = vpop.f32.mrf.mxu0
      %830 = vmatprep.mubr.f32.mxu0 %v341
      %831 = vmatmul.mubr.f32.gmra.mxu0 %v340
      %v832 = vpop.f32.mrf.mxu0
      %v833 = vadd.f32 %v608, %v832
      %v834 = vpop.f32.mrf.mxu0
      %835 = vmatprep.mubr.f32.mxu0 %v345
      %836 = vmatmul.mubr.f32.gmra.mxu0 %v344
      %v837 = vpop.f32.mrf.mxu0
      %v838 = vadd.f32 %v613, %v837
      %v839 = vpop.f32.mrf.mxu0
      %840 = vmatprep.mubr.f32.mxu0 %v349
      %841 = vmatmul.mubr.f32.gmra.mxu0 %v348
      %v842 = vpop.f32.mrf.mxu0
      %v843 = vadd.f32 %v618, %v842
      %v844 = vpop.f32.mrf.mxu0
      %845 = vmatprep.mubr.f32.mxu0 %v353
      %846 = vmatmul.mubr.f32.gmra.mxu0 %v352
      %v847 = vpop.f32.mrf.mxu0
      %v848 = vadd.f32 %v623, %v847
      %v849 = vpop.f32.mrf.mxu0
      %850 = vmatprep.mubr.f32.mxu0 %v357
      %851 = vmatmul.mubr.f32.gmra.mxu0 %v356
      %v852 = vpop.f32.mrf.mxu0
      %v853 = vadd.f32 %v628, %v852
      %v854 = vpop.f32.mrf.mxu0
      %855 = vmatprep.mubr.f32.mxu0 %v361
      %856 = vmatmul.mubr.f32.gmra.mxu0 %v360
      %v857 = vpop.f32.mrf.mxu0
      %v858 = vadd.f32 %v633, %v857
      %v859 = vpop.f32.mrf.mxu0
      %860 = vmatprep.mubr.f32.mxu0 %v365
      %861 = vmatmul.mubr.f32.gmra.mxu0 %v364
      %v862 = vpop.f32.mrf.mxu0
      %v863 = vadd.f32 %v638, %v862
      %v864 = vpop.f32.mrf.mxu0
      %865 = vmatprep.mubr.f32.mxu0 %v369
      %866 = vmatmul.mubr.f32.gmra.mxu0 %v368
      %v867 = vpop.f32.mrf.mxu0
      %v868 = vadd.f32 %v643, %v867
      %v869 = vpop.f32.mrf.mxu0
      %870 = vmatprep.mubr.f32.mxu0 %v373
      %871 = vmatmul.mubr.f32.gmra.mxu0 %v372
      %v872 = vpop.f32.mrf.mxu0
      %v873 = vadd.f32 %v648, %v872
      %v874 = vpop.f32.mrf.mxu0
      %875 = vmatprep.mubr.f32.mxu0 %v377
      %876 = vmatmul.mubr.f32.gmra.mxu0 %v376
      %v877 = vpop.f32.mrf.mxu0
      %v878 = vadd.f32 %v653, %v877
      %v879 = vpop.f32.mrf.mxu0
      %880 = vmatprep.mubr.f32.mxu0 %v381
      %881 = vmatmul.mubr.f32.gmra.mxu0 %v380
      %v882 = vpop.f32.mrf.mxu0
      %v883 = vadd.f32 %v658, %v882
      %v884 = vpop.f32.mrf.mxu0
      %885 = vmatprep.mubr.f32.mxu0 %v385
      %886 = vmatmul.mubr.f32.gmra.mxu0 %v384
      %v887 = vpop.f32.mrf.mxu0
      %v888 = vadd.f32 %v663, %v887
      %v889 = vpop.f32.mrf.mxu0
      %890 = vmatprep.mubr.f32.mxu0 %v389
      %891 = vmatmul.mubr.f32.gmra.mxu0 %v388
      %v892 = vpop.f32.mrf.mxu0
      %v893 = vadd.f32 %v668, %v892
      %v894 = vpop.f32.mrf.mxu0
      %895 = vmatprep.mubr.f32.mxu0 %v393
      %896 = vmatmul.mubr.f32.gmra.mxu0 %v392
      %v897 = vpop.f32.mrf.mxu0
      %v898 = vadd.f32 %v673, %v897
      %v899 = vpop.f32.mrf.mxu0
      %900 = vmatprep.mubr.f32.mxu0 %v397
      %901 = vmatmul.mubr.f32.gmra.mxu0 %v396
      %v902 = vpop.f32.mrf.mxu0
      %v903 = vadd.f32 %v678, %v902
      %v904 = vpop.f32.mrf.mxu0
      %905 = vmatprep.mubr.f32.mxu0 %v401
      %906 = vmatmul.mubr.f32.gmra.mxu0 %v400
      %v907 = vpop.f32.mrf.mxu0
      %v908 = vadd.f32 %v683, %v907
      %v909 = vpop.f32.mrf.mxu0
      %910 = vmatprep.mubr.f32.mxu0 %v405
      %911 = vmatmul.mubr.f32.gmra.mxu0 %v404
      %v912 = vpop.f32.mrf.mxu0
      %v913 = vadd.f32 %v688, %v912
      %v914 = vpop.f32.mrf.mxu0
      %915 = vmatprep.mubr.f32.mxu0 %v409
      %916 = vmatmul.mubr.f32.gmra.mxu0 %v408
      %v917 = vpop.f32.mrf.mxu0
      %v918 = vadd.f32 %v693, %v917
      %v919 = vpop.f32.mrf.mxu0
      %920 = vmatprep.mubr.f32.mxu0 %v413
      %921 = vmatmul.mubr.f32.gmra.mxu0 %v412
      %v922 = vpop.f32.mrf.mxu0
      %v923 = vadd.f32 %v698, %v922
      %v924 = vpop.f32.mrf.mxu0
      %925 = vmatprep.mubr.f32.mxu0 %v417
      %926 = vmatmul.mubr.f32.gmra.mxu0 %v416
      %v927 = vpop.f32.mrf.mxu0
      %v928 = vadd.f32 %v703, %v927
      %v929 = vpop.f32.mrf.mxu0
      %930 = vmatprep.mubr.f32.mxu0 %v421
      %931 = vmatmul.mubr.f32.gmra.mxu0 %v420
      %v932 = vpop.f32.mrf.mxu0
      %v933 = vadd.f32 %v708, %v932
      %v934 = vpop.f32.mrf.mxu0
      %935 = vdwg.mxu0
      %v936 = vadd.f32 %v262, %v778
      %v937 = vadd.f32 %v263, %v783
      %v938 = vadd.f32 %v264, %v788
      %v939 = vadd.f32 %v265, %v793
      %v940 = vadd.f32 %v266, %v798
      %v941 = vadd.f32 %v267, %v803
      %v942 = vadd.f32 %v268, %v808
      %v943 = vadd.f32 %v269, %v813
      %v944 = vadd.f32 %v270, %v818
      %v945 = vadd.f32 %v271, %v823
      %v946 = vadd.f32 %v272, %v828
      %v947 = vadd.f32 %v273, %v833
      %v948 = vadd.f32 %v274, %v838
      %v949 = vadd.f32 %v275, %v843
      %v950 = vadd.f32 %v276, %v848
      %v951 = vadd.f32 %v277, %v853
      %v952 = vadd.f32 %v278, %v858
      %v953 = vadd.f32 %v279, %v863
      %v954 = vadd.f32 %v280, %v868
      %v955 = vadd.f32 %v281, %v873
      %v956 = vadd.f32 %v282, %v878
      %v957 = vadd.f32 %v283, %v883
      %v958 = vadd.f32 %v284, %v888
      %v959 = vadd.f32 %v285, %v893
      %v960 = vadd.f32 %v286, %v898
      %v961 = vadd.f32 %v287, %v903
      %v962 = vadd.f32 %v288, %v908
      %v963 = vadd.f32 %v289, %v913
      %v964 = vadd.f32 %v290, %v918
      %v965 = vadd.f32 %v291, %v923
      %v966 = vadd.f32 %v292, %v928
      %v967 = vadd.f32 %v293, %v933
      %968 = vst [vmem:[#allocation2] sm:$0xff] %v936
      %969 = vst [vmem:[#allocation2 + $0x8] sm:$0xff] %v937
      %970 = vst [vmem:[#allocation2 + $0x10] sm:$0xff] %v938
      %971 = vst [vmem:[#allocation2 + $0x18] sm:$0xff] %v939
      %972 = vst [vmem:[#allocation2 + $0x20] sm:$0xff] %v940
      %973 = vst [vmem:[#allocation2 + $0x28] sm:$0xff] %v941
      %974 = vst [vmem:[#allocation2 + $0x30] sm:$0xff] %v942
      %975 = vst [vmem:[#allocation2 + $0x38] sm:$0xff] %v943
      %976 = vst [vmem:[#allocation2 + $0x40] sm:$0xff] %v944
      %977 = vst [vmem:[#allocation2 + $0x48] sm:$0xff] %v945
      %978 = vst [vmem:[#allocation2 + $0x50] sm:$0xff] %v946
      %979 = vst [vmem:[#allocation2 + $0x58] sm:$0xff] %v947
      %980 = vst [vmem:[#allocation2 + $0x60] sm:$0xff] %v948
      %981 = vst [vmem:[#allocation2 + $0x68] sm:$0xff] %v949
      %982 = vst [vmem:[#allocation2 + $0x70] sm:$0xff] %v950
      %983 = vst [vmem:[#allocation2 + $0x78] sm:$0xff] %v951
      %984 = vst [vmem:[#allocation2 + $0x80] sm:$0xff] %v952
      %985 = vst [vmem:[#allocation2 + $0x88] sm:$0xff] %v953
      %986 = vst [vmem:[#allocation2 + $0x90] sm:$0xff] %v954
      %987 = vst [vmem:[#allocation2 + $0x98] sm:$0xff] %v955
      %988 = vst [vmem:[#allocation2 + $0xa0] sm:$0xff] %v956
      %989 = vst [vmem:[#allocation2 + $0xa8] sm:$0xff] %v957
      %990 = vst [vmem:[#allocation2 + $0xb0] sm:$0xff] %v958
      %991 = vst [vmem:[#allocation2 + $0xb8] sm:$0xff] %v959
      %992 = vst [vmem:[#allocation2 + $0xc0] sm:$0xff] %v960
      %993 = vst [vmem:[#allocation2 + $0xc8] sm:$0xff] %v961
      %994 = vst [vmem:[#allocation2 + $0xd0] sm:$0xff] %v962
      %995 = vst [vmem:[#allocation2 + $0xd8] sm:$0xff] %v963
      %996 = vst [vmem:[#allocation2 + $0xe0] sm:$0xff] %v964
      %997 = vst [vmem:[#allocation2 + $0xe8] sm:$0xff] %v965
      %998 = vst [vmem:[#allocation2 + $0xf0] sm:$0xff] %v966
      %999 = vst [vmem:[#allocation2 + $0xf8] sm:$0xff] %v967
      // Predicated region
      $region33: #{cosine_attention.5} parent=27 // pred_check
        %p1000 = pneg %p226
      $region34: #{cosine_attention.5} parent=27 // pred_check_branch
        %1002 = sbr.rel (%p1000) target = $region36
      $region35: #{cosine_attention.5} parent=27 // pred_region
        %v1003 = vld [vmem:[#allocation2] sm:$0xff]
        %v1004 = vld [vmem:[#allocation2 + $0x8] sm:$0xff]
        %v1005 = vld [vmem:[#allocation2 + $0x10] sm:$0xff]
        %v1006 = vld [vmem:[#allocation2 + $0x18] sm:$0xff]
        %v1007 = vld [vmem:[#allocation2 + $0x20] sm:$0xff]
        %v1008 = vld [vmem:[#allocation2 + $0x28] sm:$0xff]
        %v1009 = vld [vmem:[#allocation2 + $0x30] sm:$0xff]
        %v1010 = vld [vmem:[#allocation2 + $0x38] sm:$0xff]
        %v1011 = vld [vmem:[#allocation2 + $0x40] sm:$0xff]
        %v1012 = vld [vmem:[#allocation2 + $0x48] sm:$0xff]
        %v1013 = vld [vmem:[#allocation2 + $0x50] sm:$0xff]
        %v1014 = vld [vmem:[#allocation2 + $0x58] sm:$0xff]
        %v1015 = vld [vmem:[#allocation2 + $0x60] sm:$0xff]
        %v1016 = vld [vmem:[#allocation2 + $0x68] sm:$0xff]
        %v1017 = vld [vmem:[#allocation2 + $0x70] sm:$0xff]
        %v1018 = vld [vmem:[#allocation2 + $0x78] sm:$0xff]
        %v1019 = vld [vmem:[#allocation2 + $0x80] sm:$0xff]
        %v1020 = vld [vmem:[#allocation2 + $0x88] sm:$0xff]
        %v1021 = vld [vmem:[#allocation2 + $0x90] sm:$0xff]
        %v1022 = vld [vmem:[#allocation2 + $0x98] sm:$0xff]
        %v1023 = vld [vmem:[#allocation2 + $0xa0] sm:$0xff]
        %v1024 = vld [vmem:[#allocation2 + $0xa8] sm:$0xff]
        %v1025 = vld [vmem:[#allocation2 + $0xb0] sm:$0xff]
        %v1026 = vld [vmem:[#allocation2 + $0xb8] sm:$0xff]
        %v1027 = vld [vmem:[#allocation2 + $0xc0] sm:$0xff]
        %v1028 = vld [vmem:[#allocation2 + $0xc8] sm:$0xff]
        %v1029 = vld [vmem:[#allocation2 + $0xd0] sm:$0xff]
        %v1030 = vld [vmem:[#allocation2 + $0xd8] sm:$0xff]
        %v1031 = vld [vmem:[#allocation2 + $0xe0] sm:$0xff]
        %v1032 = vld [vmem:[#allocation2 + $0xe8] sm:$0xff]
        %v1033 = vld [vmem:[#allocation2 + $0xf0] sm:$0xff]
        %v1034 = vld [vmem:[#allocation2 + $0xf8] sm:$0xff]
        %1035 = vst [vmem:[%s224] sm:$0xff] %v1003
        %1036 = vst [vmem:[%s224 + $0x8] sm:$0xff] %v1004
        %1037 = vst [vmem:[%s224 + $0x10] sm:$0xff] %v1005
        %1038 = vst [vmem:[%s224 + $0x18] sm:$0xff] %v1006
        %1039 = vst [vmem:[%s224 + $0x20] sm:$0xff] %v1007
        %1040 = vst [vmem:[%s224 + $0x28] sm:$0xff] %v1008
        %1041 = vst [vmem:[%s224 + $0x30] sm:$0xff] %v1009
        %1042 = vst [vmem:[%s224 + $0x38] sm:$0xff] %v1010
        %1043 = vst [vmem:[%s224 + $0x40] sm:$0xff] %v1011
        %1044 = vst [vmem:[%s224 + $0x48] sm:$0xff] %v1012
        %1045 = vst [vmem:[%s224 + $0x50] sm:$0xff] %v1013
        %1046 = vst [vmem:[%s224 + $0x58] sm:$0xff] %v1014
        %1047 = vst [vmem:[%s224 + $0x60] sm:$0xff] %v1015
        %1048 = vst [vmem:[%s224 + $0x68] sm:$0xff] %v1016
        %1049 = vst [vmem:[%s224 + $0x70] sm:$0xff] %v1017
        %1050 = vst [vmem:[%s224 + $0x78] sm:$0xff] %v1018
        %1051 = vst [vmem:[%s224 + $0x80] sm:$0xff] %v1019
        %1052 = vst [vmem:[%s224 + $0x88] sm:$0xff] %v1020
        %1053 = vst [vmem:[%s224 + $0x90] sm:$0xff] %v1021
        %1054 = vst [vmem:[%s224 + $0x98] sm:$0xff] %v1022
        %1055 = vst [vmem:[%s224 + $0xa0] sm:$0xff] %v1023
        %1056 = vst [vmem:[%s224 + $0xa8] sm:$0xff] %v1024
        %1057 = vst [vmem:[%s224 + $0xb0] sm:$0xff] %v1025
        %1058 = vst [vmem:[%s224 + $0xb8] sm:$0xff] %v1026
        %1059 = vst [vmem:[%s224 + $0xc0] sm:$0xff] %v1027
        %1060 = vst [vmem:[%s224 + $0xc8] sm:$0xff] %v1028
        %1061 = vst [vmem:[%s224 + $0xd0] sm:$0xff] %v1029
        %1062 = vst [vmem:[%s224 + $0xd8] sm:$0xff] %v1030
        %1063 = vst [vmem:[%s224 + $0xe0] sm:$0xff] %v1031
        %1064 = vst [vmem:[%s224 + $0xe8] sm:$0xff] %v1032
        %1065 = vst [vmem:[%s224 + $0xf0] sm:$0xff] %v1033
        %1066 = vst [vmem:[%s224 + $0xf8] sm:$0xff] %v1034
      $region36: #{cosine_attention.5} parent=27 // pred_fallthru
        _
      %s1067 = smul.u32 32, %s18
      %p1068 = scmp.lt.s32.totalorder %s1067, 63
      %s1069 = scalar_select %p1068, %s1067, 63
      %p1070 = scmp.lt.s32.totalorder %s19, 0
      %s1071 = scalar_select %p1070, %s19, 0
      %s1072 = sadd.s32 %s1071, %s1069
      %s1073 = smul.addr %s1072, 8
      %s1074 = scalar_lea.vmem %s2, %s1073
      // Predicated region
      $region37: #{cosine_attention.5} parent=27 // pred_check
        %p1075 = pneg %p108
      $region38: #{cosine_attention.5} parent=27 // pred_check_branch
        %1077 = sbr.rel (%p1075) target = $region40
      $region39: #{cosine_attention.5} parent=27 // pred_region
        %s1078 = smul.u32 32, %s18
      $region40: #{cosine_attention.5} parent=27 // pred_fallthru
        _
    $region28: #{cosine_attention.5} parent=5 // pred_fallthru
      _
    %p1079 = scmp.le.s32.totalorder 2, %s8
    // Predicated region
    $region41: #{cosine_attention.5} parent=5 // pred_check
      %p1080 = pneg %p1079
    $region42: #{cosine_attention.5} parent=5 // pred_check_branch
      %1082 = sbr.rel (%p1080) target = $region44
    $region43: #{cosine_attention.5} parent=5 // pred_region
      %s1083 = ssub.s32 %s8, 2
      // Predicated region
      $region45: #{cosine_attention.5} parent=43 // pred_check
        %p1084 = pneg %p114
      $region46: #{cosine_attention.5} parent=43 // pred_check_branch
        %1086 = sbr.rel (%p1084) target = $region48
      $region47: #{cosine_attention.5} parent=43 // pred_region
        %s1087 = smul.u32 32, %s21
        %p1088 = scmp.lt.s32.totalorder %s1087, 63
        %s1089 = scalar_select %p1088, %s1087, 63
        %p1090 = scmp.lt.s32.totalorder %s22, 0
        %s1091 = scalar_select %p1090, %s22, 0
        %s1092 = sadd.s32 %s1091, %s1089
        %s1093 = smul.addr %s1092, 8
        %s1094 = scalar_lea.vmem %s2, %s1093
      $region48: #{cosine_attention.5} parent=43 // pred_fallthru
        _
    $region44: #{cosine_attention.5} parent=5 // pred_fallthru
      _
  $region6: #{cosine_attention.5} parent=0 // loop_footer
    %s12 = sadd.s32 1, %s8
  $region7: #{cosine_attention.5} parent=0 // loop_footer_branch
    %7 = sbr.rel target = $region3
  $region8: #{cosine_attention.5} parent=0 // loop_exit
    _

</llo_original>
